<compile_context>
chip_gen: v7x
topology: tpu7x:2x2x1
jax: 0.10.0
libtpu: 0.0.40
codegen_flags: <defaults>
</compile_context>

<pallas_src>
import functools

import jax
import jax.numpy as jnp
from jax.experimental import pallas as pl
from jax.experimental.pallas import tpu as pltpu


def _vmem():
    return pl.BlockSpec(memory_space=pltpu.MemorySpace.VMEM)


def _round_up(x, m):
    return ((x + m - 1) // m) * m


# ---------------------------------------------------------------------------
# Fused forward kernel (entire network, single pallas_call)
# ---------------------------------------------------------------------------
def _gated_gcn_net_kernel(
        h_in_ref, e_in_ref, S_ref, T_ref, Tt_ref, MnS_ref, MeS_ref,
        ehw_ref, ehb_ref, eew_ref, eeb_ref,
        whe_ref, bhe_ref,
        bnhs_ref, bnhb_ref, bnes_ref, bneb_ref,
        w0_ref, b0_ref, w1_ref, b1_ref, w2_ref, b2_ref,
        o_ref, *, hidden, n_layers, n_nodes):
    f32 = jnp.float32
    bf16 = jnp.bfloat16
    H = hidden

    # ---- embeddings (in_feat_dropout is identity at inference) ----
    h = jnp.dot(h_in_ref[...], ehw_ref[...], preferred_element_type=f32) + ehb_ref[...]
    e = jnp.dot(e_in_ref[...], eew_ref[...], preferred_element_type=f32) + eeb_ref[...]

    S = S_ref[...]        # [E, N]  src one-hot, bf16
    T = T_ref[...]        # [E, N]  dst one-hot, bf16
    Tt = Tt_ref[...]      # [N, E]  dst one-hot transposed (host precomputed), bf16

    # ---- GatedGCN layers (statically unrolled; L=4 so no vreg-pressure issue.
    #      Switch to lax.fori_loop with dynamic ref[l] indexing if L grows.) ----
    for l in range(n_layers):
        # Fused node+edge projection on the row-stacked [h; e]:
        #   columns of whe are [B | D | A | E | C]  (5H = 160 lanes).
        # Node rows only consume cols [:4H], edge rows only col block [4H:], so
        # the "wrong" cross-term outputs/bias columns are simply never read.
        he = jnp.concatenate([h, e], axis=0)                             # [N+E, H]
        proj_all = jnp.dot(he, whe_ref[l], preferred_element_type=f32) + bhe_ref[l]
        proj = proj_all[:n_nodes, :4 * H]      # [N, 4H]  (4H = 128: clean vreg cut)
        Ce = proj_all[n_nodes:, 4 * H:]        # [E, H]

        # Edge gathers: full-128-lane S gather of the packed projection, plus a
        # small T gather of Eh.  One-hot incidence in bf16 is exact.
        proj_bf = proj.astype(bf16)
        G_s = jnp.dot(S, proj_bf, preferred_element_type=f32)            # [E, 4H]
        Eh_dst = jnp.dot(T, proj_bf[:, 3 * H:], preferred_element_type=f32)  # [E, H]

        Bh_src = G_s[:, :H]
        e_new = G_s[:, H:2 * H] + Eh_dst + Ce                            # Dh_src+Eh_dst+Ce
        sigma = jax.nn.sigmoid(e_new)

        # Node scatter: one matmul T^T @ [sigma*Bh_src | sigma] -> [N, 2H]
        # (single lane concat per layer, accepted per review).
        sc_in = jnp.concatenate([sigma * Bh_src, sigma], axis=1)         # [E, 2H]
        scattered = jnp.dot(Tt, sc_in.astype(bf16), preferred_element_type=f32)
        num = scattered[:, :H]
        den = scattered[:, H:]

        Ah = proj[:, 2 * H:3 * H]
        h_new = Ah + num * pl.reciprocal(den + 1e-6, approx=True)

        # BatchNorm1d (eval) folded to scale/shift, ReLU, residual
        h = h + jnp.maximum(h_new * bnhs_ref[l] + bnhb_ref[l], 0.0)
        e = e + jnp.maximum(e_new * bnes_ref[l] + bneb_ref[l], 0.0)

    # ---- mean readout (1/count already folded into MnS / MeS, bf16 one-hots) ----
    hg_n = jnp.dot(MnS_ref[...], h.astype(bf16), preferred_element_type=f32)  # [B, H]
    hg_e = jnp.dot(MeS_ref[...], e.astype(bf16), preferred_element_type=f32)  # [B, H]

    # ---- MLPReadout on concat(hg_n, hg_e); concat avoided via split W0 ----
    w0 = w0_ref[...]
    y = (jnp.dot(hg_n, w0[:H], preferred_element_type=f32)
         + jnp.dot(hg_e, w0[H:], preferred_element_type=f32) + b0_ref[...])
    y = jnp.maximum(y, 0.0)
    y = jnp.dot(y, w1_ref[...], preferred_element_type=f32) + b1_ref[...]
    y = jnp.maximum(y, 0.0)
    y = jnp.dot(y, w2_ref[...], preferred_element_type=f32) + b2_ref[...]
    o_ref[...] = y.astype(o_ref.dtype)


def gated_gcn_net_forward(dataset_idx, graph, h_in, e_in, training_flag,
                          params, hidden, n_layers):
    S, T, Tt, MnS, MeS = graph
    n_edges, n_nodes = S.shape
    b = MnS.shape[0]
    H = hidden

    inputs = (
        h_in, e_in, S, T, Tt, MnS, MeS,
        params["emb_h_w"], params["emb_h_b"], params["emb_e_w"], params["emb_e_b"],
        params["whe"], params["bhe"],
        params["bnh_scale"], params["bnh_shift"],
        params["bne_scale"], params["bne_shift"],
        params["w0"], params["b0"], params["w1"], params["b1"],
        params["w2"], params["b2"],
    )

    # Cost estimate (matmul FLOPs dominate) and an explicit VMEM budget.
    flops = 2 * (n_nodes * h_in.shape[1] * H + n_edges * e_in.shape[1] * H)
    flops += n_layers * 2 * ((n_nodes + n_edges) * H * 5 * H      # fused projection
                             + n_edges * n_nodes * 4 * H          # S gather
                             + n_edges * n_nodes * H              # T gather
                             + n_nodes * n_edges * 2 * H)         # scatter
    flops += 2 * b * (n_nodes + n_edges) * H                      # mean readout
    flops += 2 * b * (2 * H * H + H * (H // 2) + (H // 2))        # MLPReadout
    transcendentals = n_layers * (n_edges * H + n_nodes * H)      # sigmoid + recip
    in_bytes = sum(int(x.size) * x.dtype.itemsize for x in inputs)
    bytes_accessed = in_bytes + b * 4
    vmem_limit = max(16 * 1024 * 1024, 8 * in_bytes)

    out = pl.pallas_call(
        functools.partial(_gated_gcn_net_kernel, hidden=hidden,
                          n_layers=n_layers, n_nodes=n_nodes),
        out_shape=jax.ShapeDtypeStruct((b, 1), jnp.float32),
        in_specs=[_vmem() for _ in inputs],
        out_specs=_vmem(),
        compiler_params=pltpu.CompilerParams(vmem_limit_bytes=vmem_limit),
        cost_estimate=pl.CostEstimate(flops=int(flops),
                                      transcendentals=int(transcendentals),
                                      bytes_accessed=int(bytes_accessed)),
    )(*inputs)

    # TODO(synk): att_MoE_GNN / attention-score branch is statically dead
    # (`if False:`) in the reference forward, so attention_score is 0.
    attention_score = 0
    return out, attention_score


# ---------------------------------------------------------------------------
# Parameter construction (deterministic, synthetic; BN folded for eval)
# ---------------------------------------------------------------------------
def make_params(key, in_atom, in_bond, hidden, n_layers):
    def nrm(k, shape, scale=0.1):
        return (scale * jax.random.normal(k, shape)).astype(jnp.float32)

    n_keys = 4 + 10 * n_layers + 6
    keys = jax.random.split(key, n_keys)
    ki = iter(keys)

    in_atom_p = _round_up(in_atom, 8)
    in_bond_p = _round_up(in_bond, 8)

    def pad_rows(w, rows):
        return jnp.pad(w, ((0, rows - w.shape[0]), (0, 0)))

    params = {
        "emb_h_w": pad_rows(nrm(next(ki), (in_atom, hidden)), in_atom_p),
        "emb_h_b": nrm(next(ki), (1, hidden)),
        "emb_e_w": pad_rows(nrm(next(ki), (in_bond, hidden)), in_bond_p),
        "emb_e_b": nrm(next(ki), (1, hidden)),
    }

    whes, bhes = [], []
    bnhs, bnhb, bnes, bneb = [], [], [], []
    eps = 1e-5
    for _ in range(n_layers):
        # packed A/B/D/E node projection (column order [B | D | A | E]) fused
        # with the C edge projection -> one [H, 5H] weight, cols [B|D|A|E|C]
        w4 = nrm(next(ki), (hidden, 4 * hidden))
        b4 = nrm(next(ki), (1, 4 * hidden))
        wc = nrm(next(ki), (hidden, hidden))
        bc = nrm(next(ki), (1, hidden))
        whes.append(jnp.concatenate([w4, wc], axis=1))     # [H, 5H]
        bhes.append(jnp.concatenate([b4, bc], axis=1))     # [1, 5H]
        gamma_h = 1.0 + nrm(next(ki), (1, hidden))
        beta_h = nrm(next(ki), (1, hidden))
        gamma_e = 1.0 + nrm(next(ki), (1, hidden))
        beta_e = nrm(next(ki), (1, hidden))
        rm_h = nrm(next(ki), (1, hidden))
        rm_e = nrm(next(ki), (1, hidden))
        rv = jnp.ones((1, hidden), jnp.float32)            # running_var
        sc_h = gamma_h / jnp.sqrt(rv + eps)
        sc_e = gamma_e / jnp.sqrt(rv + eps)
        bnhs.append(sc_h)
        bnhb.append(beta_h - rm_h * sc_h)
        bnes.append(sc_e)
        bneb.append(beta_e - rm_e * sc_e)

    params["whe"] = jnp.stack(whes)          # [L, H, 5H]
    params["bhe"] = jnp.stack(bhes)          # [L, 1, 5H]
    params["bnh_scale"] = jnp.stack(bnhs)
    params["bnh_shift"] = jnp.stack(bnhb)
    params["bne_scale"] = jnp.stack(bnes)
    params["bne_shift"] = jnp.stack(bneb)

    # MLPReadout(2*hidden -> 1), L=2 hidden layers: 2H -> H -> H/2 -> 1
    params["w0"] = nrm(next(ki), (2 * hidden, hidden))
    params["b0"] = nrm(next(ki), (1, hidden))
    params["w1"] = nrm(next(ki), (hidden, hidden // 2))
    params["b1"] = nrm(next(ki), (1, hidden // 2))
    params["w2"] = nrm(next(ki), (hidden // 2, 1))
    params["b2"] = nrm(next(ki), (1, 1))
    return params


# ---------------------------------------------------------------------------
# Example batched graph (dense incidence / membership form, bf16 structure)
# ---------------------------------------------------------------------------
def build_batched_graph():
    # graph 0: 5-node cycle, graph 1: 6-node cycle; bidirectional edges
    src0 = [0, 1, 1, 2, 2, 3, 3, 4, 4, 0]
    dst0 = [1, 0, 2, 1, 3, 2, 4, 3, 0, 4]
    src1 = [5, 6, 6, 7, 7, 8, 8, 9, 9, 10, 5, 10]
    dst1 = [6, 5, 7, 6, 8, 7, 9, 8, 10, 9, 10, 5]
    src = src0 + src1
    dst = dst0 + dst1
    n_real, e_real = 11, len(src)
    n_per_graph = [5, 6]
    e_per_graph = [len(src0), len(src1)]

    n_pad, e_pad, b = 16, 24, 2
    S = jnp.zeros((e_pad, n_pad), jnp.float32)
    T = jnp.zeros((e_pad, n_pad), jnp.float32)
    S = S.at[jnp.arange(e_real), jnp.array(src)].set(1.0)
    T = T.at[jnp.arange(e_real), jnp.array(dst)].set(1.0)

    node_gid = [0] * 5 + [1] * 6
    edge_gid = [0] * e_per_graph[0] + [1] * e_per_graph[1]
    Mn = jnp.zeros((b, n_pad), jnp.float32)
    Me = jnp.zeros((b, e_pad), jnp.float32)
    Mn = Mn.at[jnp.array(node_gid), jnp.arange(n_real)].set(1.0)
    Me = Me.at[jnp.array(edge_gid), jnp.arange(e_real)].set(1.0)

    inv_n = (1.0 / jnp.array(n_per_graph, jnp.float32)).reshape(b, 1)
    inv_e = (1.0 / jnp.array(e_per_graph, jnp.float32)).reshape(b, 1)
    MnS = Mn * inv_n        # mean-readout scaling folded into membership matrix
    MeS = Me * inv_e

    bf16 = jnp.bfloat16
    graph = (S.astype(bf16), T.astype(bf16), jnp.transpose(T).astype(bf16),
             MnS.astype(bf16), MeS.astype(bf16))
    return graph, n_pad, e_pad, n_real, e_real


if __name__ == "__main__":
    IN_ATOM_FEAT_DIM = 7
    IN_BOND_FEAT_DIM = 5
    HIDDEN_DIM = 32      # hidden_dim == out_dim so residual applies on all layers
    N_LAYERS = 4         # net_params['L']

    key = jax.random.PRNGKey(0)
    k_param, k_h, k_e = jax.random.split(key, 3)
    params = make_params(k_param, IN_ATOM_FEAT_DIM, IN_BOND_FEAT_DIM,
                         HIDDEN_DIM, N_LAYERS)

    graph, n_pad, e_pad, n_real, e_real = build_batched_graph()

    # node / edge input features; pad rows zeroed (masked out by S/T/MnS/MeS),
    # feature dims zero-padded to 8 to fill the sublane contraction tile.
    h_in = jax.random.normal(k_h, (n_pad, IN_ATOM_FEAT_DIM)).astype(jnp.float32)
    h_in = h_in.at[n_real:].set(0.0)
    h_in = jnp.pad(h_in, ((0, 0), (0, _round_up(IN_ATOM_FEAT_DIM, 8) - IN_ATOM_FEAT_DIM)))
    e_in = jax.random.normal(k_e, (e_pad, IN_BOND_FEAT_DIM)).astype(jnp.float32)
    e_in = e_in.at[e_real:].set(0.0)
    e_in = jnp.pad(e_in, ((0, 0), (0, _round_up(IN_BOND_FEAT_DIM, 8) - IN_BOND_FEAT_DIM)))

    out, attn = gated_gcn_net_forward(
        dataset_idx=0, graph=graph, h_in=h_in, e_in=e_in,
        training_flag=False, params=params, hidden=HIDDEN_DIM,
        n_layers=N_LAYERS)
    out = jax.block_until_ready(out)
    assert out.shape == (2, 1) and out.dtype == jnp.float32
    print("KERNEL_OK")
</pallas_src>

<mosaic_0001>
module attributes {stable_mosaic.version = 11 : i64} {
  func.func @_gated_gcn_net_kernel(%arg0: memref<16x8xf32, #tpu.memory_space<vmem>>, %arg1: memref<24x8xf32, #tpu.memory_space<vmem>>, %arg2: memref<24x16xbf16, #tpu.memory_space<vmem>>, %arg3: memref<24x16xbf16, #tpu.memory_space<vmem>>, %arg4: memref<16x24xbf16, #tpu.memory_space<vmem>>, %arg5: memref<2x16xbf16, #tpu.memory_space<vmem>>, %arg6: memref<2x24xbf16, #tpu.memory_space<vmem>>, %arg7: memref<8x32xf32, #tpu.memory_space<vmem>>, %arg8: memref<1x32xf32, #tpu.memory_space<vmem>>, %arg9: memref<8x32xf32, #tpu.memory_space<vmem>>, %arg10: memref<1x32xf32, #tpu.memory_space<vmem>>, %arg11: memref<4x32x160xf32, #tpu.memory_space<vmem>>, %arg12: memref<4x1x160xf32, #tpu.memory_space<vmem>>, %arg13: memref<4x1x32xf32, #tpu.memory_space<vmem>>, %arg14: memref<4x1x32xf32, #tpu.memory_space<vmem>>, %arg15: memref<4x1x32xf32, #tpu.memory_space<vmem>>, %arg16: memref<4x1x32xf32, #tpu.memory_space<vmem>>, %arg17: memref<64x32xf32, #tpu.memory_space<vmem>>, %arg18: memref<1x32xf32, #tpu.memory_space<vmem>>, %arg19: memref<32x16xf32, #tpu.memory_space<vmem>>, %arg20: memref<1x16xf32, #tpu.memory_space<vmem>>, %arg21: memref<16x1xf32, #tpu.memory_space<vmem>>, %arg22: memref<1x1xf32, #tpu.memory_space<vmem>>, %arg23: memref<2x1xf32, #tpu.memory_space<vmem>>) attributes {dimension_semantics = [], scalar_prefetch = 0 : i64, scratch_operands = 0 : i64, tpu.core_type = #tpu.core_type<tc>} {
    %c0 = arith.constant 0 : index
    %c0_0 = arith.constant 0 : index
    %0 = vector.load %arg0[%c0, %c0_0] : memref<16x8xf32, #tpu.memory_space<vmem>>, vector<16x8xf32>
    %c0_1 = arith.constant 0 : index
    %c0_2 = arith.constant 0 : index
    %1 = vector.load %arg7[%c0_1, %c0_2] : memref<8x32xf32, #tpu.memory_space<vmem>>, vector<8x32xf32>
    %cst = arith.constant dense<0.000000e+00> : vector<16x32xf32>
    %2 = tpu.matmul %0, %1, %cst {dimension_numbers = #tpu.dot_dimension_numbers<[1], [0], [0], [1], [0, 0, 1, 1], [], []>} : vector<16x8xf32>, vector<8x32xf32>, vector<16x32xf32> -> vector<16x32xf32>
    %c0_3 = arith.constant 0 : index
    %c0_4 = arith.constant 0 : index
    %3 = vector.load %arg8[%c0_3, %c0_4] : memref<1x32xf32, #tpu.memory_space<vmem>>, vector<1x32xf32>
    %4 = vector.broadcast %3 : vector<1x32xf32> to vector<16x32xf32>
    %5 = arith.addf %2, %4 : vector<16x32xf32>
    %c0_5 = arith.constant 0 : index
    %c0_6 = arith.constant 0 : index
    %6 = vector.load %arg1[%c0_5, %c0_6] : memref<24x8xf32, #tpu.memory_space<vmem>>, vector<24x8xf32>
    %c0_7 = arith.constant 0 : index
    %c0_8 = arith.constant 0 : index
    %7 = vector.load %arg9[%c0_7, %c0_8] : memref<8x32xf32, #tpu.memory_space<vmem>>, vector<8x32xf32>
    %cst_9 = arith.constant dense<0.000000e+00> : vector<24x32xf32>
    %8 = tpu.matmul %6, %7, %cst_9 {dimension_numbers = #tpu.dot_dimension_numbers<[1], [0], [0], [1], [0, 0, 1, 1], [], []>} : vector<24x8xf32>, vector<8x32xf32>, vector<24x32xf32> -> vector<24x32xf32>
    %c0_10 = arith.constant 0 : index
    %c0_11 = arith.constant 0 : index
    %9 = vector.load %arg10[%c0_10, %c0_11] : memref<1x32xf32, #tpu.memory_space<vmem>>, vector<1x32xf32>
    %10 = vector.broadcast %9 : vector<1x32xf32> to vector<24x32xf32>
    %11 = arith.addf %8, %10 : vector<24x32xf32>
    %c0_12 = arith.constant 0 : index
    %c0_13 = arith.constant 0 : index
    %12 = vector.load %arg2[%c0_12, %c0_13] : memref<24x16xbf16, #tpu.memory_space<vmem>>, vector<24x16xbf16>
    %c0_14 = arith.constant 0 : index
    %c0_15 = arith.constant 0 : index
    %13 = vector.load %arg3[%c0_14, %c0_15] : memref<24x16xbf16, #tpu.memory_space<vmem>>, vector<24x16xbf16>
    %c0_16 = arith.constant 0 : index
    %c0_17 = arith.constant 0 : index
    %14 = vector.load %arg4[%c0_16, %c0_17] : memref<16x24xbf16, #tpu.memory_space<vmem>>, vector<16x24xbf16>
    %15 = tpu.concatenate %5, %11 in 0 : vector<16x32xf32>, vector<24x32xf32> -> vector<40x32xf32>
    %c0_18 = arith.constant 0 : index
    %c0_19 = arith.constant 0 : index
    %c0_20 = arith.constant 0 : index
    %16 = vector.load %arg11[%c0_18, %c0_19, %c0_20] : memref<4x32x160xf32, #tpu.memory_space<vmem>>, vector<1x32x160xf32>
    %17 = vector.shape_cast %16 : vector<1x32x160xf32> to vector<32x160xf32>
    %cst_21 = arith.constant dense<0.000000e+00> : vector<40x160xf32>
    %18 = tpu.matmul %15, %17, %cst_21 {dimension_numbers = #tpu.dot_dimension_numbers<[1], [0], [0], [1], [0, 0, 1, 1], [], []>} : vector<40x32xf32>, vector<32x160xf32>, vector<40x160xf32> -> vector<40x160xf32>
    %c0_22 = arith.constant 0 : index
    %c0_23 = arith.constant 0 : index
    %c0_24 = arith.constant 0 : index
    %19 = vector.load %arg12[%c0_22, %c0_23, %c0_24] : memref<4x1x160xf32, #tpu.memory_space<vmem>>, vector<1x1x160xf32>
    %20 = vector.shape_cast %19 : vector<1x1x160xf32> to vector<1x160xf32>
    %21 = vector.broadcast %20 : vector<1x160xf32> to vector<40x160xf32>
    %22 = arith.addf %18, %21 : vector<40x160xf32>
    %23 = vector.extract_strided_slice %22 {offsets = [0, 0], sizes = [16, 128], strides = [1, 1]} : vector<40x160xf32> to vector<16x128xf32>
    %24 = vector.extract_strided_slice %22 {offsets = [16, 128], sizes = [24, 32], strides = [1, 1]} : vector<40x160xf32> to vector<24x32xf32>
    %25 = arith.truncf %23 : vector<16x128xf32> to vector<16x128xbf16>
    %cst_25 = arith.constant dense<0.000000e+00> : vector<24x128xf32>
    %26 = tpu.matmul %12, %25, %cst_25 {dimension_numbers = #tpu.dot_dimension_numbers<[1], [0], [0], [1], [0, 0, 1, 1], [], []>} : vector<24x16xbf16>, vector<16x128xbf16>, vector<24x128xf32> -> vector<24x128xf32>
    %27 = vector.extract_strided_slice %25 {offsets = [0, 96], sizes = [16, 32], strides = [1, 1]} : vector<16x128xbf16> to vector<16x32xbf16>
    %cst_26 = arith.constant dense<0.000000e+00> : vector<24x32xf32>
    %28 = tpu.matmul %13, %27, %cst_26 {dimension_numbers = #tpu.dot_dimension_numbers<[1], [0], [0], [1], [0, 0, 1, 1], [], []>} : vector<24x16xbf16>, vector<16x32xbf16>, vector<24x32xf32> -> vector<24x32xf32>
    %29 = vector.extract_strided_slice %26 {offsets = [0, 0], sizes = [24, 32], strides = [1, 1]} : vector<24x128xf32> to vector<24x32xf32>
    %30 = vector.extract_strided_slice %26 {offsets = [0, 32], sizes = [24, 32], strides = [1, 1]} : vector<24x128xf32> to vector<24x32xf32>
    %31 = arith.addf %30, %28 : vector<24x32xf32>
    %32 = arith.addf %31, %24 : vector<24x32xf32>
    %33 = arith.negf %32 : vector<24x32xf32>
    %34 = math.exp %33 : vector<24x32xf32>
    %cst_27 = arith.constant 1.000000e+00 : f32
    %35 = vector.broadcast %cst_27 : f32 to vector<24x32xf32>
    %36 = arith.addf %35, %34 : vector<24x32xf32>
    %37 = arith.divf %35, %36 : vector<24x32xf32>
    %38 = arith.mulf %37, %29 : vector<24x32xf32>
    %39 = tpu.concatenate %38, %37 in 1 : vector<24x32xf32>, vector<24x32xf32> -> vector<24x64xf32>
    %40 = arith.truncf %39 : vector<24x64xf32> to vector<24x64xbf16>
    %cst_28 = arith.constant dense<0.000000e+00> : vector<16x64xf32>
    %41 = tpu.matmul %14, %40, %cst_28 {dimension_numbers = #tpu.dot_dimension_numbers<[1], [0], [0], [1], [0, 0, 1, 1], [], []>} : vector<16x24xbf16>, vector<24x64xbf16>, vector<16x64xf32> -> vector<16x64xf32>
    %42 = vector.extract_strided_slice %41 {offsets = [0, 0], sizes = [16, 32], strides = [1, 1]} : vector<16x64xf32> to vector<16x32xf32>
    %43 = vector.extract_strided_slice %41 {offsets = [0, 32], sizes = [16, 32], strides = [1, 1]} : vector<16x64xf32> to vector<16x32xf32>
    %44 = vector.extract_strided_slice %23 {offsets = [0, 64], sizes = [16, 32], strides = [1, 1]} : vector<16x128xf32> to vector<16x32xf32>
    %cst_29 = arith.constant 9.99999997E-7 : f32
    %45 = vector.broadcast %cst_29 : f32 to vector<16x32xf32>
    %46 = arith.addf %43, %45 : vector<16x32xf32>
    %47 = tpu.reciprocal %46 {approx = true} : vector<16x32xf32> -> vector<16x32xf32>
    %48 = arith.mulf %42, %47 : vector<16x32xf32>
    %49 = arith.addf %44, %48 : vector<16x32xf32>
    %c0_30 = arith.constant 0 : index
    %c0_31 = arith.constant 0 : index
    %c0_32 = arith.constant 0 : index
    %50 = vector.load %arg13[%c0_30, %c0_31, %c0_32] : memref<4x1x32xf32, #tpu.memory_space<vmem>>, vector<1x1x32xf32>
    %51 = vector.shape_cast %50 : vector<1x1x32xf32> to vector<1x32xf32>
    %52 = vector.broadcast %51 : vector<1x32xf32> to vector<16x32xf32>
    %53 = arith.mulf %49, %52 : vector<16x32xf32>
    %c0_33 = arith.constant 0 : index
    %c0_34 = arith.constant 0 : index
    %c0_35 = arith.constant 0 : index
    %54 = vector.load %arg14[%c0_33, %c0_34, %c0_35] : memref<4x1x32xf32, #tpu.memory_space<vmem>>, vector<1x1x32xf32>
    %55 = vector.shape_cast %54 : vector<1x1x32xf32> to vector<1x32xf32>
    %56 = vector.broadcast %55 : vector<1x32xf32> to vector<16x32xf32>
    %57 = arith.addf %53, %56 : vector<16x32xf32>
    %cst_36 = arith.constant 0.000000e+00 : f32
    %58 = vector.broadcast %cst_36 : f32 to vector<16x32xf32>
    %59 = arith.maximumf %57, %58 : vector<16x32xf32>
    %60 = arith.addf %5, %59 : vector<16x32xf32>
    %c0_37 = arith.constant 0 : index
    %c0_38 = arith.constant 0 : index
    %c0_39 = arith.constant 0 : index
    %61 = vector.load %arg15[%c0_37, %c0_38, %c0_39] : memref<4x1x32xf32, #tpu.memory_space<vmem>>, vector<1x1x32xf32>
    %62 = vector.shape_cast %61 : vector<1x1x32xf32> to vector<1x32xf32>
    %63 = vector.broadcast %62 : vector<1x32xf32> to vector<24x32xf32>
    %64 = arith.mulf %32, %63 : vector<24x32xf32>
    %c0_40 = arith.constant 0 : index
    %c0_41 = arith.constant 0 : index
    %c0_42 = arith.constant 0 : index
    %65 = vector.load %arg16[%c0_40, %c0_41, %c0_42] : memref<4x1x32xf32, #tpu.memory_space<vmem>>, vector<1x1x32xf32>
    %66 = vector.shape_cast %65 : vector<1x1x32xf32> to vector<1x32xf32>
    %67 = vector.broadcast %66 : vector<1x32xf32> to vector<24x32xf32>
    %68 = arith.addf %64, %67 : vector<24x32xf32>
    %cst_43 = arith.constant 0.000000e+00 : f32
    %69 = vector.broadcast %cst_43 : f32 to vector<24x32xf32>
    %70 = arith.maximumf %68, %69 : vector<24x32xf32>
    %71 = arith.addf %11, %70 : vector<24x32xf32>
    %72 = tpu.concatenate %60, %71 in 0 : vector<16x32xf32>, vector<24x32xf32> -> vector<40x32xf32>
    %c1 = arith.constant 1 : index
    %c0_44 = arith.constant 0 : index
    %c0_45 = arith.constant 0 : index
    %73 = vector.load %arg11[%c1, %c0_44, %c0_45] : memref<4x32x160xf32, #tpu.memory_space<vmem>>, vector<1x32x160xf32>
    %74 = vector.shape_cast %73 : vector<1x32x160xf32> to vector<32x160xf32>
    %cst_46 = arith.constant dense<0.000000e+00> : vector<40x160xf32>
    %75 = tpu.matmul %72, %74, %cst_46 {dimension_numbers = #tpu.dot_dimension_numbers<[1], [0], [0], [1], [0, 0, 1, 1], [], []>} : vector<40x32xf32>, vector<32x160xf32>, vector<40x160xf32> -> vector<40x160xf32>
    %c1_47 = arith.constant 1 : index
    %c0_48 = arith.constant 0 : index
    %c0_49 = arith.constant 0 : index
    %76 = vector.load %arg12[%c1_47, %c0_48, %c0_49] : memref<4x1x160xf32, #tpu.memory_space<vmem>>, vector<1x1x160xf32>
    %77 = vector.shape_cast %76 : vector<1x1x160xf32> to vector<1x160xf32>
    %78 = vector.broadcast %77 : vector<1x160xf32> to vector<40x160xf32>
    %79 = arith.addf %75, %78 : vector<40x160xf32>
    %80 = vector.extract_strided_slice %79 {offsets = [0, 0], sizes = [16, 128], strides = [1, 1]} : vector<40x160xf32> to vector<16x128xf32>
    %81 = vector.extract_strided_slice %79 {offsets = [16, 128], sizes = [24, 32], strides = [1, 1]} : vector<40x160xf32> to vector<24x32xf32>
    %82 = arith.truncf %80 : vector<16x128xf32> to vector<16x128xbf16>
    %cst_50 = arith.constant dense<0.000000e+00> : vector<24x128xf32>
    %83 = tpu.matmul %12, %82, %cst_50 {dimension_numbers = #tpu.dot_dimension_numbers<[1], [0], [0], [1], [0, 0, 1, 1], [], []>} : vector<24x16xbf16>, vector<16x128xbf16>, vector<24x128xf32> -> vector<24x128xf32>
    %84 = vector.extract_strided_slice %82 {offsets = [0, 96], sizes = [16, 32], strides = [1, 1]} : vector<16x128xbf16> to vector<16x32xbf16>
    %cst_51 = arith.constant dense<0.000000e+00> : vector<24x32xf32>
    %85 = tpu.matmul %13, %84, %cst_51 {dimension_numbers = #tpu.dot_dimension_numbers<[1], [0], [0], [1], [0, 0, 1, 1], [], []>} : vector<24x16xbf16>, vector<16x32xbf16>, vector<24x32xf32> -> vector<24x32xf32>
    %86 = vector.extract_strided_slice %83 {offsets = [0, 0], sizes = [24, 32], strides = [1, 1]} : vector<24x128xf32> to vector<24x32xf32>
    %87 = vector.extract_strided_slice %83 {offsets = [0, 32], sizes = [24, 32], strides = [1, 1]} : vector<24x128xf32> to vector<24x32xf32>
    %88 = arith.addf %87, %85 : vector<24x32xf32>
    %89 = arith.addf %88, %81 : vector<24x32xf32>
    %90 = arith.negf %89 : vector<24x32xf32>
    %91 = math.exp %90 : vector<24x32xf32>
    %cst_52 = arith.constant 1.000000e+00 : f32
    %92 = vector.broadcast %cst_52 : f32 to vector<24x32xf32>
    %93 = arith.addf %92, %91 : vector<24x32xf32>
    %94 = arith.divf %92, %93 : vector<24x32xf32>
    %95 = arith.mulf %94, %86 : vector<24x32xf32>
    %96 = tpu.concatenate %95, %94 in 1 : vector<24x32xf32>, vector<24x32xf32> -> vector<24x64xf32>
    %97 = arith.truncf %96 : vector<24x64xf32> to vector<24x64xbf16>
    %cst_53 = arith.constant dense<0.000000e+00> : vector<16x64xf32>
    %98 = tpu.matmul %14, %97, %cst_53 {dimension_numbers = #tpu.dot_dimension_numbers<[1], [0], [0], [1], [0, 0, 1, 1], [], []>} : vector<16x24xbf16>, vector<24x64xbf16>, vector<16x64xf32> -> vector<16x64xf32>
    %99 = vector.extract_strided_slice %98 {offsets = [0, 0], sizes = [16, 32], strides = [1, 1]} : vector<16x64xf32> to vector<16x32xf32>
    %100 = vector.extract_strided_slice %98 {offsets = [0, 32], sizes = [16, 32], strides = [1, 1]} : vector<16x64xf32> to vector<16x32xf32>
    %101 = vector.extract_strided_slice %80 {offsets = [0, 64], sizes = [16, 32], strides = [1, 1]} : vector<16x128xf32> to vector<16x32xf32>
    %cst_54 = arith.constant 9.99999997E-7 : f32
    %102 = vector.broadcast %cst_54 : f32 to vector<16x32xf32>
    %103 = arith.addf %100, %102 : vector<16x32xf32>
    %104 = tpu.reciprocal %103 {approx = true} : vector<16x32xf32> -> vector<16x32xf32>
    %105 = arith.mulf %99, %104 : vector<16x32xf32>
    %106 = arith.addf %101, %105 : vector<16x32xf32>
    %c1_55 = arith.constant 1 : index
    %c0_56 = arith.constant 0 : index
    %c0_57 = arith.constant 0 : index
    %107 = vector.load %arg13[%c1_55, %c0_56, %c0_57] : memref<4x1x32xf32, #tpu.memory_space<vmem>>, vector<1x1x32xf32>
    %108 = vector.shape_cast %107 : vector<1x1x32xf32> to vector<1x32xf32>
    %109 = vector.broadcast %108 : vector<1x32xf32> to vector<16x32xf32>
    %110 = arith.mulf %106, %109 : vector<16x32xf32>
    %c1_58 = arith.constant 1 : index
    %c0_59 = arith.constant 0 : index
    %c0_60 = arith.constant 0 : index
    %111 = vector.load %arg14[%c1_58, %c0_59, %c0_60] : memref<4x1x32xf32, #tpu.memory_space<vmem>>, vector<1x1x32xf32>
    %112 = vector.shape_cast %111 : vector<1x1x32xf32> to vector<1x32xf32>
    %113 = vector.broadcast %112 : vector<1x32xf32> to vector<16x32xf32>
    %114 = arith.addf %110, %113 : vector<16x32xf32>
    %cst_61 = arith.constant 0.000000e+00 : f32
    %115 = vector.broadcast %cst_61 : f32 to vector<16x32xf32>
    %116 = arith.maximumf %114, %115 : vector<16x32xf32>
    %117 = arith.addf %60, %116 : vector<16x32xf32>
    %c1_62 = arith.constant 1 : index
    %c0_63 = arith.constant 0 : index
    %c0_64 = arith.constant 0 : index
    %118 = vector.load %arg15[%c1_62, %c0_63, %c0_64] : memref<4x1x32xf32, #tpu.memory_space<vmem>>, vector<1x1x32xf32>
    %119 = vector.shape_cast %118 : vector<1x1x32xf32> to vector<1x32xf32>
    %120 = vector.broadcast %119 : vector<1x32xf32> to vector<24x32xf32>
    %121 = arith.mulf %89, %120 : vector<24x32xf32>
    %c1_65 = arith.constant 1 : index
    %c0_66 = arith.constant 0 : index
    %c0_67 = arith.constant 0 : index
    %122 = vector.load %arg16[%c1_65, %c0_66, %c0_67] : memref<4x1x32xf32, #tpu.memory_space<vmem>>, vector<1x1x32xf32>
    %123 = vector.shape_cast %122 : vector<1x1x32xf32> to vector<1x32xf32>
    %124 = vector.broadcast %123 : vector<1x32xf32> to vector<24x32xf32>
    %125 = arith.addf %121, %124 : vector<24x32xf32>
    %cst_68 = arith.constant 0.000000e+00 : f32
    %126 = vector.broadcast %cst_68 : f32 to vector<24x32xf32>
    %127 = arith.maximumf %125, %126 : vector<24x32xf32>
    %128 = arith.addf %71, %127 : vector<24x32xf32>
    %129 = tpu.concatenate %117, %128 in 0 : vector<16x32xf32>, vector<24x32xf32> -> vector<40x32xf32>
    %c2 = arith.constant 2 : index
    %c0_69 = arith.constant 0 : index
    %c0_70 = arith.constant 0 : index
    %130 = vector.load %arg11[%c2, %c0_69, %c0_70] : memref<4x32x160xf32, #tpu.memory_space<vmem>>, vector<1x32x160xf32>
    %131 = vector.shape_cast %130 : vector<1x32x160xf32> to vector<32x160xf32>
    %cst_71 = arith.constant dense<0.000000e+00> : vector<40x160xf32>
    %132 = tpu.matmul %129, %131, %cst_71 {dimension_numbers = #tpu.dot_dimension_numbers<[1], [0], [0], [1], [0, 0, 1, 1], [], []>} : vector<40x32xf32>, vector<32x160xf32>, vector<40x160xf32> -> vector<40x160xf32>
    %c2_72 = arith.constant 2 : index
    %c0_73 = arith.constant 0 : index
    %c0_74 = arith.constant 0 : index
    %133 = vector.load %arg12[%c2_72, %c0_73, %c0_74] : memref<4x1x160xf32, #tpu.memory_space<vmem>>, vector<1x1x160xf32>
    %134 = vector.shape_cast %133 : vector<1x1x160xf32> to vector<1x160xf32>
    %135 = vector.broadcast %134 : vector<1x160xf32> to vector<40x160xf32>
    %136 = arith.addf %132, %135 : vector<40x160xf32>
    %137 = vector.extract_strided_slice %136 {offsets = [0, 0], sizes = [16, 128], strides = [1, 1]} : vector<40x160xf32> to vector<16x128xf32>
    %138 = vector.extract_strided_slice %136 {offsets = [16, 128], sizes = [24, 32], strides = [1, 1]} : vector<40x160xf32> to vector<24x32xf32>
    %139 = arith.truncf %137 : vector<16x128xf32> to vector<16x128xbf16>
    %cst_75 = arith.constant dense<0.000000e+00> : vector<24x128xf32>
    %140 = tpu.matmul %12, %139, %cst_75 {dimension_numbers = #tpu.dot_dimension_numbers<[1], [0], [0], [1], [0, 0, 1, 1], [], []>} : vector<24x16xbf16>, vector<16x128xbf16>, vector<24x128xf32> -> vector<24x128xf32>
    %141 = vector.extract_strided_slice %139 {offsets = [0, 96], sizes = [16, 32], strides = [1, 1]} : vector<16x128xbf16> to vector<16x32xbf16>
    %cst_76 = arith.constant dense<0.000000e+00> : vector<24x32xf32>
    %142 = tpu.matmul %13, %141, %cst_76 {dimension_numbers = #tpu.dot_dimension_numbers<[1], [0], [0], [1], [0, 0, 1, 1], [], []>} : vector<24x16xbf16>, vector<16x32xbf16>, vector<24x32xf32> -> vector<24x32xf32>
    %143 = vector.extract_strided_slice %140 {offsets = [0, 0], sizes = [24, 32], strides = [1, 1]} : vector<24x128xf32> to vector<24x32xf32>
    %144 = vector.extract_strided_slice %140 {offsets = [0, 32], sizes = [24, 32], strides = [1, 1]} : vector<24x128xf32> to vector<24x32xf32>
    %145 = arith.addf %144, %142 : vector<24x32xf32>
    %146 = arith.addf %145, %138 : vector<24x32xf32>
    %147 = arith.negf %146 : vector<24x32xf32>
    %148 = math.exp %147 : vector<24x32xf32>
    %cst_77 = arith.constant 1.000000e+00 : f32
    %149 = vector.broadcast %cst_77 : f32 to vector<24x32xf32>
    %150 = arith.addf %149, %148 : vector<24x32xf32>
    %151 = arith.divf %149, %150 : vector<24x32xf32>
    %152 = arith.mulf %151, %143 : vector<24x32xf32>
    %153 = tpu.concatenate %152, %151 in 1 : vector<24x32xf32>, vector<24x32xf32> -> vector<24x64xf32>
    %154 = arith.truncf %153 : vector<24x64xf32> to vector<24x64xbf16>
    %cst_78 = arith.constant dense<0.000000e+00> : vector<16x64xf32>
    %155 = tpu.matmul %14, %154, %cst_78 {dimension_numbers = #tpu.dot_dimension_numbers<[1], [0], [0], [1], [0, 0, 1, 1], [], []>} : vector<16x24xbf16>, vector<24x64xbf16>, vector<16x64xf32> -> vector<16x64xf32>
    %156 = vector.extract_strided_slice %155 {offsets = [0, 0], sizes = [16, 32], strides = [1, 1]} : vector<16x64xf32> to vector<16x32xf32>
    %157 = vector.extract_strided_slice %155 {offsets = [0, 32], sizes = [16, 32], strides = [1, 1]} : vector<16x64xf32> to vector<16x32xf32>
    %158 = vector.extract_strided_slice %137 {offsets = [0, 64], sizes = [16, 32], strides = [1, 1]} : vector<16x128xf32> to vector<16x32xf32>
    %cst_79 = arith.constant 9.99999997E-7 : f32
    %159 = vector.broadcast %cst_79 : f32 to vector<16x32xf32>
    %160 = arith.addf %157, %159 : vector<16x32xf32>
    %161 = tpu.reciprocal %160 {approx = true} : vector<16x32xf32> -> vector<16x32xf32>
    %162 = arith.mulf %156, %161 : vector<16x32xf32>
    %163 = arith.addf %158, %162 : vector<16x32xf32>
    %c2_80 = arith.constant 2 : index
    %c0_81 = arith.constant 0 : index
    %c0_82 = arith.constant 0 : index
    %164 = vector.load %arg13[%c2_80, %c0_81, %c0_82] : memref<4x1x32xf32, #tpu.memory_space<vmem>>, vector<1x1x32xf32>
    %165 = vector.shape_cast %164 : vector<1x1x32xf32> to vector<1x32xf32>
    %166 = vector.broadcast %165 : vector<1x32xf32> to vector<16x32xf32>
    %167 = arith.mulf %163, %166 : vector<16x32xf32>
    %c2_83 = arith.constant 2 : index
    %c0_84 = arith.constant 0 : index
    %c0_85 = arith.constant 0 : index
    %168 = vector.load %arg14[%c2_83, %c0_84, %c0_85] : memref<4x1x32xf32, #tpu.memory_space<vmem>>, vector<1x1x32xf32>
    %169 = vector.shape_cast %168 : vector<1x1x32xf32> to vector<1x32xf32>
    %170 = vector.broadcast %169 : vector<1x32xf32> to vector<16x32xf32>
    %171 = arith.addf %167, %170 : vector<16x32xf32>
    %cst_86 = arith.constant 0.000000e+00 : f32
    %172 = vector.broadcast %cst_86 : f32 to vector<16x32xf32>
    %173 = arith.maximumf %171, %172 : vector<16x32xf32>
    %174 = arith.addf %117, %173 : vector<16x32xf32>
    %c2_87 = arith.constant 2 : index
    %c0_88 = arith.constant 0 : index
    %c0_89 = arith.constant 0 : index
    %175 = vector.load %arg15[%c2_87, %c0_88, %c0_89] : memref<4x1x32xf32, #tpu.memory_space<vmem>>, vector<1x1x32xf32>
    %176 = vector.shape_cast %175 : vector<1x1x32xf32> to vector<1x32xf32>
    %177 = vector.broadcast %176 : vector<1x32xf32> to vector<24x32xf32>
    %178 = arith.mulf %146, %177 : vector<24x32xf32>
    %c2_90 = arith.constant 2 : index
    %c0_91 = arith.constant 0 : index
    %c0_92 = arith.constant 0 : index
    %179 = vector.load %arg16[%c2_90, %c0_91, %c0_92] : memref<4x1x32xf32, #tpu.memory_space<vmem>>, vector<1x1x32xf32>
    %180 = vector.shape_cast %179 : vector<1x1x32xf32> to vector<1x32xf32>
    %181 = vector.broadcast %180 : vector<1x32xf32> to vector<24x32xf32>
    %182 = arith.addf %178, %181 : vector<24x32xf32>
    %cst_93 = arith.constant 0.000000e+00 : f32
    %183 = vector.broadcast %cst_93 : f32 to vector<24x32xf32>
    %184 = arith.maximumf %182, %183 : vector<24x32xf32>
    %185 = arith.addf %128, %184 : vector<24x32xf32>
    %186 = tpu.concatenate %174, %185 in 0 : vector<16x32xf32>, vector<24x32xf32> -> vector<40x32xf32>
    %c3 = arith.constant 3 : index
    %c0_94 = arith.constant 0 : index
    %c0_95 = arith.constant 0 : index
    %187 = vector.load %arg11[%c3, %c0_94, %c0_95] : memref<4x32x160xf32, #tpu.memory_space<vmem>>, vector<1x32x160xf32>
    %188 = vector.shape_cast %187 : vector<1x32x160xf32> to vector<32x160xf32>
    %cst_96 = arith.constant dense<0.000000e+00> : vector<40x160xf32>
    %189 = tpu.matmul %186, %188, %cst_96 {dimension_numbers = #tpu.dot_dimension_numbers<[1], [0], [0], [1], [0, 0, 1, 1], [], []>} : vector<40x32xf32>, vector<32x160xf32>, vector<40x160xf32> -> vector<40x160xf32>
    %c3_97 = arith.constant 3 : index
    %c0_98 = arith.constant 0 : index
    %c0_99 = arith.constant 0 : index
    %190 = vector.load %arg12[%c3_97, %c0_98, %c0_99] : memref<4x1x160xf32, #tpu.memory_space<vmem>>, vector<1x1x160xf32>
    %191 = vector.shape_cast %190 : vector<1x1x160xf32> to vector<1x160xf32>
    %192 = vector.broadcast %191 : vector<1x160xf32> to vector<40x160xf32>
    %193 = arith.addf %189, %192 : vector<40x160xf32>
    %194 = vector.extract_strided_slice %193 {offsets = [0, 0], sizes = [16, 128], strides = [1, 1]} : vector<40x160xf32> to vector<16x128xf32>
    %195 = vector.extract_strided_slice %193 {offsets = [16, 128], sizes = [24, 32], strides = [1, 1]} : vector<40x160xf32> to vector<24x32xf32>
    %196 = arith.truncf %194 : vector<16x128xf32> to vector<16x128xbf16>
    %cst_100 = arith.constant dense<0.000000e+00> : vector<24x128xf32>
    %197 = tpu.matmul %12, %196, %cst_100 {dimension_numbers = #tpu.dot_dimension_numbers<[1], [0], [0], [1], [0, 0, 1, 1], [], []>} : vector<24x16xbf16>, vector<16x128xbf16>, vector<24x128xf32> -> vector<24x128xf32>
    %198 = vector.extract_strided_slice %196 {offsets = [0, 96], sizes = [16, 32], strides = [1, 1]} : vector<16x128xbf16> to vector<16x32xbf16>
    %cst_101 = arith.constant dense<0.000000e+00> : vector<24x32xf32>
    %199 = tpu.matmul %13, %198, %cst_101 {dimension_numbers = #tpu.dot_dimension_numbers<[1], [0], [0], [1], [0, 0, 1, 1], [], []>} : vector<24x16xbf16>, vector<16x32xbf16>, vector<24x32xf32> -> vector<24x32xf32>
    %200 = vector.extract_strided_slice %197 {offsets = [0, 0], sizes = [24, 32], strides = [1, 1]} : vector<24x128xf32> to vector<24x32xf32>
    %201 = vector.extract_strided_slice %197 {offsets = [0, 32], sizes = [24, 32], strides = [1, 1]} : vector<24x128xf32> to vector<24x32xf32>
    %202 = arith.addf %201, %199 : vector<24x32xf32>
    %203 = arith.addf %202, %195 : vector<24x32xf32>
    %204 = arith.negf %203 : vector<24x32xf32>
    %205 = math.exp %204 : vector<24x32xf32>
    %cst_102 = arith.constant 1.000000e+00 : f32
    %206 = vector.broadcast %cst_102 : f32 to vector<24x32xf32>
    %207 = arith.addf %206, %205 : vector<24x32xf32>
    %208 = arith.divf %206, %207 : vector<24x32xf32>
    %209 = arith.mulf %208, %200 : vector<24x32xf32>
    %210 = tpu.concatenate %209, %208 in 1 : vector<24x32xf32>, vector<24x32xf32> -> vector<24x64xf32>
    %211 = arith.truncf %210 : vector<24x64xf32> to vector<24x64xbf16>
    %cst_103 = arith.constant dense<0.000000e+00> : vector<16x64xf32>
    %212 = tpu.matmul %14, %211, %cst_103 {dimension_numbers = #tpu.dot_dimension_numbers<[1], [0], [0], [1], [0, 0, 1, 1], [], []>} : vector<16x24xbf16>, vector<24x64xbf16>, vector<16x64xf32> -> vector<16x64xf32>
    %213 = vector.extract_strided_slice %212 {offsets = [0, 0], sizes = [16, 32], strides = [1, 1]} : vector<16x64xf32> to vector<16x32xf32>
    %214 = vector.extract_strided_slice %212 {offsets = [0, 32], sizes = [16, 32], strides = [1, 1]} : vector<16x64xf32> to vector<16x32xf32>
    %215 = vector.extract_strided_slice %194 {offsets = [0, 64], sizes = [16, 32], strides = [1, 1]} : vector<16x128xf32> to vector<16x32xf32>
    %cst_104 = arith.constant 9.99999997E-7 : f32
    %216 = vector.broadcast %cst_104 : f32 to vector<16x32xf32>
    %217 = arith.addf %214, %216 : vector<16x32xf32>
    %218 = tpu.reciprocal %217 {approx = true} : vector<16x32xf32> -> vector<16x32xf32>
    %219 = arith.mulf %213, %218 : vector<16x32xf32>
    %220 = arith.addf %215, %219 : vector<16x32xf32>
    %c3_105 = arith.constant 3 : index
    %c0_106 = arith.constant 0 : index
    %c0_107 = arith.constant 0 : index
    %221 = vector.load %arg13[%c3_105, %c0_106, %c0_107] : memref<4x1x32xf32, #tpu.memory_space<vmem>>, vector<1x1x32xf32>
    %222 = vector.shape_cast %221 : vector<1x1x32xf32> to vector<1x32xf32>
    %223 = vector.broadcast %222 : vector<1x32xf32> to vector<16x32xf32>
    %224 = arith.mulf %220, %223 : vector<16x32xf32>
    %c3_108 = arith.constant 3 : index
    %c0_109 = arith.constant 0 : index
    %c0_110 = arith.constant 0 : index
    %225 = vector.load %arg14[%c3_108, %c0_109, %c0_110] : memref<4x1x32xf32, #tpu.memory_space<vmem>>, vector<1x1x32xf32>
    %226 = vector.shape_cast %225 : vector<1x1x32xf32> to vector<1x32xf32>
    %227 = vector.broadcast %226 : vector<1x32xf32> to vector<16x32xf32>
    %228 = arith.addf %224, %227 : vector<16x32xf32>
    %cst_111 = arith.constant 0.000000e+00 : f32
    %229 = vector.broadcast %cst_111 : f32 to vector<16x32xf32>
    %230 = arith.maximumf %228, %229 : vector<16x32xf32>
    %231 = arith.addf %174, %230 : vector<16x32xf32>
    %c3_112 = arith.constant 3 : index
    %c0_113 = arith.constant 0 : index
    %c0_114 = arith.constant 0 : index
    %232 = vector.load %arg15[%c3_112, %c0_113, %c0_114] : memref<4x1x32xf32, #tpu.memory_space<vmem>>, vector<1x1x32xf32>
    %233 = vector.shape_cast %232 : vector<1x1x32xf32> to vector<1x32xf32>
    %234 = vector.broadcast %233 : vector<1x32xf32> to vector<24x32xf32>
    %235 = arith.mulf %203, %234 : vector<24x32xf32>
    %c3_115 = arith.constant 3 : index
    %c0_116 = arith.constant 0 : index
    %c0_117 = arith.constant 0 : index
    %236 = vector.load %arg16[%c3_115, %c0_116, %c0_117] : memref<4x1x32xf32, #tpu.memory_space<vmem>>, vector<1x1x32xf32>
    %237 = vector.shape_cast %236 : vector<1x1x32xf32> to vector<1x32xf32>
    %238 = vector.broadcast %237 : vector<1x32xf32> to vector<24x32xf32>
    %239 = arith.addf %235, %238 : vector<24x32xf32>
    %cst_118 = arith.constant 0.000000e+00 : f32
    %240 = vector.broadcast %cst_118 : f32 to vector<24x32xf32>
    %241 = arith.maximumf %239, %240 : vector<24x32xf32>
    %242 = arith.addf %185, %241 : vector<24x32xf32>
    %c0_119 = arith.constant 0 : index
    %c0_120 = arith.constant 0 : index
    %243 = vector.load %arg5[%c0_119, %c0_120] : memref<2x16xbf16, #tpu.memory_space<vmem>>, vector<2x16xbf16>
    %244 = arith.truncf %231 : vector<16x32xf32> to vector<16x32xbf16>
    %cst_121 = arith.constant dense<0.000000e+00> : vector<2x32xf32>
    %245 = tpu.matmul %243, %244, %cst_121 {dimension_numbers = #tpu.dot_dimension_numbers<[1], [0], [0], [1], [0, 0, 1, 1], [], []>} : vector<2x16xbf16>, vector<16x32xbf16>, vector<2x32xf32> -> vector<2x32xf32>
    %c0_122 = arith.constant 0 : index
    %c0_123 = arith.constant 0 : index
    %246 = vector.load %arg6[%c0_122, %c0_123] : memref<2x24xbf16, #tpu.memory_space<vmem>>, vector<2x24xbf16>
    %247 = arith.truncf %242 : vector<24x32xf32> to vector<24x32xbf16>
    %cst_124 = arith.constant dense<0.000000e+00> : vector<2x32xf32>
    %248 = tpu.matmul %246, %247, %cst_124 {dimension_numbers = #tpu.dot_dimension_numbers<[1], [0], [0], [1], [0, 0, 1, 1], [], []>} : vector<2x24xbf16>, vector<24x32xbf16>, vector<2x32xf32> -> vector<2x32xf32>
    %c0_125 = arith.constant 0 : index
    %c0_126 = arith.constant 0 : index
    %249 = vector.load %arg17[%c0_125, %c0_126] : memref<64x32xf32, #tpu.memory_space<vmem>>, vector<64x32xf32>
    %250 = vector.extract_strided_slice %249 {offsets = [0, 0], sizes = [32, 32], strides = [1, 1]} : vector<64x32xf32> to vector<32x32xf32>
    %cst_127 = arith.constant dense<0.000000e+00> : vector<2x32xf32>
    %251 = tpu.matmul %245, %250, %cst_127 {dimension_numbers = #tpu.dot_dimension_numbers<[1], [0], [0], [1], [0, 0, 1, 1], [], []>} : vector<2x32xf32>, vector<32x32xf32>, vector<2x32xf32> -> vector<2x32xf32>
    %252 = vector.extract_strided_slice %249 {offsets = [32, 0], sizes = [32, 32], strides = [1, 1]} : vector<64x32xf32> to vector<32x32xf32>
    %cst_128 = arith.constant dense<0.000000e+00> : vector<2x32xf32>
    %253 = tpu.matmul %248, %252, %cst_128 {dimension_numbers = #tpu.dot_dimension_numbers<[1], [0], [0], [1], [0, 0, 1, 1], [], []>} : vector<2x32xf32>, vector<32x32xf32>, vector<2x32xf32> -> vector<2x32xf32>
    %254 = arith.addf %251, %253 : vector<2x32xf32>
    %c0_129 = arith.constant 0 : index
    %c0_130 = arith.constant 0 : index
    %255 = vector.load %arg18[%c0_129, %c0_130] : memref<1x32xf32, #tpu.memory_space<vmem>>, vector<1x32xf32>
    %256 = vector.broadcast %255 : vector<1x32xf32> to vector<2x32xf32>
    %257 = arith.addf %254, %256 : vector<2x32xf32>
    %cst_131 = arith.constant 0.000000e+00 : f32
    %258 = vector.broadcast %cst_131 : f32 to vector<2x32xf32>
    %259 = arith.maximumf %257, %258 : vector<2x32xf32>
    %c0_132 = arith.constant 0 : index
    %c0_133 = arith.constant 0 : index
    %260 = vector.load %arg19[%c0_132, %c0_133] : memref<32x16xf32, #tpu.memory_space<vmem>>, vector<32x16xf32>
    %cst_134 = arith.constant dense<0.000000e+00> : vector<2x16xf32>
    %261 = tpu.matmul %259, %260, %cst_134 {dimension_numbers = #tpu.dot_dimension_numbers<[1], [0], [0], [1], [0, 0, 1, 1], [], []>} : vector<2x32xf32>, vector<32x16xf32>, vector<2x16xf32> -> vector<2x16xf32>
    %c0_135 = arith.constant 0 : index
    %c0_136 = arith.constant 0 : index
    %262 = vector.load %arg20[%c0_135, %c0_136] : memref<1x16xf32, #tpu.memory_space<vmem>>, vector<1x16xf32>
    %263 = vector.broadcast %262 : vector<1x16xf32> to vector<2x16xf32>
    %264 = arith.addf %261, %263 : vector<2x16xf32>
    %cst_137 = arith.constant 0.000000e+00 : f32
    %265 = vector.broadcast %cst_137 : f32 to vector<2x16xf32>
    %266 = arith.maximumf %264, %265 : vector<2x16xf32>
    %c0_138 = arith.constant 0 : index
    %c0_139 = arith.constant 0 : index
    %267 = vector.load %arg21[%c0_138, %c0_139] : memref<16x1xf32, #tpu.memory_space<vmem>>, vector<16x1xf32>
    %cst_140 = arith.constant dense<0.000000e+00> : vector<2x1xf32>
    %268 = tpu.matmul %266, %267, %cst_140 {dimension_numbers = #tpu.dot_dimension_numbers<[1], [0], [0], [1], [0, 0, 1, 1], [], []>} : vector<2x16xf32>, vector<16x1xf32>, vector<2x1xf32> -> vector<2x1xf32>
    %c0_141 = arith.constant 0 : index
    %c0_142 = arith.constant 0 : index
    %269 = vector.load %arg22[%c0_141, %c0_142] : memref<1x1xf32, #tpu.memory_space<vmem>>, vector<1x1xf32>
    %270 = vector.broadcast %269 : vector<1x1xf32> to vector<2x1xf32>
    %271 = arith.addf %268, %270 : vector<2x1xf32>
    %c0_143 = arith.constant 0 : index
    %c0_144 = arith.constant 0 : index
    %272 = vector.load %arg23[%c0_143, %c0_144] : memref<2x1xf32, #tpu.memory_space<vmem>>, vector<2x1xf32>
    tpu.vector_store %arg23[%c0_143, %c0_144], %271 {strides = array<i32>} : memref<2x1xf32, #tpu.memory_space<vmem>>, vector<2x1xf32>,
    return
  }
}

</mosaic_0001>

<llo_original>
// kernel: tpu_custom_call.1
$region0: #{tpu_custom_call.1}
  #allocation0 [shape = 'u32[]', space=smem, size = 0x4, offset = 0x4, fixed_abs, tag = 'smem constant byte address 0x4 - core index']
  #allocation1 [shape = 'u32[144,128]{1,0:T(1,128)}', space=vmem, size = 0x12000, scoped, tag = 'internal scratch']
  #allocation2 [shape = 'f32[1,1]{1,0:T(1,128)S(1)}', space=vmem, size = 0x200, scoped, tag = 'scoped memory for tpu_custom_call.1']
  %s0 = inlined_call_operand.vmem [shape: f32[16,8], index: 0, kind: input, shape index: {}]
  %s1 = inlined_call_operand.vmem [shape: f32[24,8], index: 1, kind: input, shape index: {}]
  %s2 = inlined_call_operand.vmem [shape: bf16[24,16], index: 2, kind: input, shape index: {}]
  %s3 = inlined_call_operand.vmem [shape: bf16[24,16], index: 3, kind: input, shape index: {}]
  %s4 = inlined_call_operand.hbm [shape: bf16[16,24], index: 4, kind: input, shape index: {}]
  %s5 = inlined_call_operand.vmem [shape: bf16[2,16], index: 5, kind: input, shape index: {}]
  %s6 = inlined_call_operand.hbm [shape: bf16[2,24], index: 6, kind: input, shape index: {}]
  %s7 = inlined_call_operand.hbm [shape: f32[8,32], index: 7, kind: input, shape index: {}]
  %s8 = inlined_call_operand.hbm [shape: f32[1,32], index: 8, kind: input, shape index: {}]
  %s9 = inlined_call_operand.hbm [shape: f32[8,32], index: 9, kind: input, shape index: {}]
  %s10 = inlined_call_operand.hbm [shape: f32[1,32], index: 10, kind: input, shape index: {}]
  %s11 = inlined_call_operand.vmem [shape: f32[4,32,160], index: 11, kind: input, shape index: {}]
  %s12 = inlined_call_operand.hbm [shape: f32[4,1,160], index: 12, kind: input, shape index: {}]
  %s13 = inlined_call_operand.vmem [shape: f32[4,1,32], index: 13, kind: input, shape index: {}]
  %s14 = inlined_call_operand.vmem [shape: f32[4,1,32], index: 14, kind: input, shape index: {}]
  %s15 = inlined_call_operand.vmem [shape: f32[4,1,32], index: 15, kind: input, shape index: {}]
  %s16 = inlined_call_operand.vmem [shape: f32[4,1,32], index: 16, kind: input, shape index: {}]
  %s17 = inlined_call_operand.vmem [shape: f32[64,32], index: 17, kind: input, shape index: {}]
  %s18 = inlined_call_operand.vmem [shape: f32[1,32], index: 18, kind: input, shape index: {}]
  %s19 = inlined_call_operand.vmem [shape: f32[32,16], index: 19, kind: input, shape index: {}]
  %s20 = inlined_call_operand.vmem [shape: f32[1,16], index: 20, kind: input, shape index: {}]
  %s21 = inlined_call_operand.vmem [shape: f32[16,1], index: 21, kind: input, shape index: {}]
  %s22 = inlined_call_operand.<no memory space> [shape: f32[1,1], index: 22, kind: input, shape index: {}]
  %s23 = inlined_call_operand.vmem [shape: f32[2,1], index: 23, kind: output, shape index: {}]
  %s24 = sld [smem:[#allocation0]]
  $region130: #{tpu_custom_call.1} parent=0
    _
  %s26 = ssub.s32 1, %s24
  %s27 = scalar_select 0, %s26, %s24
  %v28 = vstv %s22
  %29 = vst [vmem:[#allocation2] sm:$0x1] %v28
  $region1: #{tpu_custom_call.1} parent=0
    #allocation3 [shape = 'u8[4096]{0}', space=vmem, size = 0x1000, scoped, tag = 'input window, operand 4, single buffered']
    #allocation4 [shape = 's32[1]{0}', space=sflag, size = 0x4, scoped, tag = 'scoped memory for tpu_custom_call.1']
    #allocation5 [shape = 'u8[512]{0}', space=vmem, size = 0x400, scoped, tag = 'input window, operand 6, single buffered']
    #allocation6 [shape = 's32[1]{0}', space=sflag, size = 0x4, scoped, tag = 'scoped memory for tpu_custom_call.1']
    #allocation7 [shape = 'u8[4096]{0}', space=vmem, size = 0x1000, scoped, tag = 'input window, operand 7, single buffered']
    #allocation8 [shape = 'u8[512]{0}', space=vmem, size = 0x400, scoped, tag = 'input window, operand 8, single buffered']
    #allocation9 [shape = 's32[1]{0}', space=sflag, size = 0x4, scoped, tag = 'scoped memory for tpu_custom_call.1']
    #allocation10 [shape = 'u8[4096]{0}', space=vmem, size = 0x1000, scoped, tag = 'input window, operand 9, single buffered']
    #allocation11 [shape = 'u8[512]{0}', space=vmem, size = 0x400, scoped, tag = 'input window, operand 10, single buffered']
    #allocation12 [shape = 's32[1]{0}', space=sflag, size = 0x4, scoped, tag = 'scoped memory for tpu_custom_call.1']
    #allocation13 [shape = 'u8[4096]{0}', space=vmem, size = 0x1000, scoped, tag = 'input window, operand 12, single buffered']
    %30 = vsyncpa [#allocation4], 0
    %31 = vsyncpa [#allocation6], 0
    %32 = vsyncpa [#allocation9], 0
    %33 = vsyncpa [#allocation12], 0
    // Predicated region
    $region2: #{tpu_custom_call.1} parent=1 // pred_check
      _
    $region3: #{tpu_custom_call.1} parent=1 // pred_check_branch
      %35 = sbr.rel (0) target = $region5
    $region4: #{tpu_custom_call.1} parent=1 // pred_region
      _
    $region5: #{tpu_custom_call.1} parent=1 // pred_fallthru
      _
    // Predicated region
    $region6: #{tpu_custom_call.1} parent=1 // pred_check
      _
    $region7: #{tpu_custom_call.1} parent=1 // pred_check_branch
      %37 = sbr.rel (0) target = $region9
    $region8: #{tpu_custom_call.1} parent=1 // pred_region
      _
    $region9: #{tpu_custom_call.1} parent=1 // pred_fallthru
      _
    // Predicated region
    $region10: #{tpu_custom_call.1} parent=1 // pred_check
      _
    $region11: #{tpu_custom_call.1} parent=1 // pred_check_branch
      %39 = sbr.rel (0) target = $region13
    $region12: #{tpu_custom_call.1} parent=1 // pred_region
      _
    $region13: #{tpu_custom_call.1} parent=1 // pred_fallthru
      _
    // Predicated region
    $region14: #{tpu_custom_call.1} parent=1 // pred_check
      _
    $region15: #{tpu_custom_call.1} parent=1 // pred_check_branch
      %41 = sbr.rel (0) target = $region17
    $region16: #{tpu_custom_call.1} parent=1 // pred_region
      _
    $region17: #{tpu_custom_call.1} parent=1 // pred_fallthru
      _
    // Predicated region
    $region18: #{tpu_custom_call.1} parent=1 // pred_check
      _
    $region19: #{tpu_custom_call.1} parent=1 // pred_check_branch
      %43 = sbr.rel (0) target = $region21
    $region20: #{tpu_custom_call.1} parent=1 // pred_region
      %s45 = ssub.s32 128, 128
      %46 = vsyncadd [#allocation4], %s45
      %s47 = sshll.u32 [#allocation3], 4
      %s48 = int_to_ptr.vmem [resolvable:$true] %s47
      %53 = dma.hbm_to_vmem [thread:$0]  %s4, 128, %s48, [#allocation4], 64, 64, 4
    $region21: #{tpu_custom_call.1} parent=1 // pred_fallthru
      _
    // Predicated region
    $region22: #{tpu_custom_call.1} parent=1 // pred_check
      _
    $region23: #{tpu_custom_call.1} parent=1 // pred_check_branch
      %55 = sbr.rel (0) target = $region25
    $region24: #{tpu_custom_call.1} parent=1 // pred_region
      _
    $region25: #{tpu_custom_call.1} parent=1 // pred_fallthru
      _
    // Predicated region
    $region26: #{tpu_custom_call.1} parent=1 // pred_check
      _
    $region27: #{tpu_custom_call.1} parent=1 // pred_check_branch
      %57 = sbr.rel (0) target = $region29
    $region28: #{tpu_custom_call.1} parent=1 // pred_region
      %s59 = ssub.s32 16, 16
      %60 = vsyncadd [#allocation6], %s59
      %s62 = sshll.u32 [#allocation5], 4
      %s63 = int_to_ptr.vmem [resolvable:$true] %s62
      %65 = dma.hbm_to_vmem [thread:$0]  %s6, 16, %s63, [#allocation6]
    $region29: #{tpu_custom_call.1} parent=1 // pred_fallthru
      _
    // Predicated region
    $region30: #{tpu_custom_call.1} parent=1 // pred_check
      _
    $region31: #{tpu_custom_call.1} parent=1 // pred_check_branch
      %67 = sbr.rel (0) target = $region33
    $region32: #{tpu_custom_call.1} parent=1 // pred_region
      %s69 = ssub.s32 128, 128
      %70 = vsyncadd [#allocation6], %s69
      %s72 = sshll.u32 [#allocation7], 4
      %s73 = int_to_ptr.vmem [resolvable:$true] %s72
      %75 = dma.hbm_to_vmem [thread:$0]  %s7, 128, %s73, [#allocation6]
    $region33: #{tpu_custom_call.1} parent=1 // pred_fallthru
      _
    // Predicated region
    $region34: #{tpu_custom_call.1} parent=1 // pred_check
      _
    $region35: #{tpu_custom_call.1} parent=1 // pred_check_branch
      %77 = sbr.rel (0) target = $region37
    $region36: #{tpu_custom_call.1} parent=1 // pred_region
      %s79 = ssub.s32 16, 16
      %80 = vsyncadd [#allocation9], %s79
      %s82 = sshll.u32 [#allocation8], 4
      %s83 = int_to_ptr.vmem [resolvable:$true] %s82
      %85 = dma.hbm_to_vmem [thread:$0]  %s8, 16, %s83, [#allocation9]
    $region37: #{tpu_custom_call.1} parent=1 // pred_fallthru
      _
    // Predicated region
    $region38: #{tpu_custom_call.1} parent=1 // pred_check
      _
    $region39: #{tpu_custom_call.1} parent=1 // pred_check_branch
      %87 = sbr.rel (0) target = $region41
    $region40: #{tpu_custom_call.1} parent=1 // pred_region
      %s89 = ssub.s32 128, 128
      %90 = vsyncadd [#allocation9], %s89
      %s92 = sshll.u32 [#allocation10], 4
      %s93 = int_to_ptr.vmem [resolvable:$true] %s92
      %95 = dma.hbm_to_vmem [thread:$0]  %s9, 128, %s93, [#allocation9]
    $region41: #{tpu_custom_call.1} parent=1 // pred_fallthru
      _
    // Predicated region
    $region42: #{tpu_custom_call.1} parent=1 // pred_check
      _
    $region43: #{tpu_custom_call.1} parent=1 // pred_check_branch
      %97 = sbr.rel (0) target = $region45
    $region44: #{tpu_custom_call.1} parent=1 // pred_region
      %s99 = ssub.s32 16, 16
      %100 = vsyncadd [#allocation12], %s99
      %s102 = sshll.u32 [#allocation11], 4
      %s103 = int_to_ptr.vmem [resolvable:$true] %s102
      %105 = dma.hbm_to_vmem [thread:$0]  %s10, 16, %s103, [#allocation12]
    $region45: #{tpu_custom_call.1} parent=1 // pred_fallthru
      _
    // Predicated region
    $region46: #{tpu_custom_call.1} parent=1 // pred_check
      _
    $region47: #{tpu_custom_call.1} parent=1 // pred_check_branch
      %107 = sbr.rel (0) target = $region49
    $region48: #{tpu_custom_call.1} parent=1 // pred_region
      _
    $region49: #{tpu_custom_call.1} parent=1 // pred_fallthru
      _
    // Predicated region
    $region50: #{tpu_custom_call.1} parent=1 // pred_check
      _
    $region51: #{tpu_custom_call.1} parent=1 // pred_check_branch
      %109 = sbr.rel (0) target = $region53
    $region52: #{tpu_custom_call.1} parent=1 // pred_region
      %s111 = ssub.s32 128, 128
      %112 = vsyncadd [#allocation12], %s111
      %s113 = sshll.u32 [#allocation13], 4
      %s114 = int_to_ptr.vmem [resolvable:$true] %s113
      %119 = dma.hbm_to_vmem [thread:$0]  %s12, 128, %s114, [#allocation12], 32, 32, 2
    $region53: #{tpu_custom_call.1} parent=1 // pred_fallthru
      _
    // Predicated region
    $region54: #{tpu_custom_call.1} parent=1 // pred_check
      _
    $region55: #{tpu_custom_call.1} parent=1 // pred_check_branch
      %121 = sbr.rel (0) target = $region57
    $region56: #{tpu_custom_call.1} parent=1 // pred_region
      _
    $region57: #{tpu_custom_call.1} parent=1 // pred_fallthru
      _
    // Predicated region
    $region58: #{tpu_custom_call.1} parent=1 // pred_check
      _
    $region59: #{tpu_custom_call.1} parent=1 // pred_check_branch
      %123 = sbr.rel (0) target = $region61
    $region60: #{tpu_custom_call.1} parent=1 // pred_region
      _
    $region61: #{tpu_custom_call.1} parent=1 // pred_fallthru
      _
    // Predicated region
    $region62: #{tpu_custom_call.1} parent=1 // pred_check
      _
    $region63: #{tpu_custom_call.1} parent=1 // pred_check_branch
      %125 = sbr.rel (0) target = $region65
    $region64: #{tpu_custom_call.1} parent=1 // pred_region
      _
    $region65: #{tpu_custom_call.1} parent=1 // pred_fallthru
      _
    // Predicated region
    $region66: #{tpu_custom_call.1} parent=1 // pred_check
      _
    $region67: #{tpu_custom_call.1} parent=1 // pred_check_branch
      %127 = sbr.rel (0) target = $region69
    $region68: #{tpu_custom_call.1} parent=1 // pred_region
      _
    $region69: #{tpu_custom_call.1} parent=1 // pred_fallthru
      _
    // Predicated region
    $region70: #{tpu_custom_call.1} parent=1 // pred_check
      _
    $region71: #{tpu_custom_call.1} parent=1 // pred_check_branch
      %129 = sbr.rel (0) target = $region73
    $region72: #{tpu_custom_call.1} parent=1 // pred_region
      _
    $region73: #{tpu_custom_call.1} parent=1 // pred_fallthru
      _
    // Predicated region
    $region74: #{tpu_custom_call.1} parent=1 // pred_check
      _
    $region75: #{tpu_custom_call.1} parent=1 // pred_check_branch
      %131 = sbr.rel (0) target = $region77
    $region76: #{tpu_custom_call.1} parent=1 // pred_region
      _
    $region77: #{tpu_custom_call.1} parent=1 // pred_fallthru
      _
    // Predicated region
    $region78: #{tpu_custom_call.1} parent=1 // pred_check
      _
    $region79: #{tpu_custom_call.1} parent=1 // pred_check_branch
      %133 = sbr.rel (0) target = $region81
    $region80: #{tpu_custom_call.1} parent=1 // pred_region
      _
    $region81: #{tpu_custom_call.1} parent=1 // pred_fallthru
      _
    // Predicated region
    $region82: #{tpu_custom_call.1} parent=1 // pred_check
      _
    $region83: #{tpu_custom_call.1} parent=1 // pred_check_branch
      %135 = sbr.rel (0) target = $region85
    $region84: #{tpu_custom_call.1} parent=1 // pred_region
      _
    $region85: #{tpu_custom_call.1} parent=1 // pred_fallthru
      _
    // Predicated region
    $region86: #{tpu_custom_call.1} parent=1 // pred_check
      _
    $region87: #{tpu_custom_call.1} parent=1 // pred_check_branch
      %137 = sbr.rel (0) target = $region89
    $region88: #{tpu_custom_call.1} parent=1 // pred_region
      _
    $region89: #{tpu_custom_call.1} parent=1 // pred_fallthru
      _
    // Predicated region
    $region90: #{tpu_custom_call.1} parent=1 // pred_check
      _
    $region91: #{tpu_custom_call.1} parent=1 // pred_check_branch
      %139 = sbr.rel (0) target = $region93
    $region92: #{tpu_custom_call.1} parent=1 // pred_region
      _
    $region93: #{tpu_custom_call.1} parent=1 // pred_fallthru
      _
    // Predicated region
    $region94: #{tpu_custom_call.1} parent=1 // pred_check
      _
    $region95: #{tpu_custom_call.1} parent=1 // pred_check_branch
      %141 = sbr.rel (0) target = $region97
    $region96: #{tpu_custom_call.1} parent=1 // pred_region
      %142 = dma.done [#allocation4], 128
    $region97: #{tpu_custom_call.1} parent=1 // pred_fallthru
      _
    // Predicated region
    $region98: #{tpu_custom_call.1} parent=1 // pred_check
      _
    $region99: #{tpu_custom_call.1} parent=1 // pred_check_branch
      %144 = sbr.rel (0) target = $region101
    $region100: #{tpu_custom_call.1} parent=1 // pred_region
      %145 = dma.done [#allocation6], 16
    $region101: #{tpu_custom_call.1} parent=1 // pred_fallthru
      _
    // Predicated region
    $region102: #{tpu_custom_call.1} parent=1 // pred_check
      _
    $region103: #{tpu_custom_call.1} parent=1 // pred_check_branch
      %147 = sbr.rel (0) target = $region105
    $region104: #{tpu_custom_call.1} parent=1 // pred_region
      %148 = dma.done [#allocation6], 128
    $region105: #{tpu_custom_call.1} parent=1 // pred_fallthru
      _
    // Predicated region
    $region106: #{tpu_custom_call.1} parent=1 // pred_check
      _
    $region107: #{tpu_custom_call.1} parent=1 // pred_check_branch
      %150 = sbr.rel (0) target = $region109
    $region108: #{tpu_custom_call.1} parent=1 // pred_region
      %151 = dma.done [#allocation9], 16
    $region109: #{tpu_custom_call.1} parent=1 // pred_fallthru
      _
    // Predicated region
    $region110: #{tpu_custom_call.1} parent=1 // pred_check
      _
    $region111: #{tpu_custom_call.1} parent=1 // pred_check_branch
      %153 = sbr.rel (0) target = $region113
    $region112: #{tpu_custom_call.1} parent=1 // pred_region
      %154 = dma.done [#allocation9], 128
    $region113: #{tpu_custom_call.1} parent=1 // pred_fallthru
      _
    // Predicated region
    $region114: #{tpu_custom_call.1} parent=1 // pred_check
      _
    $region115: #{tpu_custom_call.1} parent=1 // pred_check_branch
      %156 = sbr.rel (0) target = $region117
    $region116: #{tpu_custom_call.1} parent=1 // pred_region
      %157 = dma.done [#allocation12], 16
    $region117: #{tpu_custom_call.1} parent=1 // pred_fallthru
      _
    // Predicated region
    $region118: #{tpu_custom_call.1} parent=1 // pred_check
      _
    $region119: #{tpu_custom_call.1} parent=1 // pred_check_branch
      %159 = sbr.rel (0) target = $region121
    $region120: #{tpu_custom_call.1} parent=1 // pred_region
      %160 = dma.done [#allocation12], 128
    $region121: #{tpu_custom_call.1} parent=1 // pred_fallthru
      _
    %v162 = vld [vmem:[%s0] sm:$0xff]
    %v163 = vld [vmem:[%s0 + $0x8] sm:$0xff]
    %v164 = vld [vmem:[#allocation7] sm:$0xff]
    %v165 = vld [vmem:[#allocation8] sm:$0x1]
    %v167 = vlaneseq
    %v168 = vshrl.u32 %v167, 7
    %v169 = vsub.s32 0, %v168
    %v170 = vrot.slane %v165, %v169
    %vm172 = vcmask 64512
    %v174 = vsel %vm172, %v162, 0
    %v177 = vsel %vm172, %v163, 0
    %179 = vmatprep.subr.mxu0 0.0
    %180 = vmatpush1.msra.mxu0 %v164
    %181 = vmatprep.subr.mxu0 0.0
    %182 = vmatpush1.msra.mxu0 0.0
    %183 = vmatprep.subr.mxu0 0.0
    %184 = vmatpush1.msra.mxu0 0.0
    %185 = vmatprep.subr.mxu0 0.0
    %186 = vmatpush1.msra.mxu0 0.0
    %187 = vmatprep.subr.mxu0 0.0
    %188 = vmatpush1.msra.mxu0 0.0
    %189 = vmatprep.subr.mxu0 0.0
    %190 = vmatpush1.msra.mxu0 0.0
    %191 = vmatprep.subr.mxu0 0.0
    %192 = vmatpush1.msra.mxu0 0.0
    %193 = vmatprep.subr.mxu0 0.0
    %194 = vmatpush1.msra.mxu0 0.0
    %195 = vmatprep.subr.mxu0 0.0
    %196 = vmatpush1.msra.mxu0 0.0
    %197 = vmatprep.subr.mxu0 0.0
    %198 = vmatpush1.msra.mxu0 0.0
    %199 = vmatprep.subr.mxu0 0.0
    %200 = vmatpush1.msra.mxu0 0.0
    %201 = vmatprep.subr.mxu0 0.0
    %202 = vmatpush1.msra.mxu0 0.0
    %203 = vmatprep.subr.mxu0 0.0
    %204 = vmatpush1.msra.mxu0 0.0
    %205 = vmatprep.subr.mxu0 0.0
    %206 = vmatpush1.msra.mxu0 0.0
    %207 = vmatprep.subr.mxu0 0.0
    %208 = vmatpush1.msra.mxu0 0.0
    %209 = vmatprep.subr.mxu0 0.0
    %210 = vmatpush1.msra.mxu0 0.0
    %211 = vmatprep.subr.mxu0 0.0
    %212 = vmatpush1.msra.mxu0 0.0
    %213 = vmatprep.subr.mxu0 0.0
    %214 = vmatpush1.msra.mxu0 0.0
    %215 = vmatprep.subr.mxu0 0.0
    %216 = vmatpush1.msra.mxu0 0.0
    %217 = vmatprep.subr.mxu0 0.0
    %218 = vmatpush1.msra.mxu0 0.0
    %219 = vmatprep.subr.mxu0 0.0
    %220 = vmatpush1.msra.mxu0 0.0
    %221 = vmatprep.subr.mxu0 0.0
    %222 = vmatpush1.msra.mxu0 0.0
    %223 = vmatprep.subr.mxu0 0.0
    %224 = vmatpush1.msra.mxu0 0.0
    %225 = vmatprep.subr.mxu0 0.0
    %226 = vmatpush1.msra.mxu0 0.0
    %227 = vmatprep.subr.mxu0 0.0
    %228 = vmatpush1.msra.mxu0 0.0
    %229 = vmatprep.subr.mxu0 0.0
    %230 = vmatpush1.msra.mxu0 0.0
    %231 = vmatprep.subr.mxu0 0.0
    %232 = vmatpush1.msra.mxu0 0.0
    %233 = vmatprep.subr.mxu0 0.0
    %234 = vmatpush1.msra.mxu0 0.0
    %235 = vmatprep.subr.mxu0 0.0
    %236 = vmatpush1.msra.mxu0 0.0
    %237 = vmatprep.subr.mxu0 0.0
    %238 = vmatpush1.msra.mxu0 0.0
    %239 = vmatprep.subr.mxu0 0.0
    %240 = vmatpush1.msra.mxu0 0.0
    %241 = vmatprep.subr.mxu0 0.0
    %242 = vmatpush1.msra.mxu0 0.0
    %243 = vmatprep.mubr.f32.mxu0 0.0
    %244 = vmatmul.mubr.f32.gmra.mrb[0].mxu0 %v174
    %v245 = vpop.f32.mrb[0].mxu0
    %v246 = vadd.f32 %v170, %v245
    %v247 = vpop.f32.mrb[0].mxu0
    %248 = vmatprep.mubr.f32.mxu0 0.0
    %249 = vmatmul.mubr.f32.gmra.mrb[0].mxu0 %v177
    %v250 = vpop.f32.mrb[0].mxu0
    %v251 = vadd.f32 %v170, %v250
    %v252 = vpop.f32.mrb[0].mxu0
    %253 = vdwg.mxu0
    %v254 = vld [vmem:[%s1] sm:$0xff]
    %v255 = vld [vmem:[%s1 + $0x8] sm:$0xff]
    %v256 = vld [vmem:[%s1 + $0x10] sm:$0xff]
    %v257 = vld [vmem:[#allocation10] sm:$0xff]
    %v258 = vld [vmem:[#allocation11] sm:$0x1]
    %v260 = vlaneseq
    %v261 = vshrl.u32 %v260, 7
    %v262 = vsub.s32 0, %v261
    %v263 = vrot.slane %v258, %v262
    %v266 = vsel %vm172, %v254, 0
    %v269 = vsel %vm172, %v255, 0
    %v272 = vsel %vm172, %v256, 0
    %274 = vmatprep.subr.mxu0 0.0
    %275 = vmatpush1.msra.mxu0 %v257
    %276 = vmatprep.subr.mxu0 0.0
    %277 = vmatpush1.msra.mxu0 0.0
    %278 = vmatprep.subr.mxu0 0.0
    %279 = vmatpush1.msra.mxu0 0.0
    %280 = vmatprep.subr.mxu0 0.0
    %281 = vmatpush1.msra.mxu0 0.0
    %282 = vmatprep.subr.mxu0 0.0
    %283 = vmatpush1.msra.mxu0 0.0
    %284 = vmatprep.subr.mxu0 0.0
    %285 = vmatpush1.msra.mxu0 0.0
    %286 = vmatprep.subr.mxu0 0.0
    %287 = vmatpush1.msra.mxu0 0.0
    %288 = vmatprep.subr.mxu0 0.0
    %289 = vmatpush1.msra.mxu0 0.0
    %290 = vmatprep.subr.mxu0 0.0
    %291 = vmatpush1.msra.mxu0 0.0
    %292 = vmatprep.subr.mxu0 0.0
    %293 = vmatpush1.msra.mxu0 0.0
    %294 = vmatprep.subr.mxu0 0.0
    %295 = vmatpush1.msra.mxu0 0.0
    %296 = vmatprep.subr.mxu0 0.0
    %297 = vmatpush1.msra.mxu0 0.0
    %298 = vmatprep.subr.mxu0 0.0
    %299 = vmatpush1.msra.mxu0 0.0
    %300 = vmatprep.subr.mxu0 0.0
    %301 = vmatpush1.msra.mxu0 0.0
    %302 = vmatprep.subr.mxu0 0.0
    %303 = vmatpush1.msra.mxu0 0.0
    %304 = vmatprep.subr.mxu0 0.0
    %305 = vmatpush1.msra.mxu0 0.0
    %306 = vmatprep.subr.mxu0 0.0
    %307 = vmatpush1.msra.mxu0 0.0
    %308 = vmatprep.subr.mxu0 0.0
    %309 = vmatpush1.msra.mxu0 0.0
    %310 = vmatprep.subr.mxu0 0.0
    %311 = vmatpush1.msra.mxu0 0.0
    %312 = vmatprep.subr.mxu0 0.0
    %313 = vmatpush1.msra.mxu0 0.0
    %314 = vmatprep.subr.mxu0 0.0
    %315 = vmatpush1.msra.mxu0 0.0
    %316 = vmatprep.subr.mxu0 0.0
    %317 = vmatpush1.msra.mxu0 0.0
    %318 = vmatprep.subr.mxu0 0.0
    %319 = vmatpush1.msra.mxu0 0.0
    %320 = vmatprep.subr.mxu0 0.0
    %321 = vmatpush1.msra.mxu0 0.0
    %322 = vmatprep.subr.mxu0 0.0
    %323 = vmatpush1.msra.mxu0 0.0
    %324 = vmatprep.subr.mxu0 0.0
    %325 = vmatpush1.msra.mxu0 0.0
    %326 = vmatprep.subr.mxu0 0.0
    %327 = vmatpush1.msra.mxu0 0.0
    %328 = vmatprep.subr.mxu0 0.0
    %329 = vmatpush1.msra.mxu0 0.0
    %330 = vmatprep.subr.mxu0 0.0
    %331 = vmatpush1.msra.mxu0 0.0
    %332 = vmatprep.subr.mxu0 0.0
    %333 = vmatpush1.msra.mxu0 0.0
    %334 = vmatprep.subr.mxu0 0.0
    %335 = vmatpush1.msra.mxu0 0.0
    %336 = vmatprep.subr.mxu0 0.0
    %337 = vmatpush1.msra.mxu0 0.0
    %338 = vmatprep.mubr.f32.mxu0 0.0
    %339 = vmatmul.mubr.f32.gmra.mrb[0].mxu0 %v266
    %v340 = vpop.f32.mrb[0].mxu0
    %v341 = vadd.f32 %v263, %v340
    %v342 = vpop.f32.mrb[0].mxu0
    %343 = vmatprep.mubr.f32.mxu0 0.0
    %344 = vmatmul.mubr.f32.gmra.mrb[0].mxu0 %v269
    %v345 = vpop.f32.mrb[0].mxu0
    %v346 = vadd.f32 %v263, %v345
    %v347 = vpop.f32.mrb[0].mxu0
    %348 = vmatprep.mubr.f32.mxu0 0.0
    %349 = vmatmul.mubr.f32.gmra.mrb[0].mxu0 %v272
    %v350 = vpop.f32.mrb[0].mxu0
    %v351 = vadd.f32 %v263, %v350
    %v352 = vpop.f32.mrb[0].mxu0
    %353 = vdwg.mxu0
    %v354 = vld [vmem:[%s2] sm:$0xf]
    %v355 = vld [vmem:[%s2 + $0x4] sm:$0xf]
    %v356 = vld [vmem:[%s2 + $0x8] sm:$0xf]
    %v357 = vld [vmem:[%s3] sm:$0xf]
    %v358 = vld [vmem:[%s3 + $0x4] sm:$0xf]
    %v359 = vld [vmem:[%s3 + $0x8] sm:$0xf]
    %v360 = vld [vmem:[#allocation3] sm:$0xf]
    %v361 = vld [vmem:[#allocation3 + $0x4] sm:$0xf]
    %v362 = vld [vmem:[%s11] sm:$0xff]
    %v363 = vld [vmem:[%s11 + $0x8] sm:$0xff]
    %v364 = vld [vmem:[%s11 + $0x10] sm:$0xff]
    %v365 = vld [vmem:[%s11 + $0x18] sm:$0xff]
    %v366 = vld [vmem:[%s11 + $0x20] sm:$0xff]
    %v367 = vld [vmem:[%s11 + $0x28] sm:$0xff]
    %v368 = vld [vmem:[%s11 + $0x30] sm:$0xff]
    %v369 = vld [vmem:[%s11 + $0x38] sm:$0xff]
    %v370 = vld [vmem:[#allocation13] sm:$0x3]
    %v372 = vlaneseq
    %v373 = vshrl.u32 %v372, 7
    %v374 = vsub.s32 0, %v373
    %v375 = vrot.slane %v370, %v374
    %v376 = vlaneseq
    %v377 = vshrl.u32 %v376, 7
    %v378 = vsub.s32 1, %v377
    %v379 = vrot.slane %v370, %v378
    %vm382 = vcmask 261120
    %v384 = vsel %vm382, %v246, 0
    %v387 = vsel %vm382, %v251, 0
    %v390 = vsel %vm382, %v341, 0
    %v393 = vsel %vm382, %v346, 0
    %v396 = vsel %vm382, %v351, 0
    %398 = vmatprep.subr.mxu0 %v363
    %399 = vmatpush1.msra.mxu0 %v362
    %400 = vmatprep.subr.mxu0 %v365
    %401 = vmatpush1.msra.mxu0 %v364
    %402 = vmatprep.subr.mxu0 %v367
    %403 = vmatpush1.msra.mxu0 %v366
    %404 = vmatprep.subr.mxu0 %v369
    %405 = vmatpush1.msra.mxu0 %v368
    %406 = vmatprep.subr.mxu0 0.0
    %407 = vmatpush1.msra.mxu0 0.0
    %408 = vmatprep.subr.mxu0 0.0
    %409 = vmatpush1.msra.mxu0 0.0
    %410 = vmatprep.subr.mxu0 0.0
    %411 = vmatpush1.msra.mxu0 0.0
    %412 = vmatprep.subr.mxu0 0.0
    %413 = vmatpush1.msra.mxu0 0.0
    %414 = vmatprep.subr.mxu0 0.0
    %415 = vmatpush1.msra.mxu0 0.0
    %416 = vmatprep.subr.mxu0 0.0
    %417 = vmatpush1.msra.mxu0 0.0
    %418 = vmatprep.subr.mxu0 0.0
    %419 = vmatpush1.msra.mxu0 0.0
    %420 = vmatprep.subr.mxu0 0.0
    %421 = vmatpush1.msra.mxu0 0.0
    %422 = vmatprep.subr.mxu0 0.0
    %423 = vmatpush1.msra.mxu0 0.0
    %424 = vmatprep.subr.mxu0 0.0
    %425 = vmatpush1.msra.mxu0 0.0
    %426 = vmatprep.subr.mxu0 0.0
    %427 = vmatpush1.msra.mxu0 0.0
    %428 = vmatprep.subr.mxu0 0.0
    %429 = vmatpush1.msra.mxu0 0.0
    %430 = vmatprep.subr.mxu0 0.0
    %431 = vmatpush1.msra.mxu0 0.0
    %432 = vmatprep.subr.mxu0 0.0
    %433 = vmatpush1.msra.mxu0 0.0
    %434 = vmatprep.subr.mxu0 0.0
    %435 = vmatpush1.msra.mxu0 0.0
    %436 = vmatprep.subr.mxu0 0.0
    %437 = vmatpush1.msra.mxu0 0.0
    %438 = vmatprep.subr.mxu0 0.0
    %439 = vmatpush1.msra.mxu0 0.0
    %440 = vmatprep.subr.mxu0 0.0
    %441 = vmatpush1.msra.mxu0 0.0
    %442 = vmatprep.subr.mxu0 0.0
    %443 = vmatpush1.msra.mxu0 0.0
    %444 = vmatprep.subr.mxu0 0.0
    %445 = vmatpush1.msra.mxu0 0.0
    %446 = vmatprep.subr.mxu0 0.0
    %447 = vmatpush1.msra.mxu0 0.0
    %448 = vmatprep.subr.mxu0 0.0
    %449 = vmatpush1.msra.mxu0 0.0
    %450 = vmatprep.subr.mxu0 0.0
    %451 = vmatpush1.msra.mxu0 0.0
    %452 = vmatprep.subr.mxu0 0.0
    %453 = vmatpush1.msra.mxu0 0.0
    %454 = vmatprep.subr.mxu0 0.0
    %455 = vmatpush1.msra.mxu0 0.0
    %456 = vmatprep.subr.mxu0 0.0
    %457 = vmatpush1.msra.mxu0 0.0
    %458 = vmatprep.subr.mxu0 0.0
    %459 = vmatpush1.msra.mxu0 0.0
    %460 = vmatprep.subr.mxu0 0.0
    %461 = vmatpush1.msra.mxu0 0.0
    %462 = vmatprep.mubr.f32.mxu0 0.0
    %463 = vmatmul.mubr.f32.gmra.mrb[0].mxu0 %v384
    %v464 = vpop.f32.mrb[0].mxu0
    %v465 = vadd.f32 %v375, %v464
    %v466 = vpop.f32.mrb[0].mxu0
    %467 = vmatprep.mubr.f32.mxu0 0.0
    %468 = vmatmul.mubr.f32.gmra.mrb[0].mxu0 %v387
    %v469 = vpop.f32.mrb[0].mxu0
    %v470 = vadd.f32 %v375, %v469
    %v471 = vpop.f32.mrb[0].mxu0
    %472 = vmatprep.mubr.f32.mxu0 0.0
    %473 = vmatmul.mubr.f32.gmra.mrb[0].mxu0 %v390
    %v474 = vpop.f32.mrb[0].mxu0
    %v475 = vpop.f32.mrb[0].mxu0
    %v476 = vadd.f32 %v379, %v475
    %477 = vmatprep.mubr.f32.mxu0 0.0
    %478 = vmatmul.mubr.f32.gmra.mrb[0].mxu0 %v393
    %v479 = vpop.f32.mrb[0].mxu0
    %v480 = vpop.f32.mrb[0].mxu0
    %v481 = vadd.f32 %v379, %v480
    %482 = vmatprep.mubr.f32.mxu0 0.0
    %483 = vmatmul.mubr.f32.gmra.mrb[0].mxu0 %v396
    %v484 = vpop.f32.mrb[0].mxu0
    %v485 = vpop.f32.mrb[0].mxu0
    %v486 = vadd.f32 %v379, %v485
    %487 = vdwg.mxu0
    %v488 = vpack.c.bf16 %v470, %v465
    %v492 = vunpack.c.l.b16 %v354
    %v493 = vunpack.c.l.b16 %v355
    %v494 = vunpack.c.l.b16 %v356
    %v495 = vpack.c.b16 %v493, %v492
    %v496 = vpack.c.b16 %v494, %v494
    %vm497 = vcmask 130048
    %v499 = vsel %vm497, %v495, 0
    %v502 = vsel %vm497, %v496, 0
    %504 = vmatprep.subr.bf16.mxu0 0
    %505 = vmatpush1.bf16.msra.mxu0 %v488
    %506 = vmatprep.subr.bf16.mxu0 0
    %507 = vmatpush1.bf16.msra.mxu0 0
    %508 = vmatprep.subr.bf16.mxu0 0
    %509 = vmatpush1.bf16.msra.mxu0 0
    %510 = vmatprep.subr.bf16.mxu0 0
    %511 = vmatpush1.bf16.msra.mxu0 0
    %512 = vmatprep.subr.bf16.mxu0 0
    %513 = vmatpush1.bf16.msra.mxu0 0
    %514 = vmatprep.subr.bf16.mxu0 0
    %515 = vmatpush1.bf16.msra.mxu0 0
    %516 = vmatprep.subr.bf16.mxu0 0
    %517 = vmatpush1.bf16.msra.mxu0 0
    %518 = vmatprep.subr.bf16.mxu0 0
    %519 = vmatpush1.bf16.msra.mxu0 0
    %520 = vmatprep.subr.bf16.mxu0 0
    %521 = vmatpush1.bf16.msra.mxu0 0
    %522 = vmatprep.subr.bf16.mxu0 0
    %523 = vmatpush1.bf16.msra.mxu0 0
    %524 = vmatprep.subr.bf16.mxu0 0
    %525 = vmatpush1.bf16.msra.mxu0 0
    %526 = vmatprep.subr.bf16.mxu0 0
    %527 = vmatpush1.bf16.msra.mxu0 0
    %528 = vmatprep.subr.bf16.mxu0 0
    %529 = vmatpush1.bf16.msra.mxu0 0
    %530 = vmatprep.subr.bf16.mxu0 0
    %531 = vmatpush1.bf16.msra.mxu0 0
    %532 = vmatprep.subr.bf16.mxu0 0
    %533 = vmatpush1.bf16.msra.mxu0 0
    %534 = vmatprep.subr.bf16.mxu0 0
    %535 = vmatpush1.bf16.msra.mxu0 0
    %536 = vmatprep.mubr.bf16.mxu0 0
    %537 = vmatmul.mubr.bf16.gmra.mrb[0].mxu0 %v499
    %v538 = vpop.f32.mrb[0].mxu0
    %v539 = vadd.f32 0.0, %v538
    %v540 = vpop.f32.mrb[0].mxu0
    %v541 = vpop.f32.mrb[0].mxu0
    %v542 = vadd.f32 0.0, %v541
    %v543 = vpop.f32.mrb[0].mxu0
    %544 = vmatprep.mubr.bf16.mxu0 0
    %545 = vmatmul.mubr.bf16.gmra.mrb[0].mxu0 %v502
    %v546 = vpop.f32.mrb[0].mxu0
    %v547 = vadd.f32 0.0, %v546
    %v548 = vpop.f32.mrb[0].mxu0
    %v549 = vpop.f32.mrb[0].mxu0
    %v550 = vpop.f32.mrb[0].mxu0
    %551 = vdwg.mxu0
    %v555 = vunpack.c.l.b16 %v357
    %v556 = vunpack.c.l.b16 %v358
    %v557 = vunpack.c.l.b16 %v359
    %v558 = vpack.c.b16 %v556, %v555
    %v559 = vpack.c.b16 %v557, %v557
    %561 = vrot.lane.b32.xlu0 %v488, 32
    %v562 = vpop.permute.xlu0 %561
    %v565 = vsel %vm497, %v558, 0
    %v568 = vsel %vm497, %v559, 0
    %570 = vmatprep.subr.bf16.mxu0 0
    %571 = vmatpush1.bf16.msra.mxu0 %v562
    %572 = vmatprep.subr.bf16.mxu0 0
    %573 = vmatpush1.bf16.msra.mxu0 0
    %574 = vmatprep.subr.bf16.mxu0 0
    %575 = vmatpush1.bf16.msra.mxu0 0
    %576 = vmatprep.subr.bf16.mxu0 0
    %577 = vmatpush1.bf16.msra.mxu0 0
    %578 = vmatprep.subr.bf16.mxu0 0
    %579 = vmatpush1.bf16.msra.mxu0 0
    %580 = vmatprep.subr.bf16.mxu0 0
    %581 = vmatpush1.bf16.msra.mxu0 0
    %582 = vmatprep.subr.bf16.mxu0 0
    %583 = vmatpush1.bf16.msra.mxu0 0
    %584 = vmatprep.subr.bf16.mxu0 0
    %585 = vmatpush1.bf16.msra.mxu0 0
    %586 = vmatprep.subr.bf16.mxu0 0
    %587 = vmatpush1.bf16.msra.mxu0 0
    %588 = vmatprep.subr.bf16.mxu0 0
    %589 = vmatpush1.bf16.msra.mxu0 0
    %590 = vmatprep.subr.bf16.mxu0 0
    %591 = vmatpush1.bf16.msra.mxu0 0
    %592 = vmatprep.subr.bf16.mxu0 0
    %593 = vmatpush1.bf16.msra.mxu0 0
    %594 = vmatprep.subr.bf16.mxu0 0
    %595 = vmatpush1.bf16.msra.mxu0 0
    %596 = vmatprep.subr.bf16.mxu0 0
    %597 = vmatpush1.bf16.msra.mxu0 0
    %598 = vmatprep.subr.bf16.mxu0 0
    %599 = vmatpush1.bf16.msra.mxu0 0
    %600 = vmatprep.subr.bf16.mxu0 0
    %601 = vmatpush1.bf16.msra.mxu0 0
    %602 = vmatprep.mubr.bf16.mxu0 0
    %603 = vmatmul.mubr.bf16.gmra.mrb[0].mxu0 %v565
    %v604 = vpop.f32.mrb[0].mxu0
    %v605 = vadd.f32 0.0, %v604
    %v606 = vpop.f32.mrb[0].mxu0
    %v607 = vpop.f32.mrb[0].mxu0
    %v608 = vadd.f32 0.0, %v607
    %v609 = vpop.f32.mrb[0].mxu0
    %610 = vmatprep.mubr.bf16.mxu0 0
    %611 = vmatmul.mubr.bf16.gmra.mrb[0].mxu0 %v568
    %v612 = vpop.f32.mrb[0].mxu0
    %v613 = vadd.f32 0.0, %v612
    %v614 = vpop.f32.mrb[0].mxu0
    %v615 = vpop.f32.mrb[0].mxu0
    %v616 = vpop.f32.mrb[0].mxu0
    %617 = vdwg.mxu0
    %621 = vrot.lane.b32.xlu0 %v605, 32
    %v622 = vpop.permute.xlu0 %621
    %623 = vrot.lane.b32.xlu0 %v608, 32
    %v624 = vpop.permute.xlu0 %623
    %625 = vrot.lane.b32.xlu0 %v613, 32
    %v626 = vpop.permute.xlu0 %625
    %v630 = vadd.f32 %v539, %v622
    %v631 = vadd.f32 %v542, %v624
    %v632 = vadd.f32 %v547, %v626
    %636 = vrot.lane.b32.xlu0 %v476, 32
    %v637 = vpop.permute.xlu0 %636
    %638 = vrot.lane.b32.xlu0 %v481, 32
    %v639 = vpop.permute.xlu0 %638
    %640 = vrot.lane.b32.xlu0 %v486, 32
    %v641 = vpop.permute.xlu0 %640
    %v645 = vadd.f32 %v630, %v637
    %v646 = vadd.f32 %v631, %v639
    %v647 = vadd.f32 %v632, %v641
    %v648 = vxor.u32 %v645, 2147483648
    %v649 = vxor.u32 %v646, 2147483648
    %v650 = vxor.u32 %v647, 2147483648
    %v651 = vmul.f32 %v648, 1.442695
    %v652 = vpow.pop %v651
    %v653 = vmul.f32 %v649, 1.442695
    %v654 = vpow.pop %v653
    %v655 = vmul.f32 %v650, 1.442695
    %v656 = vpow.pop %v655
    %v657 = vadd.f32 %v652, 1.0
    %v658 = vadd.f32 %v654, 1.0
    %v659 = vadd.f32 %v656, 1.0
    %v660 = vrcp.pop %v657
    %v661 = vmul.f32 1.0, %v660
    %v662 = vrcp.pop %v658
    %v663 = vmul.f32 1.0, %v662
    %v664 = vrcp.pop %v659
    %v665 = vmul.f32 1.0, %v664
    %669 = vrot.lane.b32.xlu0 %v539, 32
    %v670 = vpop.permute.xlu0 %669
    %671 = vrot.lane.b32.xlu0 %v542, 32
    %v672 = vpop.permute.xlu0 %671
    %673 = vrot.lane.b32.xlu0 %v547, 32
    %v674 = vpop.permute.xlu0 %673
    %v678 = vmul.f32 %v661, %v670
    %v679 = vmul.f32 %v663, %v672
    %v680 = vmul.f32 %v665, %v674
    %684 = vrot.lane.b32.xlu0 %v678, 96
    %v685 = vpop.permute.xlu0 %684
    %686 = vrot.lane.b32.xlu0 %v679, 96
    %v687 = vpop.permute.xlu0 %686
    %688 = vrot.lane.b32.xlu0 %v680, 96
    %v689 = vpop.permute.xlu0 %688
    %v693 = vsel %vm382, %v685, %v661
    %v694 = vsel %vm382, %v687, %v663
    %v695 = vsel %vm382, %v689, %v665
    %v696 = vpack.c.bf16 %v694, %v693
    %v697 = vpack.c.bf16 %v695, %v695
    %v700 = vunpack.c.l.b16 %v360
    %v701 = vunpack.c.l.b16 %v361
    %v702 = vpack.c.b16 %v701, %v700
    %vm703 = vcmask 195584
    %v705 = vsel %vm703, %v702, 0
    %vm707 = vcmask 1043456
    %v709 = vsel %vm707, %v697, 0
    %711 = vmatprep.subr.bf16.mxu0 0
    %712 = vmatpush1.bf16.msra.mxu0 %v696
    %713 = vmatprep.subr.bf16.mxu0 0
    %714 = vmatpush1.bf16.msra.mxu0 %v709
    %715 = vmatprep.subr.bf16.mxu0 0
    %716 = vmatpush1.bf16.msra.mxu0 0
    %717 = vmatprep.subr.bf16.mxu0 0
    %718 = vmatpush1.bf16.msra.mxu0 0
    %719 = vmatprep.subr.bf16.mxu0 0
    %720 = vmatpush1.bf16.msra.mxu0 0
    %721 = vmatprep.subr.bf16.mxu0 0
    %722 = vmatpush1.bf16.msra.mxu0 0
    %723 = vmatprep.subr.bf16.mxu0 0
    %724 = vmatpush1.bf16.msra.mxu0 0
    %725 = vmatprep.subr.bf16.mxu0 0
    %726 = vmatpush1.bf16.msra.mxu0 0
    %727 = vmatprep.subr.bf16.mxu0 0
    %728 = vmatpush1.bf16.msra.mxu0 0
    %729 = vmatprep.subr.bf16.mxu0 0
    %730 = vmatpush1.bf16.msra.mxu0 0
    %731 = vmatprep.subr.bf16.mxu0 0
    %732 = vmatpush1.bf16.msra.mxu0 0
    %733 = vmatprep.subr.bf16.mxu0 0
    %734 = vmatpush1.bf16.msra.mxu0 0
    %735 = vmatprep.subr.bf16.mxu0 0
    %736 = vmatpush1.bf16.msra.mxu0 0
    %737 = vmatprep.subr.bf16.mxu0 0
    %738 = vmatpush1.bf16.msra.mxu0 0
    %739 = vmatprep.subr.bf16.mxu0 0
    %740 = vmatpush1.bf16.msra.mxu0 0
    %741 = vmatprep.subr.bf16.mxu0 0
    %742 = vmatpush1.bf16.msra.mxu0 0
    %743 = vmatprep.mubr.bf16.mxu0 0
    %744 = vmatmul.mubr.bf16.gmra.mrb[0].mxu0 %v705
    %v745 = vpop.f32.mrb[0].mxu0
    %v746 = vadd.f32 0.0, %v745
    %v747 = vpop.f32.mrb[0].mxu0
    %v748 = vpop.f32.mrb[0].mxu0
    %v749 = vadd.f32 0.0, %v748
    %v750 = vpop.f32.mrb[0].mxu0
    %751 = vdwg.mxu0
    %v752 = vadd.f32 %v746, 1e-06
    %v753 = vadd.f32 %v749, 1e-06
    %v754 = vrcp.pop %v752
    %v755 = vrcp.pop %v753
    %758 = vrot.lane.b32.xlu0 %v754, 96
    %v759 = vpop.permute.xlu0 %758
    %760 = vrot.lane.b32.xlu0 %v755, 96
    %v761 = vpop.permute.xlu0 %760
    %v764 = vmul.f32 %v746, %v759
    %v765 = vmul.f32 %v749, %v761
    %768 = vrot.lane.b32.xlu0 %v764, 64
    %v769 = vpop.permute.xlu0 %768
    %770 = vrot.lane.b32.xlu0 %v765, 64
    %v771 = vpop.permute.xlu0 %770
    %v774 = vadd.f32 %v465, %v769
    %v775 = vadd.f32 %v470, %v771
    %v776 = vld [vmem:[%s13] sm:$0x1]
    %v778 = vlaneseq
    %v779 = vshrl.u32 %v778, 7
    %v780 = vsub.s32 0, %v779
    %v781 = vrot.slane %v776, %v780
    %782 = vrot.lane.b32.xlu0 %v781, 64
    %v783 = vpop.permute.xlu0 %782
    %v785 = vmul.f32 %v774, %v783
    %v786 = vmul.f32 %v775, %v783
    %v787 = vld [vmem:[%s14] sm:$0x1]
    %v789 = vlaneseq
    %v790 = vshrl.u32 %v789, 7
    %v791 = vsub.s32 0, %v790
    %v792 = vrot.slane %v787, %v791
    %793 = vrot.lane.b32.xlu0 %v792, 64
    %v794 = vpop.permute.xlu0 %793
    %v796 = vadd.f32 %v785, %v794
    %v797 = vadd.f32 %v786, %v794
    %v798 = vmax.f32 %v796, 0.0
    %v799 = vmax.f32 %v797, 0.0
    %802 = vrot.lane.b32.xlu0 %v798, 64
    %v803 = vpop.permute.xlu0 %802
    %804 = vrot.lane.b32.xlu0 %v799, 64
    %v805 = vpop.permute.xlu0 %804
    %v808 = vadd.f32 %v246, %v803
    %v809 = vadd.f32 %v251, %v805
    %v810 = vld [vmem:[%s15] sm:$0x1]
    %v812 = vlaneseq
    %v813 = vshrl.u32 %v812, 7
    %v814 = vsub.s32 0, %v813
    %v815 = vrot.slane %v810, %v814
    %816 = vrot.lane.b32.xlu0 %v815, 32
    %v817 = vpop.permute.xlu0 %816
    %v819 = vmul.f32 %v645, %v817
    %v820 = vmul.f32 %v646, %v817
    %v821 = vmul.f32 %v647, %v817
    %v822 = vld [vmem:[%s16] sm:$0x1]
    %v824 = vlaneseq
    %v825 = vshrl.u32 %v824, 7
    %v826 = vsub.s32 0, %v825
    %v827 = vrot.slane %v822, %v826
    %828 = vrot.lane.b32.xlu0 %v827, 32
    %v829 = vpop.permute.xlu0 %828
    %v831 = vadd.f32 %v819, %v829
    %v832 = vadd.f32 %v820, %v829
    %v833 = vadd.f32 %v821, %v829
    %v834 = vmax.f32 %v831, 0.0
    %v835 = vmax.f32 %v832, 0.0
    %v836 = vmax.f32 %v833, 0.0
    %840 = vrot.lane.b32.xlu0 %v834, 96
    %v841 = vpop.permute.xlu0 %840
    %842 = vrot.lane.b32.xlu0 %v835, 96
    %v843 = vpop.permute.xlu0 %842
    %844 = vrot.lane.b32.xlu0 %v836, 96
    %v845 = vpop.permute.xlu0 %844
    %v849 = vadd.f32 %v341, %v841
    %v850 = vadd.f32 %v346, %v843
    %v851 = vadd.f32 %v351, %v845
    %s852 = scalar_lea.vmem %s11, 64
    %v853 = vld [vmem:[%s852] sm:$0xff]
    %v854 = vld [vmem:[%s852 + $0x8] sm:$0xff]
    %v855 = vld [vmem:[%s852 + $0x10] sm:$0xff]
    %v856 = vld [vmem:[%s852 + $0x18] sm:$0xff]
    %v857 = vld [vmem:[%s852 + $0x20] sm:$0xff]
    %v858 = vld [vmem:[%s852 + $0x28] sm:$0xff]
    %v859 = vld [vmem:[%s852 + $0x30] sm:$0xff]
    %v860 = vld [vmem:[%s852 + $0x38] sm:$0xff]
    %s861 = scalar_lea.vmem [#allocation13], 2
    %v862 = vld [vmem:[%s861] sm:$0x3]
    %v864 = vlaneseq
    %v865 = vshrl.u32 %v864, 7
    %v866 = vsub.s32 0, %v865
    %v867 = vrot.slane %v862, %v866
    %v868 = vlaneseq
    %v869 = vshrl.u32 %v868, 7
    %v870 = vsub.s32 1, %v869
    %v871 = vrot.slane %v862, %v870
    %v875 = vsel %vm382, %v808, 0
    %v878 = vsel %vm382, %v809, 0
    %v881 = vsel %vm382, %v849, 0
    %v884 = vsel %vm382, %v850, 0
    %v887 = vsel %vm382, %v851, 0
    %889 = vmatprep.subr.mxu0 %v854
    %890 = vmatpush1.msra.mxu0 %v853
    %891 = vmatprep.subr.mxu0 %v856
    %892 = vmatpush1.msra.mxu0 %v855
    %893 = vmatprep.subr.mxu0 %v858
    %894 = vmatpush1.msra.mxu0 %v857
    %895 = vmatprep.subr.mxu0 %v860
    %896 = vmatpush1.msra.mxu0 %v859
    %897 = vmatprep.subr.mxu0 0.0
    %898 = vmatpush1.msra.mxu0 0.0
    %899 = vmatprep.subr.mxu0 0.0
    %900 = vmatpush1.msra.mxu0 0.0
    %901 = vmatprep.subr.mxu0 0.0
    %902 = vmatpush1.msra.mxu0 0.0
    %903 = vmatprep.subr.mxu0 0.0
    %904 = vmatpush1.msra.mxu0 0.0
    %905 = vmatprep.subr.mxu0 0.0
    %906 = vmatpush1.msra.mxu0 0.0
    %907 = vmatprep.subr.mxu0 0.0
    %908 = vmatpush1.msra.mxu0 0.0
    %909 = vmatprep.subr.mxu0 0.0
    %910 = vmatpush1.msra.mxu0 0.0
    %911 = vmatprep.subr.mxu0 0.0
    %912 = vmatpush1.msra.mxu0 0.0
    %913 = vmatprep.subr.mxu0 0.0
    %914 = vmatpush1.msra.mxu0 0.0
    %915 = vmatprep.subr.mxu0 0.0
    %916 = vmatpush1.msra.mxu0 0.0
    %917 = vmatprep.subr.mxu0 0.0
    %918 = vmatpush1.msra.mxu0 0.0
    %919 = vmatprep.subr.mxu0 0.0
    %920 = vmatpush1.msra.mxu0 0.0
    %921 = vmatprep.subr.mxu0 0.0
    %922 = vmatpush1.msra.mxu0 0.0
    %923 = vmatprep.subr.mxu0 0.0
    %924 = vmatpush1.msra.mxu0 0.0
    %925 = vmatprep.subr.mxu0 0.0
    %926 = vmatpush1.msra.mxu0 0.0
    %927 = vmatprep.subr.mxu0 0.0
    %928 = vmatpush1.msra.mxu0 0.0
    %929 = vmatprep.subr.mxu0 0.0
    %930 = vmatpush1.msra.mxu0 0.0
    %931 = vmatprep.subr.mxu0 0.0
    %932 = vmatpush1.msra.mxu0 0.0
    %933 = vmatprep.subr.mxu0 0.0
    %934 = vmatpush1.msra.mxu0 0.0
    %935 = vmatprep.subr.mxu0 0.0
    %936 = vmatpush1.msra.mxu0 0.0
    %937 = vmatprep.subr.mxu0 0.0
    %938 = vmatpush1.msra.mxu0 0.0
    %939 = vmatprep.subr.mxu0 0.0
    %940 = vmatpush1.msra.mxu0 0.0
    %941 = vmatprep.subr.mxu0 0.0
    %942 = vmatpush1.msra.mxu0 0.0
    %943 = vmatprep.subr.mxu0 0.0
    %944 = vmatpush1.msra.mxu0 0.0
    %945 = vmatprep.subr.mxu0 0.0
    %946 = vmatpush1.msra.mxu0 0.0
    %947 = vmatprep.subr.mxu0 0.0
    %948 = vmatpush1.msra.mxu0 0.0
    %949 = vmatprep.subr.mxu0 0.0
    %950 = vmatpush1.msra.mxu0 0.0
    %951 = vmatprep.subr.mxu0 0.0
    %952 = vmatpush1.msra.mxu0 0.0
    %953 = vmatprep.mubr.f32.mxu0 0.0
    %954 = vmatmul.mubr.f32.gmra.mrb[0].mxu0 %v875
    %v955 = vpop.f32.mrb[0].mxu0
    %v956 = vadd.f32 %v867, %v955
    %v957 = vpop.f32.mrb[0].mxu0
    %958 = vmatprep.mubr.f32.mxu0 0.0
    %959 = vmatmul.mubr.f32.gmra.mrb[0].mxu0 %v878
    %v960 = vpop.f32.mrb[0].mxu0
    %v961 = vadd.f32 %v867, %v960
    %v962 = vpop.f32.mrb[0].mxu0
    %963 = vmatprep.mubr.f32.mxu0 0.0
    %964 = vmatmul.mubr.f32.gmra.mrb[0].mxu0 %v881
    %v965 = vpop.f32.mrb[0].mxu0
    %v966 = vpop.f32.mrb[0].mxu0
    %v967 = vadd.f32 %v871, %v966
    %968 = vmatprep.mubr.f32.mxu0 0.0
    %969 = vmatmul.mubr.f32.gmra.mrb[0].mxu0 %v884
    %v970 = vpop.f32.mrb[0].mxu0
    %v971 = vpop.f32.mrb[0].mxu0
    %v972 = vadd.f32 %v871, %v971
    %973 = vmatprep.mubr.f32.mxu0 0.0
    %974 = vmatmul.mubr.f32.gmra.mrb[0].mxu0 %v887
    %v975 = vpop.f32.mrb[0].mxu0
    %v976 = vpop.f32.mrb[0].mxu0
    %v977 = vadd.f32 %v871, %v976
    %978 = vdwg.mxu0
    %v979 = vpack.c.bf16 %v961, %v956
    %980 = vmatprep.subr.bf16.mxu0 0
    %981 = vmatpush1.bf16.msra.mxu0 %v979
    %982 = vmatprep.subr.bf16.mxu0 0
    %983 = vmatpush1.bf16.msra.mxu0 0
    %984 = vmatprep.subr.bf16.mxu0 0
    %985 = vmatpush1.bf16.msra.mxu0 0
    %986 = vmatprep.subr.bf16.mxu0 0
    %987 = vmatpush1.bf16.msra.mxu0 0
    %988 = vmatprep.subr.bf16.mxu0 0
    %989 = vmatpush1.bf16.msra.mxu0 0
    %990 = vmatprep.subr.bf16.mxu0 0
    %991 = vmatpush1.bf16.msra.mxu0 0
    %992 = vmatprep.subr.bf16.mxu0 0
    %993 = vmatpush1.bf16.msra.mxu0 0
    %994 = vmatprep.subr.bf16.mxu0 0
    %995 = vmatpush1.bf16.msra.mxu0 0
    %996 = vmatprep.subr.bf16.mxu0 0
    %997 = vmatpush1.bf16.msra.mxu0 0
    %998 = vmatprep.subr.bf16.mxu0 0
    %999 = vmatpush1.bf16.msra.mxu0 0
    %1000 = vmatprep.subr.bf16.mxu0 0
    %1001 = vmatpush1.bf16.msra.mxu0 0
    %1002 = vmatprep.subr.bf16.mxu0 0
    %1003 = vmatpush1.bf16.msra.mxu0 0
    %1004 = vmatprep.subr.bf16.mxu0 0
    %1005 = vmatpush1.bf16.msra.mxu0 0
    %1006 = vmatprep.subr.bf16.mxu0 0
    %1007 = vmatpush1.bf16.msra.mxu0 0
    %1008 = vmatprep.subr.bf16.mxu0 0
    %1009 = vmatpush1.bf16.msra.mxu0 0
    %1010 = vmatprep.subr.bf16.mxu0 0
    %1011 = vmatpush1.bf16.msra.mxu0 0
    %1012 = vmatprep.mubr.bf16.mxu0 0
    %1013 = vmatmul.mubr.bf16.gmra.mrb[0].mxu0 %v499
    %v1014 = vpop.f32.mrb[0].mxu0
    %v1015 = vadd.f32 0.0, %v1014
    %v1016 = vpop.f32.mrb[0].mxu0
    %v1017 = vpop.f32.mrb[0].mxu0
    %v1018 = vadd.f32 0.0, %v1017
    %v1019 = vpop.f32.mrb[0].mxu0
    %1020 = vmatprep.mubr.bf16.mxu0 0
    %1021 = vmatmul.mubr.bf16.gmra.mrb[0].mxu0 %v502
    %v1022 = vpop.f32.mrb[0].mxu0
    %v1023 = vadd.f32 0.0, %v1022
    %v1024 = vpop.f32.mrb[0].mxu0
    %v1025 = vpop.f32.mrb[0].mxu0
    %v1026 = vpop.f32.mrb[0].mxu0
    %1027 = vdwg.mxu0
    %1029 = vrot.lane.b32.xlu0 %v979, 32
    %v1030 = vpop.permute.xlu0 %1029
    %1032 = vmatprep.subr.bf16.mxu0 0
    %1033 = vmatpush1.bf16.msra.mxu0 %v1030
    %1034 = vmatprep.subr.bf16.mxu0 0
    %1035 = vmatpush1.bf16.msra.mxu0 0
    %1036 = vmatprep.subr.bf16.mxu0 0
    %1037 = vmatpush1.bf16.msra.mxu0 0
    %1038 = vmatprep.subr.bf16.mxu0 0
    %1039 = vmatpush1.bf16.msra.mxu0 0
    %1040 = vmatprep.subr.bf16.mxu0 0
    %1041 = vmatpush1.bf16.msra.mxu0 0
    %1042 = vmatprep.subr.bf16.mxu0 0
    %1043 = vmatpush1.bf16.msra.mxu0 0
    %1044 = vmatprep.subr.bf16.mxu0 0
    %1045 = vmatpush1.bf16.msra.mxu0 0
    %1046 = vmatprep.subr.bf16.mxu0 0
    %1047 = vmatpush1.bf16.msra.mxu0 0
    %1048 = vmatprep.subr.bf16.mxu0 0
    %1049 = vmatpush1.bf16.msra.mxu0 0
    %1050 = vmatprep.subr.bf16.mxu0 0
    %1051 = vmatpush1.bf16.msra.mxu0 0
    %1052 = vmatprep.subr.bf16.mxu0 0
    %1053 = vmatpush1.bf16.msra.mxu0 0
    %1054 = vmatprep.subr.bf16.mxu0 0
    %1055 = vmatpush1.bf16.msra.mxu0 0
    %1056 = vmatprep.subr.bf16.mxu0 0
    %1057 = vmatpush1.bf16.msra.mxu0 0
    %1058 = vmatprep.subr.bf16.mxu0 0
    %1059 = vmatpush1.bf16.msra.mxu0 0
    %1060 = vmatprep.subr.bf16.mxu0 0
    %1061 = vmatpush1.bf16.msra.mxu0 0
    %1062 = vmatprep.subr.bf16.mxu0 0
    %1063 = vmatpush1.bf16.msra.mxu0 0
    %1064 = vmatprep.mubr.bf16.mxu0 0
    %1065 = vmatmul.mubr.bf16.gmra.mrb[0].mxu0 %v565
    %v1066 = vpop.f32.mrb[0].mxu0
    %v1067 = vadd.f32 0.0, %v1066
    %v1068 = vpop.f32.mrb[0].mxu0
    %v1069 = vpop.f32.mrb[0].mxu0
    %v1070 = vadd.f32 0.0, %v1069
    %v1071 = vpop.f32.mrb[0].mxu0
    %1072 = vmatprep.mubr.bf16.mxu0 0
    %1073 = vmatmul.mubr.bf16.gmra.mrb[0].mxu0 %v568
    %v1074 = vpop.f32.mrb[0].mxu0
    %v1075 = vadd.f32 0.0, %v1074
    %v1076 = vpop.f32.mrb[0].mxu0
    %v1077 = vpop.f32.mrb[0].mxu0
    %v1078 = vpop.f32.mrb[0].mxu0
    %1079 = vdwg.mxu0
    %1083 = vrot.lane.b32.xlu0 %v1067, 32
    %v1084 = vpop.permute.xlu0 %1083
    %1085 = vrot.lane.b32.xlu0 %v1070, 32
    %v1086 = vpop.permute.xlu0 %1085
    %1087 = vrot.lane.b32.xlu0 %v1075, 32
    %v1088 = vpop.permute.xlu0 %1087
    %v1092 = vadd.f32 %v1015, %v1084
    %v1093 = vadd.f32 %v1018, %v1086
    %v1094 = vadd.f32 %v1023, %v1088
    %1098 = vrot.lane.b32.xlu0 %v967, 32
    %v1099 = vpop.permute.xlu0 %1098
    %1100 = vrot.lane.b32.xlu0 %v972, 32
    %v1101 = vpop.permute.xlu0 %1100
    %1102 = vrot.lane.b32.xlu0 %v977, 32
    %v1103 = vpop.permute.xlu0 %1102
    %v1107 = vadd.f32 %v1092, %v1099
    %v1108 = vadd.f32 %v1093, %v1101
    %v1109 = vadd.f32 %v1094, %v1103
    %v1110 = vxor.u32 %v1107, 2147483648
    %v1111 = vxor.u32 %v1108, 2147483648
    %v1112 = vxor.u32 %v1109, 2147483648
    %v1113 = vmul.f32 %v1110, 1.442695
    %v1114 = vpow.pop %v1113
    %v1115 = vmul.f32 %v1111, 1.442695
    %v1116 = vpow.pop %v1115
    %v1117 = vmul.f32 %v1112, 1.442695
    %v1118 = vpow.pop %v1117
    %v1119 = vadd.f32 %v1114, 1.0
    %v1120 = vadd.f32 %v1116, 1.0
    %v1121 = vadd.f32 %v1118, 1.0
    %v1122 = vrcp.pop %v1119
    %v1123 = vmul.f32 1.0, %v1122
    %v1124 = vrcp.pop %v1120
    %v1125 = vmul.f32 1.0, %v1124
    %v1126 = vrcp.pop %v1121
    %v1127 = vmul.f32 1.0, %v1126
    %1131 = vrot.lane.b32.xlu0 %v1015, 32
    %v1132 = vpop.permute.xlu0 %1131
    %1133 = vrot.lane.b32.xlu0 %v1018, 32
    %v1134 = vpop.permute.xlu0 %1133
    %1135 = vrot.lane.b32.xlu0 %v1023, 32
    %v1136 = vpop.permute.xlu0 %1135
    %v1140 = vmul.f32 %v1123, %v1132
    %v1141 = vmul.f32 %v1125, %v1134
    %v1142 = vmul.f32 %v1127, %v1136
    %1146 = vrot.lane.b32.xlu0 %v1140, 96
    %v1147 = vpop.permute.xlu0 %1146
    %1148 = vrot.lane.b32.xlu0 %v1141, 96
    %v1149 = vpop.permute.xlu0 %1148
    %1150 = vrot.lane.b32.xlu0 %v1142, 96
    %v1151 = vpop.permute.xlu0 %1150
    %v1155 = vsel %vm382, %v1147, %v1123
    %v1156 = vsel %vm382, %v1149, %v1125
    %v1157 = vsel %vm382, %v1151, %v1127
    %v1158 = vpack.c.bf16 %v1156, %v1155
    %v1159 = vpack.c.bf16 %v1157, %v1157
    %v1161 = vsel %vm707, %v1159, 0
    %1163 = vmatprep.subr.bf16.mxu0 0
    %1164 = vmatpush1.bf16.msra.mxu0 %v1158
    %1165 = vmatprep.subr.bf16.mxu0 0
    %1166 = vmatpush1.bf16.msra.mxu0 %v1161
    %1167 = vmatprep.subr.bf16.mxu0 0
    %1168 = vmatpush1.bf16.msra.mxu0 0
    %1169 = vmatprep.subr.bf16.mxu0 0
    %1170 = vmatpush1.bf16.msra.mxu0 0
    %1171 = vmatprep.subr.bf16.mxu0 0
    %1172 = vmatpush1.bf16.msra.mxu0 0
    %1173 = vmatprep.subr.bf16.mxu0 0
    %1174 = vmatpush1.bf16.msra.mxu0 0
    %1175 = vmatprep.subr.bf16.mxu0 0
    %1176 = vmatpush1.bf16.msra.mxu0 0
    %1177 = vmatprep.subr.bf16.mxu0 0
    %1178 = vmatpush1.bf16.msra.mxu0 0
    %1179 = vmatprep.subr.bf16.mxu0 0
    %1180 = vmatpush1.bf16.msra.mxu0 0
    %1181 = vmatprep.subr.bf16.mxu0 0
    %1182 = vmatpush1.bf16.msra.mxu0 0
    %1183 = vmatprep.subr.bf16.mxu0 0
    %1184 = vmatpush1.bf16.msra.mxu0 0
    %1185 = vmatprep.subr.bf16.mxu0 0
    %1186 = vmatpush1.bf16.msra.mxu0 0
    %1187 = vmatprep.subr.bf16.mxu0 0
    %1188 = vmatpush1.bf16.msra.mxu0 0
    %1189 = vmatprep.subr.bf16.mxu0 0
    %1190 = vmatpush1.bf16.msra.mxu0 0
    %1191 = vmatprep.subr.bf16.mxu0 0
    %1192 = vmatpush1.bf16.msra.mxu0 0
    %1193 = vmatprep.subr.bf16.mxu0 0
    %1194 = vmatpush1.bf16.msra.mxu0 0
    %1195 = vmatprep.mubr.bf16.mxu0 0
    %1196 = vmatmul.mubr.bf16.gmra.mrb[0].mxu0 %v705
    %v1197 = vpop.f32.mrb[0].mxu0
    %v1198 = vadd.f32 0.0, %v1197
    %v1199 = vpop.f32.mrb[0].mxu0
    %v1200 = vpop.f32.mrb[0].mxu0
    %v1201 = vadd.f32 0.0, %v1200
    %v1202 = vpop.f32.mrb[0].mxu0
    %1203 = vdwg.mxu0
    %v1204 = vadd.f32 %v1198, 1e-06
    %v1205 = vadd.f32 %v1201, 1e-06
    %v1206 = vrcp.pop %v1204
    %v1207 = vrcp.pop %v1205
    %1210 = vrot.lane.b32.xlu0 %v1206, 96
    %v1211 = vpop.permute.xlu0 %1210
    %1212 = vrot.lane.b32.xlu0 %v1207, 96
    %v1213 = vpop.permute.xlu0 %1212
    %v1216 = vmul.f32 %v1198, %v1211
    %v1217 = vmul.f32 %v1201, %v1213
    %1220 = vrot.lane.b32.xlu0 %v1216, 64
    %v1221 = vpop.permute.xlu0 %1220
    %1222 = vrot.lane.b32.xlu0 %v1217, 64
    %v1223 = vpop.permute.xlu0 %1222
    %v1226 = vadd.f32 %v956, %v1221
    %v1227 = vadd.f32 %v961, %v1223
    %s1228 = scalar_lea.vmem %s13, 1
    %v1229 = vld [vmem:[%s1228] sm:$0x1]
    %v1231 = vlaneseq
    %v1232 = vshrl.u32 %v1231, 7
    %v1233 = vsub.s32 0, %v1232
    %v1234 = vrot.slane %v1229, %v1233
    %1235 = vrot.lane.b32.xlu0 %v1234, 64
    %v1236 = vpop.permute.xlu0 %1235
    %v1238 = vmul.f32 %v1226, %v1236
    %v1239 = vmul.f32 %v1227, %v1236
    %s1240 = scalar_lea.vmem %s14, 1
    %v1241 = vld [vmem:[%s1240] sm:$0x1]
    %v1243 = vlaneseq
    %v1244 = vshrl.u32 %v1243, 7
    %v1245 = vsub.s32 0, %v1244
    %v1246 = vrot.slane %v1241, %v1245
    %1247 = vrot.lane.b32.xlu0 %v1246, 64
    %v1248 = vpop.permute.xlu0 %1247
    %v1250 = vadd.f32 %v1238, %v1248
    %v1251 = vadd.f32 %v1239, %v1248
    %v1252 = vmax.f32 %v1250, 0.0
    %v1253 = vmax.f32 %v1251, 0.0
    %1256 = vrot.lane.b32.xlu0 %v1252, 64
    %v1257 = vpop.permute.xlu0 %1256
    %1258 = vrot.lane.b32.xlu0 %v1253, 64
    %v1259 = vpop.permute.xlu0 %1258
    %v1262 = vadd.f32 %v808, %v1257
    %v1263 = vadd.f32 %v809, %v1259
    %s1264 = scalar_lea.vmem %s15, 1
    %v1265 = vld [vmem:[%s1264] sm:$0x1]
    %v1267 = vlaneseq
    %v1268 = vshrl.u32 %v1267, 7
    %v1269 = vsub.s32 0, %v1268
    %v1270 = vrot.slane %v1265, %v1269
    %1271 = vrot.lane.b32.xlu0 %v1270, 32
    %v1272 = vpop.permute.xlu0 %1271
    %v1274 = vmul.f32 %v1107, %v1272
    %v1275 = vmul.f32 %v1108, %v1272
    %v1276 = vmul.f32 %v1109, %v1272
    %s1277 = scalar_lea.vmem %s16, 1
    %v1278 = vld [vmem:[%s1277] sm:$0x1]
    %v1280 = vlaneseq
    %v1281 = vshrl.u32 %v1280, 7
    %v1282 = vsub.s32 0, %v1281
    %v1283 = vrot.slane %v1278, %v1282
    %1284 = vrot.lane.b32.xlu0 %v1283, 32
    %v1285 = vpop.permute.xlu0 %1284
    %v1287 = vadd.f32 %v1274, %v1285
    %v1288 = vadd.f32 %v1275, %v1285
    %v1289 = vadd.f32 %v1276, %v1285
    %v1290 = vmax.f32 %v1287, 0.0
    %v1291 = vmax.f32 %v1288, 0.0
    %v1292 = vmax.f32 %v1289, 0.0
    %1296 = vrot.lane.b32.xlu0 %v1290, 96
    %v1297 = vpop.permute.xlu0 %1296
    %1298 = vrot.lane.b32.xlu0 %v1291, 96
    %v1299 = vpop.permute.xlu0 %1298
    %1300 = vrot.lane.b32.xlu0 %v1292, 96
    %v1301 = vpop.permute.xlu0 %1300
    %v1305 = vadd.f32 %v849, %v1297
    %v1306 = vadd.f32 %v850, %v1299
    %v1307 = vadd.f32 %v851, %v1301
    %s1308 = scalar_lea.vmem %s11, 128
    %v1309 = vld [vmem:[%s1308] sm:$0xff]
    %v1310 = vld [vmem:[%s1308 + $0x8] sm:$0xff]
    %v1311 = vld [vmem:[%s1308 + $0x10] sm:$0xff]
    %v1312 = vld [vmem:[%s1308 + $0x18] sm:$0xff]
    %v1313 = vld [vmem:[%s1308 + $0x20] sm:$0xff]
    %v1314 = vld [vmem:[%s1308 + $0x28] sm:$0xff]
    %v1315 = vld [vmem:[%s1308 + $0x30] sm:$0xff]
    %v1316 = vld [vmem:[%s1308 + $0x38] sm:$0xff]
    %s1317 = scalar_lea.vmem [#allocation13], 4
    %v1318 = vld [vmem:[%s1317] sm:$0x3]
    %v1320 = vlaneseq
    %v1321 = vshrl.u32 %v1320, 7
    %v1322 = vsub.s32 0, %v1321
    %v1323 = vrot.slane %v1318, %v1322
    %v1324 = vlaneseq
    %v1325 = vshrl.u32 %v1324, 7
    %v1326 = vsub.s32 1, %v1325
    %v1327 = vrot.slane %v1318, %v1326
    %v1331 = vsel %vm382, %v1262, 0
    %v1334 = vsel %vm382, %v1263, 0
    %v1337 = vsel %vm382, %v1305, 0
    %v1340 = vsel %vm382, %v1306, 0
    %v1343 = vsel %vm382, %v1307, 0
    %1345 = vmatprep.subr.mxu0 %v1310
    %1346 = vmatpush1.msra.mxu0 %v1309
    %1347 = vmatprep.subr.mxu0 %v1312
    %1348 = vmatpush1.msra.mxu0 %v1311
    %1349 = vmatprep.subr.mxu0 %v1314
    %1350 = vmatpush1.msra.mxu0 %v1313
    %1351 = vmatprep.subr.mxu0 %v1316
    %1352 = vmatpush1.msra.mxu0 %v1315
    %1353 = vmatprep.subr.mxu0 0.0
    %1354 = vmatpush1.msra.mxu0 0.0
    %1355 = vmatprep.subr.mxu0 0.0
    %1356 = vmatpush1.msra.mxu0 0.0
    %1357 = vmatprep.subr.mxu0 0.0
    %1358 = vmatpush1.msra.mxu0 0.0
    %1359 = vmatprep.subr.mxu0 0.0
    %1360 = vmatpush1.msra.mxu0 0.0
    %1361 = vmatprep.subr.mxu0 0.0
    %1362 = vmatpush1.msra.mxu0 0.0
    %1363 = vmatprep.subr.mxu0 0.0
    %1364 = vmatpush1.msra.mxu0 0.0
    %1365 = vmatprep.subr.mxu0 0.0
    %1366 = vmatpush1.msra.mxu0 0.0
    %1367 = vmatprep.subr.mxu0 0.0
    %1368 = vmatpush1.msra.mxu0 0.0
    %1369 = vmatprep.subr.mxu0 0.0
    %1370 = vmatpush1.msra.mxu0 0.0
    %1371 = vmatprep.subr.mxu0 0.0
    %1372 = vmatpush1.msra.mxu0 0.0
    %1373 = vmatprep.subr.mxu0 0.0
    %1374 = vmatpush1.msra.mxu0 0.0
    %1375 = vmatprep.subr.mxu0 0.0
    %1376 = vmatpush1.msra.mxu0 0.0
    %1377 = vmatprep.subr.mxu0 0.0
    %1378 = vmatpush1.msra.mxu0 0.0
    %1379 = vmatprep.subr.mxu0 0.0
    %1380 = vmatpush1.msra.mxu0 0.0
    %1381 = vmatprep.subr.mxu0 0.0
    %1382 = vmatpush1.msra.mxu0 0.0
    %1383 = vmatprep.subr.mxu0 0.0
    %1384 = vmatpush1.msra.mxu0 0.0
    %1385 = vmatprep.subr.mxu0 0.0
    %1386 = vmatpush1.msra.mxu0 0.0
    %1387 = vmatprep.subr.mxu0 0.0
    %1388 = vmatpush1.msra.mxu0 0.0
    %1389 = vmatprep.subr.mxu0 0.0
    %1390 = vmatpush1.msra.mxu0 0.0
    %1391 = vmatprep.subr.mxu0 0.0
    %1392 = vmatpush1.msra.mxu0 0.0
    %1393 = vmatprep.subr.mxu0 0.0
    %1394 = vmatpush1.msra.mxu0 0.0
    %1395 = vmatprep.subr.mxu0 0.0
    %1396 = vmatpush1.msra.mxu0 0.0
    %1397 = vmatprep.subr.mxu0 0.0
    %1398 = vmatpush1.msra.mxu0 0.0
    %1399 = vmatprep.subr.mxu0 0.0
    %1400 = vmatpush1.msra.mxu0 0.0
    %1401 = vmatprep.subr.mxu0 0.0
    %1402 = vmatpush1.msra.mxu0 0.0
    %1403 = vmatprep.subr.mxu0 0.0
    %1404 = vmatpush1.msra.mxu0 0.0
    %1405 = vmatprep.subr.mxu0 0.0
    %1406 = vmatpush1.msra.mxu0 0.0
    %1407 = vmatprep.subr.mxu0 0.0
    %1408 = vmatpush1.msra.mxu0 0.0
    %1409 = vmatprep.mubr.f32.mxu0 0.0
    %1410 = vmatmul.mubr.f32.gmra.mrb[0].mxu0 %v1331
    %v1411 = vpop.f32.mrb[0].mxu0
    %v1412 = vadd.f32 %v1323, %v1411
    %v1413 = vpop.f32.mrb[0].mxu0
    %1414 = vmatprep.mubr.f32.mxu0 0.0
    %1415 = vmatmul.mubr.f32.gmra.mrb[0].mxu0 %v1334
    %v1416 = vpop.f32.mrb[0].mxu0
    %v1417 = vadd.f32 %v1323, %v1416
    %v1418 = vpop.f32.mrb[0].mxu0
    %1419 = vmatprep.mubr.f32.mxu0 0.0
    %1420 = vmatmul.mubr.f32.gmra.mrb[0].mxu0 %v1337
    %v1421 = vpop.f32.mrb[0].mxu0
    %v1422 = vpop.f32.mrb[0].mxu0
    %v1423 = vadd.f32 %v1327, %v1422
    %1424 = vmatprep.mubr.f32.mxu0 0.0
    %1425 = vmatmul.mubr.f32.gmra.mrb[0].mxu0 %v1340
    %v1426 = vpop.f32.mrb[0].mxu0
    %v1427 = vpop.f32.mrb[0].mxu0
    %v1428 = vadd.f32 %v1327, %v1427
    %1429 = vmatprep.mubr.f32.mxu0 0.0
    %1430 = vmatmul.mubr.f32.gmra.mrb[0].mxu0 %v1343
    %v1431 = vpop.f32.mrb[0].mxu0
    %v1432 = vpop.f32.mrb[0].mxu0
    %v1433 = vadd.f32 %v1327, %v1432
    %1434 = vdwg.mxu0
    %v1435 = vpack.c.bf16 %v1417, %v1412
    %1436 = vmatprep.subr.bf16.mxu0 0
    %1437 = vmatpush1.bf16.msra.mxu0 %v1435
    %1438 = vmatprep.subr.bf16.mxu0 0
    %1439 = vmatpush1.bf16.msra.mxu0 0
    %1440 = vmatprep.subr.bf16.mxu0 0
    %1441 = vmatpush1.bf16.msra.mxu0 0
    %1442 = vmatprep.subr.bf16.mxu0 0
    %1443 = vmatpush1.bf16.msra.mxu0 0
    %1444 = vmatprep.subr.bf16.mxu0 0
    %1445 = vmatpush1.bf16.msra.mxu0 0
    %1446 = vmatprep.subr.bf16.mxu0 0
    %1447 = vmatpush1.bf16.msra.mxu0 0
    %1448 = vmatprep.subr.bf16.mxu0 0
    %1449 = vmatpush1.bf16.msra.mxu0 0
    %1450 = vmatprep.subr.bf16.mxu0 0
    %1451 = vmatpush1.bf16.msra.mxu0 0
    %1452 = vmatprep.subr.bf16.mxu0 0
    %1453 = vmatpush1.bf16.msra.mxu0 0
    %1454 = vmatprep.subr.bf16.mxu0 0
    %1455 = vmatpush1.bf16.msra.mxu0 0
    %1456 = vmatprep.subr.bf16.mxu0 0
    %1457 = vmatpush1.bf16.msra.mxu0 0
    %1458 = vmatprep.subr.bf16.mxu0 0
    %1459 = vmatpush1.bf16.msra.mxu0 0
    %1460 = vmatprep.subr.bf16.mxu0 0
    %1461 = vmatpush1.bf16.msra.mxu0 0
    %1462 = vmatprep.subr.bf16.mxu0 0
    %1463 = vmatpush1.bf16.msra.mxu0 0
    %1464 = vmatprep.subr.bf16.mxu0 0
    %1465 = vmatpush1.bf16.msra.mxu0 0
    %1466 = vmatprep.subr.bf16.mxu0 0
    %1467 = vmatpush1.bf16.msra.mxu0 0
    %1468 = vmatprep.mubr.bf16.mxu0 0
    %1469 = vmatmul.mubr.bf16.gmra.mrb[0].mxu0 %v499
    %v1470 = vpop.f32.mrb[0].mxu0
    %v1471 = vadd.f32 0.0, %v1470
    %v1472 = vpop.f32.mrb[0].mxu0
    %v1473 = vpop.f32.mrb[0].mxu0
    %v1474 = vadd.f32 0.0, %v1473
    %v1475 = vpop.f32.mrb[0].mxu0
    %1476 = vmatprep.mubr.bf16.mxu0 0
    %1477 = vmatmul.mubr.bf16.gmra.mrb[0].mxu0 %v502
    %v1478 = vpop.f32.mrb[0].mxu0
    %v1479 = vadd.f32 0.0, %v1478
    %v1480 = vpop.f32.mrb[0].mxu0
    %v1481 = vpop.f32.mrb[0].mxu0
    %v1482 = vpop.f32.mrb[0].mxu0
    %1483 = vdwg.mxu0
    %1485 = vrot.lane.b32.xlu0 %v1435, 32
    %v1486 = vpop.permute.xlu0 %1485
    %1488 = vmatprep.subr.bf16.mxu0 0
    %1489 = vmatpush1.bf16.msra.mxu0 %v1486
    %1490 = vmatprep.subr.bf16.mxu0 0
    %1491 = vmatpush1.bf16.msra.mxu0 0
    %1492 = vmatprep.subr.bf16.mxu0 0
    %1493 = vmatpush1.bf16.msra.mxu0 0
    %1494 = vmatprep.subr.bf16.mxu0 0
    %1495 = vmatpush1.bf16.msra.mxu0 0
    %1496 = vmatprep.subr.bf16.mxu0 0
    %1497 = vmatpush1.bf16.msra.mxu0 0
    %1498 = vmatprep.subr.bf16.mxu0 0
    %1499 = vmatpush1.bf16.msra.mxu0 0
    %1500 = vmatprep.subr.bf16.mxu0 0
    %1501 = vmatpush1.bf16.msra.mxu0 0
    %1502 = vmatprep.subr.bf16.mxu0 0
    %1503 = vmatpush1.bf16.msra.mxu0 0
    %1504 = vmatprep.subr.bf16.mxu0 0
    %1505 = vmatpush1.bf16.msra.mxu0 0
    %1506 = vmatprep.subr.bf16.mxu0 0
    %1507 = vmatpush1.bf16.msra.mxu0 0
    %1508 = vmatprep.subr.bf16.mxu0 0
    %1509 = vmatpush1.bf16.msra.mxu0 0
    %1510 = vmatprep.subr.bf16.mxu0 0
    %1511 = vmatpush1.bf16.msra.mxu0 0
    %1512 = vmatprep.subr.bf16.mxu0 0
    %1513 = vmatpush1.bf16.msra.mxu0 0
    %1514 = vmatprep.subr.bf16.mxu0 0
    %1515 = vmatpush1.bf16.msra.mxu0 0
    %1516 = vmatprep.subr.bf16.mxu0 0
    %1517 = vmatpush1.bf16.msra.mxu0 0
    %1518 = vmatprep.subr.bf16.mxu0 0
    %1519 = vmatpush1.bf16.msra.mxu0 0
    %1520 = vmatprep.mubr.bf16.mxu0 0
    %1521 = vmatmul.mubr.bf16.gmra.mrb[0].mxu0 %v565
    %v1522 = vpop.f32.mrb[0].mxu0
    %v1523 = vadd.f32 0.0, %v1522
    %v1524 = vpop.f32.mrb[0].mxu0
    %v1525 = vpop.f32.mrb[0].mxu0
    %v1526 = vadd.f32 0.0, %v1525
    %v1527 = vpop.f32.mrb[0].mxu0
    %1528 = vmatprep.mubr.bf16.mxu0 0
    %1529 = vmatmul.mubr.bf16.gmra.mrb[0].mxu0 %v568
    %v1530 = vpop.f32.mrb[0].mxu0
    %v1531 = vadd.f32 0.0, %v1530
    %v1532 = vpop.f32.mrb[0].mxu0
    %v1533 = vpop.f32.mrb[0].mxu0
    %v1534 = vpop.f32.mrb[0].mxu0
    %1535 = vdwg.mxu0
    %1539 = vrot.lane.b32.xlu0 %v1523, 32
    %v1540 = vpop.permute.xlu0 %1539
    %1541 = vrot.lane.b32.xlu0 %v1526, 32
    %v1542 = vpop.permute.xlu0 %1541
    %1543 = vrot.lane.b32.xlu0 %v1531, 32
    %v1544 = vpop.permute.xlu0 %1543
    %v1548 = vadd.f32 %v1471, %v1540
    %v1549 = vadd.f32 %v1474, %v1542
    %v1550 = vadd.f32 %v1479, %v1544
    %1554 = vrot.lane.b32.xlu0 %v1423, 32
    %v1555 = vpop.permute.xlu0 %1554
    %1556 = vrot.lane.b32.xlu0 %v1428, 32
    %v1557 = vpop.permute.xlu0 %1556
    %1558 = vrot.lane.b32.xlu0 %v1433, 32
    %v1559 = vpop.permute.xlu0 %1558
    %v1563 = vadd.f32 %v1548, %v1555
    %v1564 = vadd.f32 %v1549, %v1557
    %v1565 = vadd.f32 %v1550, %v1559
    %v1566 = vxor.u32 %v1563, 2147483648
    %v1567 = vxor.u32 %v1564, 2147483648
    %v1568 = vxor.u32 %v1565, 2147483648
    %v1569 = vmul.f32 %v1566, 1.442695
    %v1570 = vpow.pop %v1569
    %v1571 = vmul.f32 %v1567, 1.442695
    %v1572 = vpow.pop %v1571
    %v1573 = vmul.f32 %v1568, 1.442695
    %v1574 = vpow.pop %v1573
    %v1575 = vadd.f32 %v1570, 1.0
    %v1576 = vadd.f32 %v1572, 1.0
    %v1577 = vadd.f32 %v1574, 1.0
    %v1578 = vrcp.pop %v1575
    %v1579 = vmul.f32 1.0, %v1578
    %v1580 = vrcp.pop %v1576
    %v1581 = vmul.f32 1.0, %v1580
    %v1582 = vrcp.pop %v1577
    %v1583 = vmul.f32 1.0, %v1582
    %1587 = vrot.lane.b32.xlu0 %v1471, 32
    %v1588 = vpop.permute.xlu0 %1587
    %1589 = vrot.lane.b32.xlu0 %v1474, 32
    %v1590 = vpop.permute.xlu0 %1589
    %1591 = vrot.lane.b32.xlu0 %v1479, 32
    %v1592 = vpop.permute.xlu0 %1591
    %v1596 = vmul.f32 %v1579, %v1588
    %v1597 = vmul.f32 %v1581, %v1590
    %v1598 = vmul.f32 %v1583, %v1592
    %1602 = vrot.lane.b32.xlu0 %v1596, 96
    %v1603 = vpop.permute.xlu0 %1602
    %1604 = vrot.lane.b32.xlu0 %v1597, 96
    %v1605 = vpop.permute.xlu0 %1604
    %1606 = vrot.lane.b32.xlu0 %v1598, 96
    %v1607 = vpop.permute.xlu0 %1606
    %v1611 = vsel %vm382, %v1603, %v1579
    %v1612 = vsel %vm382, %v1605, %v1581
    %v1613 = vsel %vm382, %v1607, %v1583
    %v1614 = vpack.c.bf16 %v1612, %v1611
    %v1615 = vpack.c.bf16 %v1613, %v1613
    %v1617 = vsel %vm707, %v1615, 0
    %1619 = vmatprep.subr.bf16.mxu0 0
    %1620 = vmatpush1.bf16.msra.mxu0 %v1614
    %1621 = vmatprep.subr.bf16.mxu0 0
    %1622 = vmatpush1.bf16.msra.mxu0 %v1617
    %1623 = vmatprep.subr.bf16.mxu0 0
    %1624 = vmatpush1.bf16.msra.mxu0 0
    %1625 = vmatprep.subr.bf16.mxu0 0
    %1626 = vmatpush1.bf16.msra.mxu0 0
    %1627 = vmatprep.subr.bf16.mxu0 0
    %1628 = vmatpush1.bf16.msra.mxu0 0
    %1629 = vmatprep.subr.bf16.mxu0 0
    %1630 = vmatpush1.bf16.msra.mxu0 0
    %1631 = vmatprep.subr.bf16.mxu0 0
    %1632 = vmatpush1.bf16.msra.mxu0 0
    %1633 = vmatprep.subr.bf16.mxu0 0
    %1634 = vmatpush1.bf16.msra.mxu0 0
    %1635 = vmatprep.subr.bf16.mxu0 0
    %1636 = vmatpush1.bf16.msra.mxu0 0
    %1637 = vmatprep.subr.bf16.mxu0 0
    %1638 = vmatpush1.bf16.msra.mxu0 0
    %1639 = vmatprep.subr.bf16.mxu0 0
    %1640 = vmatpush1.bf16.msra.mxu0 0
    %1641 = vmatprep.subr.bf16.mxu0 0
    %1642 = vmatpush1.bf16.msra.mxu0 0
    %1643 = vmatprep.subr.bf16.mxu0 0
    %1644 = vmatpush1.bf16.msra.mxu0 0
    %1645 = vmatprep.subr.bf16.mxu0 0
    %1646 = vmatpush1.bf16.msra.mxu0 0
    %1647 = vmatprep.subr.bf16.mxu0 0
    %1648 = vmatpush1.bf16.msra.mxu0 0
    %1649 = vmatprep.subr.bf16.mxu0 0
    %1650 = vmatpush1.bf16.msra.mxu0 0
    %1651 = vmatprep.mubr.bf16.mxu0 0
    %1652 = vmatmul.mubr.bf16.gmra.mrb[0].mxu0 %v705
    %v1653 = vpop.f32.mrb[0].mxu0
    %v1654 = vadd.f32 0.0, %v1653
    %v1655 = vpop.f32.mrb[0].mxu0
    %v1656 = vpop.f32.mrb[0].mxu0
    %v1657 = vadd.f32 0.0, %v1656
    %v1658 = vpop.f32.mrb[0].mxu0
    %1659 = vdwg.mxu0
    %v1660 = vadd.f32 %v1654, 1e-06
    %v1661 = vadd.f32 %v1657, 1e-06
    %v1662 = vrcp.pop %v1660
    %v1663 = vrcp.pop %v1661
    %1666 = vrot.lane.b32.xlu0 %v1662, 96
    %v1667 = vpop.permute.xlu0 %1666
    %1668 = vrot.lane.b32.xlu0 %v1663, 96
    %v1669 = vpop.permute.xlu0 %1668
    %v1672 = vmul.f32 %v1654, %v1667
    %v1673 = vmul.f32 %v1657, %v1669
    %1676 = vrot.lane.b32.xlu0 %v1672, 64
    %v1677 = vpop.permute.xlu0 %1676
    %1678 = vrot.lane.b32.xlu0 %v1673, 64
    %v1679 = vpop.permute.xlu0 %1678
    %v1682 = vadd.f32 %v1412, %v1677
    %v1683 = vadd.f32 %v1417, %v1679
    %s1684 = scalar_lea.vmem %s13, 2
    %v1685 = vld [vmem:[%s1684] sm:$0x1]
    %v1687 = vlaneseq
    %v1688 = vshrl.u32 %v1687, 7
    %v1689 = vsub.s32 0, %v1688
    %v1690 = vrot.slane %v1685, %v1689
    %1691 = vrot.lane.b32.xlu0 %v1690, 64
    %v1692 = vpop.permute.xlu0 %1691
    %v1694 = vmul.f32 %v1682, %v1692
    %v1695 = vmul.f32 %v1683, %v1692
    %s1696 = scalar_lea.vmem %s14, 2
    %v1697 = vld [vmem:[%s1696] sm:$0x1]
    %v1699 = vlaneseq
    %v1700 = vshrl.u32 %v1699, 7
    %v1701 = vsub.s32 0, %v1700
    %v1702 = vrot.slane %v1697, %v1701
    %1703 = vrot.lane.b32.xlu0 %v1702, 64
    %v1704 = vpop.permute.xlu0 %1703
    %v1706 = vadd.f32 %v1694, %v1704
    %v1707 = vadd.f32 %v1695, %v1704
    %v1708 = vmax.f32 %v1706, 0.0
    %v1709 = vmax.f32 %v1707, 0.0
    %1712 = vrot.lane.b32.xlu0 %v1708, 64
    %v1713 = vpop.permute.xlu0 %1712
    %1714 = vrot.lane.b32.xlu0 %v1709, 64
    %v1715 = vpop.permute.xlu0 %1714
    %v1718 = vadd.f32 %v1262, %v1713
    %v1719 = vadd.f32 %v1263, %v1715
    %s1720 = scalar_lea.vmem %s15, 2
    %v1721 = vld [vmem:[%s1720] sm:$0x1]
    %v1723 = vlaneseq
    %v1724 = vshrl.u32 %v1723, 7
    %v1725 = vsub.s32 0, %v1724
    %v1726 = vrot.slane %v1721, %v1725
    %1727 = vrot.lane.b32.xlu0 %v1726, 32
    %v1728 = vpop.permute.xlu0 %1727
    %v1730 = vmul.f32 %v1563, %v1728
    %v1731 = vmul.f32 %v1564, %v1728
    %v1732 = vmul.f32 %v1565, %v1728
    %s1733 = scalar_lea.vmem %s16, 2
    %v1734 = vld [vmem:[%s1733] sm:$0x1]
    %v1736 = vlaneseq
    %v1737 = vshrl.u32 %v1736, 7
    %v1738 = vsub.s32 0, %v1737
    %v1739 = vrot.slane %v1734, %v1738
    %1740 = vrot.lane.b32.xlu0 %v1739, 32
    %v1741 = vpop.permute.xlu0 %1740
    %v1743 = vadd.f32 %v1730, %v1741
    %v1744 = vadd.f32 %v1731, %v1741
    %v1745 = vadd.f32 %v1732, %v1741
    %v1746 = vmax.f32 %v1743, 0.0
    %v1747 = vmax.f32 %v1744, 0.0
    %v1748 = vmax.f32 %v1745, 0.0
    %1752 = vrot.lane.b32.xlu0 %v1746, 96
    %v1753 = vpop.permute.xlu0 %1752
    %1754 = vrot.lane.b32.xlu0 %v1747, 96
    %v1755 = vpop.permute.xlu0 %1754
    %1756 = vrot.lane.b32.xlu0 %v1748, 96
    %v1757 = vpop.permute.xlu0 %1756
    %v1761 = vadd.f32 %v1305, %v1753
    %v1762 = vadd.f32 %v1306, %v1755
    %v1763 = vadd.f32 %v1307, %v1757
    %s1764 = scalar_lea.vmem %s11, 192
    %v1765 = vld [vmem:[%s1764] sm:$0xff]
    %v1766 = vld [vmem:[%s1764 + $0x8] sm:$0xff]
    %v1767 = vld [vmem:[%s1764 + $0x10] sm:$0xff]
    %v1768 = vld [vmem:[%s1764 + $0x18] sm:$0xff]
    %v1769 = vld [vmem:[%s1764 + $0x20] sm:$0xff]
    %v1770 = vld [vmem:[%s1764 + $0x28] sm:$0xff]
    %v1771 = vld [vmem:[%s1764 + $0x30] sm:$0xff]
    %v1772 = vld [vmem:[%s1764 + $0x38] sm:$0xff]
    %s1773 = scalar_lea.vmem [#allocation13], 6
    %v1774 = vld [vmem:[%s1773] sm:$0x3]
    %v1776 = vlaneseq
    %v1777 = vshrl.u32 %v1776, 7
    %v1778 = vsub.s32 0, %v1777
    %v1779 = vrot.slane %v1774, %v1778
    %v1780 = vlaneseq
    %v1781 = vshrl.u32 %v1780, 7
    %v1782 = vsub.s32 1, %v1781
    %v1783 = vrot.slane %v1774, %v1782
    %v1787 = vsel %vm382, %v1718, 0
    %v1790 = vsel %vm382, %v1719, 0
    %v1793 = vsel %vm382, %v1761, 0
    %v1796 = vsel %vm382, %v1762, 0
    %v1799 = vsel %vm382, %v1763, 0
    %1801 = vmatprep.subr.mxu0 %v1766
    %1802 = vmatpush1.msra.mxu0 %v1765
    %1803 = vmatprep.subr.mxu0 %v1768
    %1804 = vmatpush1.msra.mxu0 %v1767
    %1805 = vmatprep.subr.mxu0 %v1770
    %1806 = vmatpush1.msra.mxu0 %v1769
    %1807 = vmatprep.subr.mxu0 %v1772
    %1808 = vmatpush1.msra.mxu0 %v1771
    %1809 = vmatprep.subr.mxu0 0.0
    %1810 = vmatpush1.msra.mxu0 0.0
    %1811 = vmatprep.subr.mxu0 0.0
    %1812 = vmatpush1.msra.mxu0 0.0
    %1813 = vmatprep.subr.mxu0 0.0
    %1814 = vmatpush1.msra.mxu0 0.0
    %1815 = vmatprep.subr.mxu0 0.0
    %1816 = vmatpush1.msra.mxu0 0.0
    %1817 = vmatprep.subr.mxu0 0.0
    %1818 = vmatpush1.msra.mxu0 0.0
    %1819 = vmatprep.subr.mxu0 0.0
    %1820 = vmatpush1.msra.mxu0 0.0
    %1821 = vmatprep.subr.mxu0 0.0
    %1822 = vmatpush1.msra.mxu0 0.0
    %1823 = vmatprep.subr.mxu0 0.0
    %1824 = vmatpush1.msra.mxu0 0.0
    %1825 = vmatprep.subr.mxu0 0.0
    %1826 = vmatpush1.msra.mxu0 0.0
    %1827 = vmatprep.subr.mxu0 0.0
    %1828 = vmatpush1.msra.mxu0 0.0
    %1829 = vmatprep.subr.mxu0 0.0
    %1830 = vmatpush1.msra.mxu0 0.0
    %1831 = vmatprep.subr.mxu0 0.0
    %1832 = vmatpush1.msra.mxu0 0.0
    %1833 = vmatprep.subr.mxu0 0.0
    %1834 = vmatpush1.msra.mxu0 0.0
    %1835 = vmatprep.subr.mxu0 0.0
    %1836 = vmatpush1.msra.mxu0 0.0
    %1837 = vmatprep.subr.mxu0 0.0
    %1838 = vmatpush1.msra.mxu0 0.0
    %1839 = vmatprep.subr.mxu0 0.0
    %1840 = vmatpush1.msra.mxu0 0.0
    %1841 = vmatprep.subr.mxu0 0.0
    %1842 = vmatpush1.msra.mxu0 0.0
    %1843 = vmatprep.subr.mxu0 0.0
    %1844 = vmatpush1.msra.mxu0 0.0
    %1845 = vmatprep.subr.mxu0 0.0
    %1846 = vmatpush1.msra.mxu0 0.0
    %1847 = vmatprep.subr.mxu0 0.0
    %1848 = vmatpush1.msra.mxu0 0.0
    %1849 = vmatprep.subr.mxu0 0.0
    %1850 = vmatpush1.msra.mxu0 0.0
    %1851 = vmatprep.subr.mxu0 0.0
    %1852 = vmatpush1.msra.mxu0 0.0
    %1853 = vmatprep.subr.mxu0 0.0
    %1854 = vmatpush1.msra.mxu0 0.0
    %1855 = vmatprep.subr.mxu0 0.0
    %1856 = vmatpush1.msra.mxu0 0.0
    %1857 = vmatprep.subr.mxu0 0.0
    %1858 = vmatpush1.msra.mxu0 0.0
    %1859 = vmatprep.subr.mxu0 0.0
    %1860 = vmatpush1.msra.mxu0 0.0
    %1861 = vmatprep.subr.mxu0 0.0
    %1862 = vmatpush1.msra.mxu0 0.0
    %1863 = vmatprep.subr.mxu0 0.0
    %1864 = vmatpush1.msra.mxu0 0.0
    %1865 = vmatprep.mubr.f32.mxu0 0.0
    %1866 = vmatmul.mubr.f32.gmra.mrb[0].mxu0 %v1787
    %v1867 = vpop.f32.mrb[0].mxu0
    %v1868 = vadd.f32 %v1779, %v1867
    %v1869 = vpop.f32.mrb[0].mxu0
    %1870 = vmatprep.mubr.f32.mxu0 0.0
    %1871 = vmatmul.mubr.f32.gmra.mrb[0].mxu0 %v1790
    %v1872 = vpop.f32.mrb[0].mxu0
    %v1873 = vadd.f32 %v1779, %v1872
    %v1874 = vpop.f32.mrb[0].mxu0
    %1875 = vmatprep.mubr.f32.mxu0 0.0
    %1876 = vmatmul.mubr.f32.gmra.mrb[0].mxu0 %v1793
    %v1877 = vpop.f32.mrb[0].mxu0
    %v1878 = vpop.f32.mrb[0].mxu0
    %v1879 = vadd.f32 %v1783, %v1878
    %1880 = vmatprep.mubr.f32.mxu0 0.0
    %1881 = vmatmul.mubr.f32.gmra.mrb[0].mxu0 %v1796
    %v1882 = vpop.f32.mrb[0].mxu0
    %v1883 = vpop.f32.mrb[0].mxu0
    %v1884 = vadd.f32 %v1783, %v1883
    %1885 = vmatprep.mubr.f32.mxu0 0.0
    %1886 = vmatmul.mubr.f32.gmra.mrb[0].mxu0 %v1799
    %v1887 = vpop.f32.mrb[0].mxu0
    %v1888 = vpop.f32.mrb[0].mxu0
    %v1889 = vadd.f32 %v1783, %v1888
    %1890 = vdwg.mxu0
    %v1891 = vpack.c.bf16 %v1873, %v1868
    %1892 = vmatprep.subr.bf16.mxu0 0
    %1893 = vmatpush1.bf16.msra.mxu0 %v1891
    %1894 = vmatprep.subr.bf16.mxu0 0
    %1895 = vmatpush1.bf16.msra.mxu0 0
    %1896 = vmatprep.subr.bf16.mxu0 0
    %1897 = vmatpush1.bf16.msra.mxu0 0
    %1898 = vmatprep.subr.bf16.mxu0 0
    %1899 = vmatpush1.bf16.msra.mxu0 0
    %1900 = vmatprep.subr.bf16.mxu0 0
    %1901 = vmatpush1.bf16.msra.mxu0 0
    %1902 = vmatprep.subr.bf16.mxu0 0
    %1903 = vmatpush1.bf16.msra.mxu0 0
    %1904 = vmatprep.subr.bf16.mxu0 0
    %1905 = vmatpush1.bf16.msra.mxu0 0
    %1906 = vmatprep.subr.bf16.mxu0 0
    %1907 = vmatpush1.bf16.msra.mxu0 0
    %1908 = vmatprep.subr.bf16.mxu0 0
    %1909 = vmatpush1.bf16.msra.mxu0 0
    %1910 = vmatprep.subr.bf16.mxu0 0
    %1911 = vmatpush1.bf16.msra.mxu0 0
    %1912 = vmatprep.subr.bf16.mxu0 0
    %1913 = vmatpush1.bf16.msra.mxu0 0
    %1914 = vmatprep.subr.bf16.mxu0 0
    %1915 = vmatpush1.bf16.msra.mxu0 0
    %1916 = vmatprep.subr.bf16.mxu0 0
    %1917 = vmatpush1.bf16.msra.mxu0 0
    %1918 = vmatprep.subr.bf16.mxu0 0
    %1919 = vmatpush1.bf16.msra.mxu0 0
    %1920 = vmatprep.subr.bf16.mxu0 0
    %1921 = vmatpush1.bf16.msra.mxu0 0
    %1922 = vmatprep.subr.bf16.mxu0 0
    %1923 = vmatpush1.bf16.msra.mxu0 0
    %1924 = vmatprep.mubr.bf16.mxu0 0
    %1925 = vmatmul.mubr.bf16.gmra.mrb[0].mxu0 %v499
    %v1926 = vpop.f32.mrb[0].mxu0
    %v1927 = vadd.f32 0.0, %v1926
    %v1928 = vpop.f32.mrb[0].mxu0
    %v1929 = vpop.f32.mrb[0].mxu0
    %v1930 = vadd.f32 0.0, %v1929
    %v1931 = vpop.f32.mrb[0].mxu0
    %1932 = vmatprep.mubr.bf16.mxu0 0
    %1933 = vmatmul.mubr.bf16.gmra.mrb[0].mxu0 %v502
    %v1934 = vpop.f32.mrb[0].mxu0
    %v1935 = vadd.f32 0.0, %v1934
    %v1936 = vpop.f32.mrb[0].mxu0
    %v1937 = vpop.f32.mrb[0].mxu0
    %v1938 = vpop.f32.mrb[0].mxu0
    %1939 = vdwg.mxu0
    %1941 = vrot.lane.b32.xlu0 %v1891, 32
    %v1942 = vpop.permute.xlu0 %1941
    %1944 = vmatprep.subr.bf16.mxu0 0
    %1945 = vmatpush1.bf16.msra.mxu0 %v1942
    %1946 = vmatprep.subr.bf16.mxu0 0
    %1947 = vmatpush1.bf16.msra.mxu0 0
    %1948 = vmatprep.subr.bf16.mxu0 0
    %1949 = vmatpush1.bf16.msra.mxu0 0
    %1950 = vmatprep.subr.bf16.mxu0 0
    %1951 = vmatpush1.bf16.msra.mxu0 0
    %1952 = vmatprep.subr.bf16.mxu0 0
    %1953 = vmatpush1.bf16.msra.mxu0 0
    %1954 = vmatprep.subr.bf16.mxu0 0
    %1955 = vmatpush1.bf16.msra.mxu0 0
    %1956 = vmatprep.subr.bf16.mxu0 0
    %1957 = vmatpush1.bf16.msra.mxu0 0
    %1958 = vmatprep.subr.bf16.mxu0 0
    %1959 = vmatpush1.bf16.msra.mxu0 0
    %1960 = vmatprep.subr.bf16.mxu0 0
    %1961 = vmatpush1.bf16.msra.mxu0 0
    %1962 = vmatprep.subr.bf16.mxu0 0
    %1963 = vmatpush1.bf16.msra.mxu0 0
    %1964 = vmatprep.subr.bf16.mxu0 0
    %1965 = vmatpush1.bf16.msra.mxu0 0
    %1966 = vmatprep.subr.bf16.mxu0 0
    %1967 = vmatpush1.bf16.msra.mxu0 0
    %1968 = vmatprep.subr.bf16.mxu0 0
    %1969 = vmatpush1.bf16.msra.mxu0 0
    %1970 = vmatprep.subr.bf16.mxu0 0
    %1971 = vmatpush1.bf16.msra.mxu0 0
    %1972 = vmatprep.subr.bf16.mxu0 0
    %1973 = vmatpush1.bf16.msra.mxu0 0
    %1974 = vmatprep.subr.bf16.mxu0 0
    %1975 = vmatpush1.bf16.msra.mxu0 0
    %1976 = vmatprep.mubr.bf16.mxu0 0
    %1977 = vmatmul.mubr.bf16.gmra.mrb[0].mxu0 %v565
    %v1978 = vpop.f32.mrb[0].mxu0
    %v1979 = vadd.f32 0.0, %v1978
    %v1980 = vpop.f32.mrb[0].mxu0
    %v1981 = vpop.f32.mrb[0].mxu0
    %v1982 = vadd.f32 0.0, %v1981
    %v1983 = vpop.f32.mrb[0].mxu0
    %1984 = vmatprep.mubr.bf16.mxu0 0
    %1985 = vmatmul.mubr.bf16.gmra.mrb[0].mxu0 %v568
    %v1986 = vpop.f32.mrb[0].mxu0
    %v1987 = vadd.f32 0.0, %v1986
    %v1988 = vpop.f32.mrb[0].mxu0
    %v1989 = vpop.f32.mrb[0].mxu0
    %v1990 = vpop.f32.mrb[0].mxu0
    %1991 = vdwg.mxu0
    %1995 = vrot.lane.b32.xlu0 %v1979, 32
    %v1996 = vpop.permute.xlu0 %1995
    %1997 = vrot.lane.b32.xlu0 %v1982, 32
    %v1998 = vpop.permute.xlu0 %1997
    %1999 = vrot.lane.b32.xlu0 %v1987, 32
    %v2000 = vpop.permute.xlu0 %1999
    %v2004 = vadd.f32 %v1927, %v1996
    %v2005 = vadd.f32 %v1930, %v1998
    %v2006 = vadd.f32 %v1935, %v2000
    %2010 = vrot.lane.b32.xlu0 %v1879, 32
    %v2011 = vpop.permute.xlu0 %2010
    %2012 = vrot.lane.b32.xlu0 %v1884, 32
    %v2013 = vpop.permute.xlu0 %2012
    %2014 = vrot.lane.b32.xlu0 %v1889, 32
    %v2015 = vpop.permute.xlu0 %2014
    %v2019 = vadd.f32 %v2004, %v2011
    %v2020 = vadd.f32 %v2005, %v2013
    %v2021 = vadd.f32 %v2006, %v2015
    %v2022 = vxor.u32 %v2019, 2147483648
    %v2023 = vxor.u32 %v2020, 2147483648
    %v2024 = vxor.u32 %v2021, 2147483648
    %v2025 = vmul.f32 %v2022, 1.442695
    %v2026 = vpow.pop %v2025
    %v2027 = vmul.f32 %v2023, 1.442695
    %v2028 = vpow.pop %v2027
    %v2029 = vmul.f32 %v2024, 1.442695
    %v2030 = vpow.pop %v2029
    %v2031 = vadd.f32 %v2026, 1.0
    %v2032 = vadd.f32 %v2028, 1.0
    %v2033 = vadd.f32 %v2030, 1.0
    %v2034 = vrcp.pop %v2031
    %v2035 = vmul.f32 1.0, %v2034
    %v2036 = vrcp.pop %v2032
    %v2037 = vmul.f32 1.0, %v2036
    %v2038 = vrcp.pop %v2033
    %v2039 = vmul.f32 1.0, %v2038
    %2043 = vrot.lane.b32.xlu0 %v1927, 32
    %v2044 = vpop.permute.xlu0 %2043
    %2045 = vrot.lane.b32.xlu0 %v1930, 32
    %v2046 = vpop.permute.xlu0 %2045
    %2047 = vrot.lane.b32.xlu0 %v1935, 32
    %v2048 = vpop.permute.xlu0 %2047
    %v2052 = vmul.f32 %v2035, %v2044
    %v2053 = vmul.f32 %v2037, %v2046
    %v2054 = vmul.f32 %v2039, %v2048
    %2058 = vrot.lane.b32.xlu0 %v2052, 96
    %v2059 = vpop.permute.xlu0 %2058
    %2060 = vrot.lane.b32.xlu0 %v2053, 96
    %v2061 = vpop.permute.xlu0 %2060
    %2062 = vrot.lane.b32.xlu0 %v2054, 96
    %v2063 = vpop.permute.xlu0 %2062
    %v2067 = vsel %vm382, %v2059, %v2035
    %v2068 = vsel %vm382, %v2061, %v2037
    %v2069 = vsel %vm382, %v2063, %v2039
    %v2070 = vpack.c.bf16 %v2068, %v2067
    %v2071 = vpack.c.bf16 %v2069, %v2069
    %v2073 = vsel %vm707, %v2071, 0
    %2075 = vmatprep.subr.bf16.mxu0 0
    %2076 = vmatpush1.bf16.msra.mxu0 %v2070
    %2077 = vmatprep.subr.bf16.mxu0 0
    %2078 = vmatpush1.bf16.msra.mxu0 %v2073
    %2079 = vmatprep.subr.bf16.mxu0 0
    %2080 = vmatpush1.bf16.msra.mxu0 0
    %2081 = vmatprep.subr.bf16.mxu0 0
    %2082 = vmatpush1.bf16.msra.mxu0 0
    %2083 = vmatprep.subr.bf16.mxu0 0
    %2084 = vmatpush1.bf16.msra.mxu0 0
    %2085 = vmatprep.subr.bf16.mxu0 0
    %2086 = vmatpush1.bf16.msra.mxu0 0
    %2087 = vmatprep.subr.bf16.mxu0 0
    %2088 = vmatpush1.bf16.msra.mxu0 0
    %2089 = vmatprep.subr.bf16.mxu0 0
    %2090 = vmatpush1.bf16.msra.mxu0 0
    %2091 = vmatprep.subr.bf16.mxu0 0
    %2092 = vmatpush1.bf16.msra.mxu0 0
    %2093 = vmatprep.subr.bf16.mxu0 0
    %2094 = vmatpush1.bf16.msra.mxu0 0
    %2095 = vmatprep.subr.bf16.mxu0 0
    %2096 = vmatpush1.bf16.msra.mxu0 0
    %2097 = vmatprep.subr.bf16.mxu0 0
    %2098 = vmatpush1.bf16.msra.mxu0 0
    %2099 = vmatprep.subr.bf16.mxu0 0
    %2100 = vmatpush1.bf16.msra.mxu0 0
    %2101 = vmatprep.subr.bf16.mxu0 0
    %2102 = vmatpush1.bf16.msra.mxu0 0
    %2103 = vmatprep.subr.bf16.mxu0 0
    %2104 = vmatpush1.bf16.msra.mxu0 0
    %2105 = vmatprep.subr.bf16.mxu0 0
    %2106 = vmatpush1.bf16.msra.mxu0 0
    %2107 = vmatprep.mubr.bf16.mxu0 0
    %2108 = vmatmul.mubr.bf16.gmra.mrb[0].mxu0 %v705
    %v2109 = vpop.f32.mrb[0].mxu0
    %v2110 = vadd.f32 0.0, %v2109
    %v2111 = vpop.f32.mrb[0].mxu0
    %v2112 = vpop.f32.mrb[0].mxu0
    %v2113 = vadd.f32 0.0, %v2112
    %v2114 = vpop.f32.mrb[0].mxu0
    %2115 = vdwg.mxu0
    %v2116 = vadd.f32 %v2110, 1e-06
    %v2117 = vadd.f32 %v2113, 1e-06
    %v2118 = vrcp.pop %v2116
    %v2119 = vrcp.pop %v2117
    %2122 = vrot.lane.b32.xlu0 %v2118, 96
    %v2123 = vpop.permute.xlu0 %2122
    %2124 = vrot.lane.b32.xlu0 %v2119, 96
    %v2125 = vpop.permute.xlu0 %2124
    %v2128 = vmul.f32 %v2110, %v2123
    %v2129 = vmul.f32 %v2113, %v2125
    %2132 = vrot.lane.b32.xlu0 %v2128, 64
    %v2133 = vpop.permute.xlu0 %2132
    %2134 = vrot.lane.b32.xlu0 %v2129, 64
    %v2135 = vpop.permute.xlu0 %2134
    %v2138 = vadd.f32 %v1868, %v2133
    %v2139 = vadd.f32 %v1873, %v2135
    %s2140 = scalar_lea.vmem %s13, 3
    %v2141 = vld [vmem:[%s2140] sm:$0x1]
    %v2143 = vlaneseq
    %v2144 = vshrl.u32 %v2143, 7
    %v2145 = vsub.s32 0, %v2144
    %v2146 = vrot.slane %v2141, %v2145
    %2147 = vrot.lane.b32.xlu0 %v2146, 64
    %v2148 = vpop.permute.xlu0 %2147
    %v2150 = vmul.f32 %v2138, %v2148
    %v2151 = vmul.f32 %v2139, %v2148
    %s2152 = scalar_lea.vmem %s14, 3
    %v2153 = vld [vmem:[%s2152] sm:$0x1]
    %v2155 = vlaneseq
    %v2156 = vshrl.u32 %v2155, 7
    %v2157 = vsub.s32 0, %v2156
    %v2158 = vrot.slane %v2153, %v2157
    %2159 = vrot.lane.b32.xlu0 %v2158, 64
    %v2160 = vpop.permute.xlu0 %2159
    %v2162 = vadd.f32 %v2150, %v2160
    %v2163 = vadd.f32 %v2151, %v2160
    %v2164 = vmax.f32 %v2162, 0.0
    %v2165 = vmax.f32 %v2163, 0.0
    %2168 = vrot.lane.b32.xlu0 %v2164, 64
    %v2169 = vpop.permute.xlu0 %2168
    %2170 = vrot.lane.b32.xlu0 %v2165, 64
    %v2171 = vpop.permute.xlu0 %2170
    %v2174 = vadd.f32 %v1718, %v2169
    %v2175 = vadd.f32 %v1719, %v2171
    %s2176 = scalar_lea.vmem %s15, 3
    %v2177 = vld [vmem:[%s2176] sm:$0x1]
    %v2179 = vlaneseq
    %v2180 = vshrl.u32 %v2179, 7
    %v2181 = vsub.s32 0, %v2180
    %v2182 = vrot.slane %v2177, %v2181
    %2183 = vrot.lane.b32.xlu0 %v2182, 32
    %v2184 = vpop.permute.xlu0 %2183
    %v2186 = vmul.f32 %v2019, %v2184
    %v2187 = vmul.f32 %v2020, %v2184
    %v2188 = vmul.f32 %v2021, %v2184
    %s2189 = scalar_lea.vmem %s16, 3
    %v2190 = vld [vmem:[%s2189] sm:$0x1]
    %v2192 = vlaneseq
    %v2193 = vshrl.u32 %v2192, 7
    %v2194 = vsub.s32 0, %v2193
    %v2195 = vrot.slane %v2190, %v2194
    %2196 = vrot.lane.b32.xlu0 %v2195, 32
    %v2197 = vpop.permute.xlu0 %2196
    %v2199 = vadd.f32 %v2186, %v2197
    %v2200 = vadd.f32 %v2187, %v2197
    %v2201 = vadd.f32 %v2188, %v2197
    %v2202 = vmax.f32 %v2199, 0.0
    %v2203 = vmax.f32 %v2200, 0.0
    %v2204 = vmax.f32 %v2201, 0.0
    %2208 = vrot.lane.b32.xlu0 %v2202, 96
    %v2209 = vpop.permute.xlu0 %2208
    %2210 = vrot.lane.b32.xlu0 %v2203, 96
    %v2211 = vpop.permute.xlu0 %2210
    %2212 = vrot.lane.b32.xlu0 %v2204, 96
    %v2213 = vpop.permute.xlu0 %2212
    %v2217 = vadd.f32 %v1761, %v2209
    %v2218 = vadd.f32 %v1762, %v2211
    %v2219 = vadd.f32 %v1763, %v2213
    %v2220 = vld [vmem:[%s5] sm:$0x1]
    %v2221 = vpack.c.bf16 %v2175, %v2174
    %v2223 = vsel %vm497, %v2220, 0
    %2225 = vmatprep.subr.bf16.mxu0 0
    %2226 = vmatpush1.bf16.msra.mxu0 %v2221
    %2227 = vmatprep.subr.bf16.mxu0 0
    %2228 = vmatpush1.bf16.msra.mxu0 0
    %2229 = vmatprep.subr.bf16.mxu0 0
    %2230 = vmatpush1.bf16.msra.mxu0 0
    %2231 = vmatprep.subr.bf16.mxu0 0
    %2232 = vmatpush1.bf16.msra.mxu0 0
    %2233 = vmatprep.subr.bf16.mxu0 0
    %2234 = vmatpush1.bf16.msra.mxu0 0
    %2235 = vmatprep.subr.bf16.mxu0 0
    %2236 = vmatpush1.bf16.msra.mxu0 0
    %2237 = vmatprep.subr.bf16.mxu0 0
    %2238 = vmatpush1.bf16.msra.mxu0 0
    %2239 = vmatprep.subr.bf16.mxu0 0
    %2240 = vmatpush1.bf16.msra.mxu0 0
    %2241 = vmatprep.subr.bf16.mxu0 0
    %2242 = vmatpush1.bf16.msra.mxu0 0
    %2243 = vmatprep.subr.bf16.mxu0 0
    %2244 = vmatpush1.bf16.msra.mxu0 0
    %2245 = vmatprep.subr.bf16.mxu0 0
    %2246 = vmatpush1.bf16.msra.mxu0 0
    %2247 = vmatprep.subr.bf16.mxu0 0
    %2248 = vmatpush1.bf16.msra.mxu0 0
    %2249 = vmatprep.subr.bf16.mxu0 0
    %2250 = vmatpush1.bf16.msra.mxu0 0
    %2251 = vmatprep.subr.bf16.mxu0 0
    %2252 = vmatpush1.bf16.msra.mxu0 0
    %2253 = vmatprep.subr.bf16.mxu0 0
    %2254 = vmatpush1.bf16.msra.mxu0 0
    %2255 = vmatprep.subr.bf16.mxu0 0
    %2256 = vmatpush1.bf16.msra.mxu0 0
    %2257 = vmatprep.mubr.bf16.mxu0 0
    %2258 = vmatmul.mubr.bf16.gmra.mrb[0].mxu0 %v2223
    %v2259 = vpop.f32.mrb[0].mxu0
    %v2260 = vadd.f32 0.0, %v2259
    %v2261 = vpop.f32.mrb[0].mxu0
    %v2262 = vpop.f32.mrb[0].mxu0
    %v2263 = vpop.f32.mrb[0].mxu0
    %2264 = vdwg.mxu0
    %v2265 = vld [vmem:[#allocation5] sm:$0x1]
    %v2266 = vpack.c.bf16 %v2218, %v2217
    %v2267 = vpack.c.bf16 %v2219, %v2219
    %v2269 = vsel %vm703, %v2265, 0
    %v2272 = vsel %vm707, %v2267, 0
    %2274 = vmatprep.subr.bf16.mxu0 0
    %2275 = vmatpush1.bf16.msra.mxu0 %v2266
    %2276 = vmatprep.subr.bf16.mxu0 0
    %2277 = vmatpush1.bf16.msra.mxu0 %v2272
    %2278 = vmatprep.subr.bf16.mxu0 0
    %2279 = vmatpush1.bf16.msra.mxu0 0
    %2280 = vmatprep.subr.bf16.mxu0 0
    %2281 = vmatpush1.bf16.msra.mxu0 0
    %2282 = vmatprep.subr.bf16.mxu0 0
    %2283 = vmatpush1.bf16.msra.mxu0 0
    %2284 = vmatprep.subr.bf16.mxu0 0
    %2285 = vmatpush1.bf16.msra.mxu0 0
    %2286 = vmatprep.subr.bf16.mxu0 0
    %2287 = vmatpush1.bf16.msra.mxu0 0
    %2288 = vmatprep.subr.bf16.mxu0 0
    %2289 = vmatpush1.bf16.msra.mxu0 0
    %2290 = vmatprep.subr.bf16.mxu0 0
    %2291 = vmatpush1.bf16.msra.mxu0 0
    %2292 = vmatprep.subr.bf16.mxu0 0
    %2293 = vmatpush1.bf16.msra.mxu0 0
    %2294 = vmatprep.subr.bf16.mxu0 0
    %2295 = vmatpush1.bf16.msra.mxu0 0
    %2296 = vmatprep.subr.bf16.mxu0 0
    %2297 = vmatpush1.bf16.msra.mxu0 0
    %2298 = vmatprep.subr.bf16.mxu0 0
    %2299 = vmatpush1.bf16.msra.mxu0 0
    %2300 = vmatprep.subr.bf16.mxu0 0
    %2301 = vmatpush1.bf16.msra.mxu0 0
    %2302 = vmatprep.subr.bf16.mxu0 0
    %2303 = vmatpush1.bf16.msra.mxu0 0
    %2304 = vmatprep.subr.bf16.mxu0 0
    %2305 = vmatpush1.bf16.msra.mxu0 0
    %2306 = vmatprep.mubr.bf16.mxu0 0
    %2307 = vmatmul.mubr.bf16.gmra.mrb[0].mxu0 %v2269
    %v2308 = vpop.f32.mrb[0].mxu0
    %v2309 = vadd.f32 0.0, %v2308
    %v2310 = vpop.f32.mrb[0].mxu0
    %v2311 = vpop.f32.mrb[0].mxu0
    %v2312 = vpop.f32.mrb[0].mxu0
    %2313 = vdwg.mxu0
    %v2314 = vld [vmem:[%s17] sm:$0xff]
    %v2315 = vld [vmem:[%s17 + $0x8] sm:$0xff]
    %v2316 = vld [vmem:[%s17 + $0x10] sm:$0xff]
    %v2317 = vld [vmem:[%s17 + $0x18] sm:$0xff]
    %v2318 = vld [vmem:[%s17 + $0x20] sm:$0xff]
    %v2319 = vld [vmem:[%s17 + $0x28] sm:$0xff]
    %v2320 = vld [vmem:[%s17 + $0x30] sm:$0xff]
    %v2321 = vld [vmem:[%s17 + $0x38] sm:$0xff]
    %v2323 = vsel %vm382, %v2309, 0
    %2325 = vmatprep.subr.mxu0 0.0
    %2326 = vmatpush1.msra.mxu0 %v2318
    %2327 = vmatprep.subr.mxu0 0.0
    %2328 = vmatpush1.msra.mxu0 %v2319
    %2329 = vmatprep.subr.mxu0 0.0
    %2330 = vmatpush1.msra.mxu0 %v2320
    %2331 = vmatprep.subr.mxu0 0.0
    %2332 = vmatpush1.msra.mxu0 %v2321
    %2333 = vmatprep.subr.mxu0 0.0
    %2334 = vmatpush1.msra.mxu0 0.0
    %2335 = vmatprep.subr.mxu0 0.0
    %2336 = vmatpush1.msra.mxu0 0.0
    %2337 = vmatprep.subr.mxu0 0.0
    %2338 = vmatpush1.msra.mxu0 0.0
    %2339 = vmatprep.subr.mxu0 0.0
    %2340 = vmatpush1.msra.mxu0 0.0
    %2341 = vmatprep.subr.mxu0 0.0
    %2342 = vmatpush1.msra.mxu0 0.0
    %2343 = vmatprep.subr.mxu0 0.0
    %2344 = vmatpush1.msra.mxu0 0.0
    %2345 = vmatprep.subr.mxu0 0.0
    %2346 = vmatpush1.msra.mxu0 0.0
    %2347 = vmatprep.subr.mxu0 0.0
    %2348 = vmatpush1.msra.mxu0 0.0
    %2349 = vmatprep.subr.mxu0 0.0
    %2350 = vmatpush1.msra.mxu0 0.0
    %2351 = vmatprep.subr.mxu0 0.0
    %2352 = vmatpush1.msra.mxu0 0.0
    %2353 = vmatprep.subr.mxu0 0.0
    %2354 = vmatpush1.msra.mxu0 0.0
    %2355 = vmatprep.subr.mxu0 0.0
    %2356 = vmatpush1.msra.mxu0 0.0
    %2357 = vmatprep.subr.mxu0 0.0
    %2358 = vmatpush1.msra.mxu0 0.0
    %2359 = vmatprep.subr.mxu0 0.0
    %2360 = vmatpush1.msra.mxu0 0.0
    %2361 = vmatprep.subr.mxu0 0.0
    %2362 = vmatpush1.msra.mxu0 0.0
    %2363 = vmatprep.subr.mxu0 0.0
    %2364 = vmatpush1.msra.mxu0 0.0
    %2365 = vmatprep.subr.mxu0 0.0
    %2366 = vmatpush1.msra.mxu0 0.0
    %2367 = vmatprep.subr.mxu0 0.0
    %2368 = vmatpush1.msra.mxu0 0.0
    %2369 = vmatprep.subr.mxu0 0.0
    %2370 = vmatpush1.msra.mxu0 0.0
    %2371 = vmatprep.subr.mxu0 0.0
    %2372 = vmatpush1.msra.mxu0 0.0
    %2373 = vmatprep.subr.mxu0 0.0
    %2374 = vmatpush1.msra.mxu0 0.0
    %2375 = vmatprep.subr.mxu0 0.0
    %2376 = vmatpush1.msra.mxu0 0.0
    %2377 = vmatprep.subr.mxu0 0.0
    %2378 = vmatpush1.msra.mxu0 0.0
    %2379 = vmatprep.subr.mxu0 0.0
    %2380 = vmatpush1.msra.mxu0 0.0
    %2381 = vmatprep.subr.mxu0 0.0
    %2382 = vmatpush1.msra.mxu0 0.0
    %2383 = vmatprep.subr.mxu0 0.0
    %2384 = vmatpush1.msra.mxu0 0.0
    %2385 = vmatprep.subr.mxu0 0.0
    %2386 = vmatpush1.msra.mxu0 0.0
    %2387 = vmatprep.subr.mxu0 0.0
    %2388 = vmatpush1.msra.mxu0 0.0
    %2389 = vmatprep.mubr.f32.mxu0 0.0
    %2390 = vmatmul.mubr.f32.gmra.mrb[0].mxu0 %v2323
    %v2391 = vpop.f32.mrb[0].mxu0
    %v2392 = vadd.f32 0.0, %v2391
    %v2393 = vpop.f32.mrb[0].mxu0
    %2394 = vdwg.mxu0
    %v2396 = vsel %vm382, %v2260, 0
    %2398 = vmatprep.subr.mxu0 0.0
    %2399 = vmatpush1.msra.mxu0 %v2314
    %2400 = vmatprep.subr.mxu0 0.0
    %2401 = vmatpush1.msra.mxu0 %v2315
    %2402 = vmatprep.subr.mxu0 0.0
    %2403 = vmatpush1.msra.mxu0 %v2316
    %2404 = vmatprep.subr.mxu0 0.0
    %2405 = vmatpush1.msra.mxu0 %v2317
    %2406 = vmatprep.subr.mxu0 0.0
    %2407 = vmatpush1.msra.mxu0 0.0
    %2408 = vmatprep.subr.mxu0 0.0
    %2409 = vmatpush1.msra.mxu0 0.0
    %2410 = vmatprep.subr.mxu0 0.0
    %2411 = vmatpush1.msra.mxu0 0.0
    %2412 = vmatprep.subr.mxu0 0.0
    %2413 = vmatpush1.msra.mxu0 0.0
    %2414 = vmatprep.subr.mxu0 0.0
    %2415 = vmatpush1.msra.mxu0 0.0
    %2416 = vmatprep.subr.mxu0 0.0
    %2417 = vmatpush1.msra.mxu0 0.0
    %2418 = vmatprep.subr.mxu0 0.0
    %2419 = vmatpush1.msra.mxu0 0.0
    %2420 = vmatprep.subr.mxu0 0.0
    %2421 = vmatpush1.msra.mxu0 0.0
    %2422 = vmatprep.subr.mxu0 0.0
    %2423 = vmatpush1.msra.mxu0 0.0
    %2424 = vmatprep.subr.mxu0 0.0
    %2425 = vmatpush1.msra.mxu0 0.0
    %2426 = vmatprep.subr.mxu0 0.0
    %2427 = vmatpush1.msra.mxu0 0.0
    %2428 = vmatprep.subr.mxu0 0.0
    %2429 = vmatpush1.msra.mxu0 0.0
    %2430 = vmatprep.subr.mxu0 0.0
    %2431 = vmatpush1.msra.mxu0 0.0
    %2432 = vmatprep.subr.mxu0 0.0
    %2433 = vmatpush1.msra.mxu0 0.0
    %2434 = vmatprep.subr.mxu0 0.0
    %2435 = vmatpush1.msra.mxu0 0.0
    %2436 = vmatprep.subr.mxu0 0.0
    %2437 = vmatpush1.msra.mxu0 0.0
    %2438 = vmatprep.subr.mxu0 0.0
    %2439 = vmatpush1.msra.mxu0 0.0
    %2440 = vmatprep.subr.mxu0 0.0
    %2441 = vmatpush1.msra.mxu0 0.0
    %2442 = vmatprep.subr.mxu0 0.0
    %2443 = vmatpush1.msra.mxu0 0.0
    %2444 = vmatprep.subr.mxu0 0.0
    %2445 = vmatpush1.msra.mxu0 0.0
    %2446 = vmatprep.subr.mxu0 0.0
    %2447 = vmatpush1.msra.mxu0 0.0
    %2448 = vmatprep.subr.mxu0 0.0
    %2449 = vmatpush1.msra.mxu0 0.0
    %2450 = vmatprep.subr.mxu0 0.0
    %2451 = vmatpush1.msra.mxu0 0.0
    %2452 = vmatprep.subr.mxu0 0.0
    %2453 = vmatpush1.msra.mxu0 0.0
    %2454 = vmatprep.subr.mxu0 0.0
    %2455 = vmatpush1.msra.mxu0 0.0
    %2456 = vmatprep.subr.mxu0 0.0
    %2457 = vmatpush1.msra.mxu0 0.0
    %2458 = vmatprep.subr.mxu0 0.0
    %2459 = vmatpush1.msra.mxu0 0.0
    %2460 = vmatprep.subr.mxu0 0.0
    %2461 = vmatpush1.msra.mxu0 0.0
    %2462 = vmatprep.mubr.f32.mxu0 0.0
    %2463 = vmatmul.mubr.f32.gmra.mrb[0].mxu0 %v2396
    %v2464 = vpop.f32.mrb[0].mxu0
    %v2465 = vadd.f32 %v2392, %v2464
    %v2466 = vpop.f32.mrb[0].mxu0
    %2467 = vdwg.mxu0
    %v2468 = vld [vmem:[%s18] sm:$0x1]
    %v2470 = vlaneseq
    %v2471 = vshrl.u32 %v2470, 7
    %v2472 = vsub.s32 0, %v2471
    %v2473 = vrot.slane %v2468, %v2472
    %v2475 = vadd.f32 %v2465, %v2473
    %v2476 = vmax.f32 %v2475, 0.0
    %v2477 = vld [vmem:[%s19] sm:$0xff]
    %v2478 = vld [vmem:[%s19 + $0x8] sm:$0xff]
    %v2479 = vld [vmem:[%s19 + $0x10] sm:$0xff]
    %v2480 = vld [vmem:[%s19 + $0x18] sm:$0xff]
    %v2481 = vld [vmem:[%s20] sm:$0x1]
    %v2483 = vlaneseq
    %v2484 = vshrl.u32 %v2483, 7
    %v2485 = vsub.s32 0, %v2484
    %v2486 = vrot.slane %v2481, %v2485
    %v2489 = vsel %vm382, %v2476, 0
    %2491 = vmatprep.subr.mxu0 0.0
    %2492 = vmatpush1.msra.mxu0 %v2477
    %2493 = vmatprep.subr.mxu0 0.0
    %2494 = vmatpush1.msra.mxu0 %v2478
    %2495 = vmatprep.subr.mxu0 0.0
    %2496 = vmatpush1.msra.mxu0 %v2479
    %2497 = vmatprep.subr.mxu0 0.0
    %2498 = vmatpush1.msra.mxu0 %v2480
    %2499 = vmatprep.subr.mxu0 0.0
    %2500 = vmatpush1.msra.mxu0 0.0
    %2501 = vmatprep.subr.mxu0 0.0
    %2502 = vmatpush1.msra.mxu0 0.0
    %2503 = vmatprep.subr.mxu0 0.0
    %2504 = vmatpush1.msra.mxu0 0.0
    %2505 = vmatprep.subr.mxu0 0.0
    %2506 = vmatpush1.msra.mxu0 0.0
    %2507 = vmatprep.subr.mxu0 0.0
    %2508 = vmatpush1.msra.mxu0 0.0
    %2509 = vmatprep.subr.mxu0 0.0
    %2510 = vmatpush1.msra.mxu0 0.0
    %2511 = vmatprep.subr.mxu0 0.0
    %2512 = vmatpush1.msra.mxu0 0.0
    %2513 = vmatprep.subr.mxu0 0.0
    %2514 = vmatpush1.msra.mxu0 0.0
    %2515 = vmatprep.subr.mxu0 0.0
    %2516 = vmatpush1.msra.mxu0 0.0
    %2517 = vmatprep.subr.mxu0 0.0
    %2518 = vmatpush1.msra.mxu0 0.0
    %2519 = vmatprep.subr.mxu0 0.0
    %2520 = vmatpush1.msra.mxu0 0.0
    %2521 = vmatprep.subr.mxu0 0.0
    %2522 = vmatpush1.msra.mxu0 0.0
    %2523 = vmatprep.subr.mxu0 0.0
    %2524 = vmatpush1.msra.mxu0 0.0
    %2525 = vmatprep.subr.mxu0 0.0
    %2526 = vmatpush1.msra.mxu0 0.0
    %2527 = vmatprep.subr.mxu0 0.0
    %2528 = vmatpush1.msra.mxu0 0.0
    %2529 = vmatprep.subr.mxu0 0.0
    %2530 = vmatpush1.msra.mxu0 0.0
    %2531 = vmatprep.subr.mxu0 0.0
    %2532 = vmatpush1.msra.mxu0 0.0
    %2533 = vmatprep.subr.mxu0 0.0
    %2534 = vmatpush1.msra.mxu0 0.0
    %2535 = vmatprep.subr.mxu0 0.0
    %2536 = vmatpush1.msra.mxu0 0.0
    %2537 = vmatprep.subr.mxu0 0.0
    %2538 = vmatpush1.msra.mxu0 0.0
    %2539 = vmatprep.subr.mxu0 0.0
    %2540 = vmatpush1.msra.mxu0 0.0
    %2541 = vmatprep.subr.mxu0 0.0
    %2542 = vmatpush1.msra.mxu0 0.0
    %2543 = vmatprep.subr.mxu0 0.0
    %2544 = vmatpush1.msra.mxu0 0.0
    %2545 = vmatprep.subr.mxu0 0.0
    %2546 = vmatpush1.msra.mxu0 0.0
    %2547 = vmatprep.subr.mxu0 0.0
    %2548 = vmatpush1.msra.mxu0 0.0
    %2549 = vmatprep.subr.mxu0 0.0
    %2550 = vmatpush1.msra.mxu0 0.0
    %2551 = vmatprep.subr.mxu0 0.0
    %2552 = vmatpush1.msra.mxu0 0.0
    %2553 = vmatprep.subr.mxu0 0.0
    %2554 = vmatpush1.msra.mxu0 0.0
    %2555 = vmatprep.mubr.f32.mxu0 0.0
    %2556 = vmatmul.mubr.f32.gmra.mrb[0].mxu0 %v2489
    %v2557 = vpop.f32.mrb[0].mxu0
    %v2558 = vadd.f32 %v2486, %v2557
    %v2559 = vpop.f32.mrb[0].mxu0
    %2560 = vdwg.mxu0
    %v2561 = vmax.f32 %v2558, 0.0
    %v2562 = vld [vmem:[%s21] sm:$0xff]
    %v2563 = vld [vmem:[%s21 + $0x8] sm:$0xff]
    %v2564 = vld [vmem:[#allocation2] sm:$0x1]
    %v2566 = vlaneseq
    %v2567 = vshrl.u32 %v2566, 7
    %v2568 = vsub.s32 0, %v2567
    %v2569 = vrot.slane %v2564, %v2568
    %v2572 = vsel %vm497, %v2561, 0
    %2574 = vmatprep.subr.mxu0 0.0
    %2575 = vmatpush1.msra.mxu0 %v2562
    %2576 = vmatprep.subr.mxu0 0.0
    %2577 = vmatpush1.msra.mxu0 %v2563
    %2578 = vmatprep.subr.mxu0 0.0
    %2579 = vmatpush1.msra.mxu0 0.0
    %2580 = vmatprep.subr.mxu0 0.0
    %2581 = vmatpush1.msra.mxu0 0.0
    %2582 = vmatprep.subr.mxu0 0.0
    %2583 = vmatpush1.msra.mxu0 0.0
    %2584 = vmatprep.subr.mxu0 0.0
    %2585 = vmatpush1.msra.mxu0 0.0
    %2586 = vmatprep.subr.mxu0 0.0
    %2587 = vmatpush1.msra.mxu0 0.0
    %2588 = vmatprep.subr.mxu0 0.0
    %2589 = vmatpush1.msra.mxu0 0.0
    %2590 = vmatprep.subr.mxu0 0.0
    %2591 = vmatpush1.msra.mxu0 0.0
    %2592 = vmatprep.subr.mxu0 0.0
    %2593 = vmatpush1.msra.mxu0 0.0
    %2594 = vmatprep.subr.mxu0 0.0
    %2595 = vmatpush1.msra.mxu0 0.0
    %2596 = vmatprep.subr.mxu0 0.0
    %2597 = vmatpush1.msra.mxu0 0.0
    %2598 = vmatprep.subr.mxu0 0.0
    %2599 = vmatpush1.msra.mxu0 0.0
    %2600 = vmatprep.subr.mxu0 0.0
    %2601 = vmatpush1.msra.mxu0 0.0
    %2602 = vmatprep.subr.mxu0 0.0
    %2603 = vmatpush1.msra.mxu0 0.0
    %2604 = vmatprep.subr.mxu0 0.0
    %2605 = vmatpush1.msra.mxu0 0.0
    %2606 = vmatprep.subr.mxu0 0.0
    %2607 = vmatpush1.msra.mxu0 0.0
    %2608 = vmatprep.subr.mxu0 0.0
    %2609 = vmatpush1.msra.mxu0 0.0
    %2610 = vmatprep.subr.mxu0 0.0
    %2611 = vmatpush1.msra.mxu0 0.0
    %2612 = vmatprep.subr.mxu0 0.0
    %2613 = vmatpush1.msra.mxu0 0.0
    %2614 = vmatprep.subr.mxu0 0.0
    %2615 = vmatpush1.msra.mxu0 0.0
    %2616 = vmatprep.subr.mxu0 0.0
    %2617 = vmatpush1.msra.mxu0 0.0
    %2618 = vmatprep.subr.mxu0 0.0
    %2619 = vmatpush1.msra.mxu0 0.0
    %2620 = vmatprep.subr.mxu0 0.0
    %2621 = vmatpush1.msra.mxu0 0.0
    %2622 = vmatprep.subr.mxu0 0.0
    %2623 = vmatpush1.msra.mxu0 0.0
    %2624 = vmatprep.subr.mxu0 0.0
    %2625 = vmatpush1.msra.mxu0 0.0
    %2626 = vmatprep.subr.mxu0 0.0
    %2627 = vmatpush1.msra.mxu0 0.0
    %2628 = vmatprep.subr.mxu0 0.0
    %2629 = vmatpush1.msra.mxu0 0.0
    %2630 = vmatprep.subr.mxu0 0.0
    %2631 = vmatpush1.msra.mxu0 0.0
    %2632 = vmatprep.subr.mxu0 0.0
    %2633 = vmatpush1.msra.mxu0 0.0
    %2634 = vmatprep.subr.mxu0 0.0
    %2635 = vmatpush1.msra.mxu0 0.0
    %2636 = vmatprep.subr.mxu0 0.0
    %2637 = vmatpush1.msra.mxu0 0.0
    %2638 = vmatprep.mubr.f32.mxu0 0.0
    %2639 = vmatmul.mubr.f32.gmra.mrb[0].mxu0 %v2572
    %v2640 = vpop.f32.mrb[0].mxu0
    %v2641 = vadd.f32 %v2569, %v2640
    %v2642 = vpop.f32.mrb[0].mxu0
    %2643 = vdwg.mxu0
    %vm2644 = vcmask 1024
    %2645 = vst.msk [vmem:[%s23] sm:$0x3] %vm2644, %v2641
    // Predicated region
    $region122: #{tpu_custom_call.1} parent=1 // pred_check
      _
    $region123: #{tpu_custom_call.1} parent=1 // pred_check_branch
      %2647 = sbr.rel (0) target = $region125
    $region124: #{tpu_custom_call.1} parent=1 // pred_region
      _
    $region125: #{tpu_custom_call.1} parent=1 // pred_fallthru
      _
    // Predicated region
    $region126: #{tpu_custom_call.1} parent=1 // pred_check
      _
    $region127: #{tpu_custom_call.1} parent=1 // pred_check_branch
      %2649 = sbr.rel (0) target = $region129
    $region128: #{tpu_custom_call.1} parent=1 // pred_region
      _
    $region129: #{tpu_custom_call.1} parent=1 // pred_fallthru
      _
    %2650 = vsyncpa [#allocation4], 1
    %2651 = vsyncpa [#allocation6], 1
    %2652 = vsyncpa [#allocation9], 1
    %2653 = vsyncpa [#allocation12], 1

</llo_original>
